<compile_context>
chip_gen: v6e
topology: v6e:2x2x1
jax: 0.10.0
libtpu: 0.0.40
codegen_flags: <defaults>
</compile_context>

<pallas_src>
import functools

import jax
import jax.numpy as jnp
from jax.experimental import pallas as pl
from jax.experimental.pallas import tpu as pltpu


def _round_up(x, m):
    return (x + m - 1) // m * m


def _convbn_kernel(x_ref, w_ref, s_ref, b_ref, o_ref, *, KH, KW, Wp, Lpad):
    """One grid step = NB batch elements.

    x_ref: (NB, Cin, Pin)       mxu dtype  lane-dense flattened zero-padded input
    w_ref: (KH*KW, Cout, Cin)   mxu dtype  conv weight, tap-major, UNscaled
    s_ref: (Cout, 1)            f32        folded BN+affine per-channel scale
    b_ref: (Cout, 1)            f32        folded BN+affine per-channel bias
    o_ref: (NB, Cout, Lpad)     out dtype  lane-dense output slab (junk cols incl.)
    """
    NB = x_ref.shape[0]
    Cout = o_ref.shape[1]
    scale = s_ref[...]
    bias = b_ref[...]
    for n in range(NB):                                  # static, small
        xn = x_ref[n]                                    # (Cin, Pin), single load
        acc = jnp.zeros((Cout, Lpad), jnp.float32)
        for kh in range(KH):
            for kw in range(KW):
                off = kh * Wp + kw
                win = xn[:, off:off + Lpad]              # contiguous shifted slice
                acc = acc + jnp.dot(w_ref[kh * KW + kw], win,
                                    preferred_element_type=jnp.float32)
        # BN scale/bias applied to the f32 accumulator (not baked into bf16 weights).
        o_ref[n] = (acc * scale + bias).astype(o_ref.dtype)


def _pick_batch_block(N, Lpad, target_lanes=512):
    """Largest divisor of N keeping per-step output lanes near the target regime."""
    want = max(1, -(-target_lanes // Lpad))              # ceil(target / Lpad)
    nb = 1
    for d in range(1, N + 1):
        if N % d == 0 and d <= want:
            nb = d
    return nb


@functools.partial(
    jax.jit,
    static_argnames=("stride", "padding", "dilation", "eps",
                     "mxu_dtype", "out_dtype", "batch_block"))
def conv_bn_forward(x, weight, affine_weight, affine_bias,
                    running_mean, running_var, *, eps=1e-5,
                    stride=1, padding=1, dilation=1,
                    mxu_dtype=jnp.bfloat16, out_dtype=None, batch_block=None):
    """ConvBN forward. x: (N, Cin, H, W) NCHW; weight: (Cout, Cin, KH, KW) OIHW."""
    # TODO(synk): only the module's default stride=1/dilation=1/groups=1 path and the
    # single-dataset inference-BN branch (running stats, n_bn=1) are implemented;
    # training-mode batch statistics and the multi-input/other_x concat path are not.
    assert stride == 1 and dilation == 1

    N, Cin, H, W = x.shape
    Cout, Cin_w, KH, KW = weight.shape
    assert Cin_w == Cin
    if out_dtype is None:
        out_dtype = x.dtype

    Hp, Wp = H + 2 * padding, W + 2 * padding
    Ho, Wo = Hp - (KH - 1), Wp - (KW - 1)                # stride 1, dilation 1

    # Lane-dense geometry: compute width covers all Ho rows at padded width Wp
    # (junk columns dropped in the wrapper), rounded up to a 128-lane multiple so
    # output stores are unmasked. Input gets enough tail zeros for every shifted
    # slice to stay in-bounds.
    Lpad = _round_up(Ho * Wp, 128)
    Pin = _round_up(Lpad + (KH - 1) * Wp + (KW - 1), 128)

    # Fold BN (eval, running stats) + affine into per-channel f32 scale/bias.
    # Note: running_var + eps == 0 would yield inf/NaN, matching PyTorch behavior.
    inv_std = jax.lax.rsqrt(running_var.astype(jnp.float32) + eps)
    scale = affine_weight.astype(jnp.float32) * inv_std                      # (Cout,)
    bias = affine_bias.astype(jnp.float32) - running_mean.astype(jnp.float32) * scale
    s_col = scale.reshape(Cout, 1)
    b_col = bias.reshape(Cout, 1)

    # Weight: tap-major (KH*KW, Cout, Cin), cast to MXU dtype UNscaled (scale goes
    # on the f32 accumulator in-kernel).
    w_taps = jnp.transpose(weight, (2, 3, 0, 1)).reshape(KH * KW, Cout, Cin)
    w_taps = w_taps.astype(mxu_dtype)

    # Activation path: single fused cast+pad, flatten lane-dense, tail-pad to Pin.
    x_pad = jnp.pad(x.astype(mxu_dtype),
                    ((0, 0), (0, 0), (padding, padding), (padding, padding)))
    x_flat = x_pad.reshape(N, Cin, Hp * Wp)
    x_flat = jnp.pad(x_flat, ((0, 0), (0, 0), (0, Pin - Hp * Wp)))

    NB = batch_block if batch_block is not None else _pick_batch_block(N, Lpad)
    assert N % NB == 0
    grid = (N // NB,)

    isz_in = jnp.dtype(mxu_dtype).itemsize
    isz_out = jnp.dtype(out_dtype).itemsize
    block_in = NB * Cin * Pin * isz_in
    block_out = NB * Cout * Lpad * isz_out
    const_in = KH * KW * Cout * Cin * isz_in + 2 * Cout * 4
    # TODO(synk): for large H/W/Cin add an Ho row-strip grid axis (KH-1 halo, strip
    # lane width a multiple of 256 on v6e/v7x, 128 on v5e) marked "parallel" so v7x
    # megacore can split spatially when N is 1-2; re-budget this limit vs 64 MiB VMEM.
    vmem_limit = int(min(64 * 1024 * 1024,
                         max(2 * 1024 * 1024,
                             4 * (block_in + block_out) + 2 * const_in)))

    cost = pl.CostEstimate(
        flops=2 * N * Cout * Cin * KH * KW * Ho * Wo,
        transcendentals=0,
        bytes_accessed=int(N * Cin * Pin * isz_in
                           + KH * KW * Cout * Cin * isz_in + 2 * Cout * 4
                           + N * Cout * Lpad * isz_out))

    kernel = functools.partial(_convbn_kernel, KH=KH, KW=KW, Wp=Wp, Lpad=Lpad)

    out = pl.pallas_call(
        kernel,
        out_shape=jax.ShapeDtypeStruct((N, Cout, Lpad), out_dtype),
        grid_spec=pltpu.PrefetchScalarGridSpec(
            num_scalar_prefetch=0,
            grid=grid,
            in_specs=[
                pl.BlockSpec((NB, Cin, Pin), lambda i: (i, 0, 0)),
                pl.BlockSpec((KH * KW, Cout, Cin), lambda i: (0, 0, 0)),
                pl.BlockSpec((Cout, 1), lambda i: (0, 0)),
                pl.BlockSpec((Cout, 1), lambda i: (0, 0)),
            ],
            out_specs=pl.BlockSpec((NB, Cout, Lpad), lambda i: (i, 0, 0)),
        ),
        compiler_params=pltpu.CompilerParams(
            dimension_semantics=("parallel",),
            vmem_limit_bytes=vmem_limit),
        cost_estimate=cost,
    )(x_flat, w_taps, s_col, b_col)

    # Drop the per-row junk/pad columns in the wrapper (strided view, no kernel work);
    # module returns a list of feats.
    feat = out[:, :, :Ho * Wp].reshape(N, Cout, Ho, Wp)[:, :, :, :Wo]
    return [feat]


if __name__ == "__main__":
    key = jax.random.PRNGKey(0)
    kx, kw, ka, kb, km, kv = jax.random.split(key, 6)

    # Small shapes consistent with ConvBN(in_chan=4, out_chan=8, ks=3, padding=1).
    N, Cin, H, W = 2, 4, 16, 16
    Cout, KS = 8, 3
    eps = 1e-5

    x = jax.random.normal(kx, (N, Cin, H, W), jnp.float32)
    weight = jax.random.normal(kw, (Cout, Cin, KS, KS), jnp.float32) * 0.1
    affine_weight = jax.random.uniform(ka, (Cout,), jnp.float32, 0.5, 1.5)
    affine_bias = jax.random.normal(kb, (Cout,), jnp.float32) * 0.1
    running_mean = jax.random.normal(km, (Cout,), jnp.float32) * 0.1
    running_var = jax.random.uniform(kv, (Cout,), jnp.float32, 0.5, 1.5)

    # f32 reference: conv -> BN(eval, running stats) -> affine.
    conv_ref = jax.lax.conv_general_dilated(
        x, weight, window_strides=(1, 1), padding=((1, 1), (1, 1)),
        dimension_numbers=("NCHW", "OIHW", "NCHW"),
        precision=jax.lax.Precision.HIGHEST)
    bn_ref = (conv_ref - running_mean.reshape(1, -1, 1, 1)) * jax.lax.rsqrt(
        running_var.reshape(1, -1, 1, 1) + eps)
    ref = bn_ref * affine_weight.reshape(1, -1, 1, 1) + affine_bias.reshape(1, -1, 1, 1)

    # f32 MXU operands + f32 output: tight check against module-semantics reference.
    out_f32 = conv_bn_forward(x, weight, affine_weight, affine_bias,
                              running_mean, running_var, eps=eps,
                              mxu_dtype=jnp.float32, out_dtype=jnp.float32)[0]
    out_f32 = jax.block_until_ready(out_f32)
    assert out_f32.shape == (N, Cout, H, W)
    assert jnp.allclose(out_f32, ref, atol=1e-4, rtol=1e-4)

    # bf16 MXU operands (all generations) + bf16 output, f32 accumulation and f32
    # BN scale/bias applied in-kernel: looser tolerance from operand/output rounding.
    out_bf16 = conv_bn_forward(x, weight, affine_weight, affine_bias,
                               running_mean, running_var, eps=eps,
                               mxu_dtype=jnp.bfloat16, out_dtype=jnp.bfloat16)[0]
    out_bf16 = jax.block_until_ready(out_bf16)
    assert out_bf16.dtype == jnp.bfloat16
    assert jnp.allclose(out_bf16.astype(jnp.float32), ref, atol=5e-2, rtol=5e-2)

    print("KERNEL_OK")
</pallas_src>

<mosaic_0001>
module attributes {stable_mosaic.version = 11 : i64} {
  func.func @_convbn_kernel(%arg0: i32, %arg1: memref<2x4x512xf32, #tpu.memory_space<vmem>>, %arg2: memref<9x8x4xf32, #tpu.memory_space<vmem>>, %arg3: memref<8x1xf32, #tpu.memory_space<vmem>>, %arg4: memref<8x1xf32, #tpu.memory_space<vmem>>, %arg5: memref<2x8x384xf32, #tpu.memory_space<vmem>>) attributes {dimension_semantics = [#tpu.dimension_semantics<parallel>], iteration_bounds = array<i64: 1>, scalar_prefetch = 0 : i64, scratch_operands = 0 : i64, tpu.core_type = #tpu.core_type<tc>, window_params = [{transform_indices = @transform_0, window_bounds = array<i64: 2, 4, 512>}, {pipeline_mode = #tpu.pipeline_mode<synchronous>, transform_indices = @transform_1, window_bounds = array<i64: 9, 8, 4>}, {pipeline_mode = #tpu.pipeline_mode<synchronous>, transform_indices = @transform_2, window_bounds = array<i64: 8, 1>}, {pipeline_mode = #tpu.pipeline_mode<synchronous>, transform_indices = @transform_3, window_bounds = array<i64: 8, 1>}, {transform_indices = @transform_4, window_bounds = array<i64: 2, 8, 384>}]} {
    %c0 = arith.constant 0 : index
    %c0_0 = arith.constant 0 : index
    %0 = vector.load %arg3[%c0, %c0_0] : memref<8x1xf32, #tpu.memory_space<vmem>>, vector<8x1xf32>
    %c0_1 = arith.constant 0 : index
    %c0_2 = arith.constant 0 : index
    %1 = vector.load %arg4[%c0_1, %c0_2] : memref<8x1xf32, #tpu.memory_space<vmem>>, vector<8x1xf32>
    %c0_3 = arith.constant 0 : index
    %c0_4 = arith.constant 0 : index
    %c0_5 = arith.constant 0 : index
    %2 = vector.load %arg1[%c0_3, %c0_4, %c0_5] : memref<2x4x512xf32, #tpu.memory_space<vmem>>, vector<1x4x512xf32>
    %3 = vector.shape_cast %2 : vector<1x4x512xf32> to vector<4x512xf32>
    %cst = arith.constant 0.000000e+00 : f32
    %4 = vector.broadcast %cst : f32 to vector<8x384xf32>
    %5 = vector.extract_strided_slice %3 {offsets = [0, 0], sizes = [4, 384], strides = [1, 1]} : vector<4x512xf32> to vector<4x384xf32>
    %c0_6 = arith.constant 0 : index
    %c0_7 = arith.constant 0 : index
    %c0_8 = arith.constant 0 : index
    %6 = vector.load %arg2[%c0_6, %c0_7, %c0_8] : memref<9x8x4xf32, #tpu.memory_space<vmem>>, vector<1x8x4xf32>
    %7 = vector.shape_cast %6 : vector<1x8x4xf32> to vector<8x4xf32>
    %cst_9 = arith.constant dense<0.000000e+00> : vector<8x384xf32>
    %8 = tpu.matmul %7, %5, %cst_9 {dimension_numbers = #tpu.dot_dimension_numbers<[1], [0], [0], [1], [0, 0, 1, 1], [], []>} : vector<8x4xf32>, vector<4x384xf32>, vector<8x384xf32> -> vector<8x384xf32>
    %9 = arith.addf %4, %8 : vector<8x384xf32>
    %10 = vector.extract_strided_slice %3 {offsets = [0, 1], sizes = [4, 384], strides = [1, 1]} : vector<4x512xf32> to vector<4x384xf32>
    %c1 = arith.constant 1 : index
    %c0_10 = arith.constant 0 : index
    %c0_11 = arith.constant 0 : index
    %11 = vector.load %arg2[%c1, %c0_10, %c0_11] : memref<9x8x4xf32, #tpu.memory_space<vmem>>, vector<1x8x4xf32>
    %12 = vector.shape_cast %11 : vector<1x8x4xf32> to vector<8x4xf32>
    %cst_12 = arith.constant dense<0.000000e+00> : vector<8x384xf32>
    %13 = tpu.matmul %12, %10, %cst_12 {dimension_numbers = #tpu.dot_dimension_numbers<[1], [0], [0], [1], [0, 0, 1, 1], [], []>} : vector<8x4xf32>, vector<4x384xf32>, vector<8x384xf32> -> vector<8x384xf32>
    %14 = arith.addf %9, %13 : vector<8x384xf32>
    %15 = vector.extract_strided_slice %3 {offsets = [0, 2], sizes = [4, 384], strides = [1, 1]} : vector<4x512xf32> to vector<4x384xf32>
    %c2 = arith.constant 2 : index
    %c0_13 = arith.constant 0 : index
    %c0_14 = arith.constant 0 : index
    %16 = vector.load %arg2[%c2, %c0_13, %c0_14] : memref<9x8x4xf32, #tpu.memory_space<vmem>>, vector<1x8x4xf32>
    %17 = vector.shape_cast %16 : vector<1x8x4xf32> to vector<8x4xf32>
    %cst_15 = arith.constant dense<0.000000e+00> : vector<8x384xf32>
    %18 = tpu.matmul %17, %15, %cst_15 {dimension_numbers = #tpu.dot_dimension_numbers<[1], [0], [0], [1], [0, 0, 1, 1], [], []>} : vector<8x4xf32>, vector<4x384xf32>, vector<8x384xf32> -> vector<8x384xf32>
    %19 = arith.addf %14, %18 : vector<8x384xf32>
    %20 = vector.extract_strided_slice %3 {offsets = [0, 18], sizes = [4, 384], strides = [1, 1]} : vector<4x512xf32> to vector<4x384xf32>
    %c3 = arith.constant 3 : index
    %c0_16 = arith.constant 0 : index
    %c0_17 = arith.constant 0 : index
    %21 = vector.load %arg2[%c3, %c0_16, %c0_17] : memref<9x8x4xf32, #tpu.memory_space<vmem>>, vector<1x8x4xf32>
    %22 = vector.shape_cast %21 : vector<1x8x4xf32> to vector<8x4xf32>
    %cst_18 = arith.constant dense<0.000000e+00> : vector<8x384xf32>
    %23 = tpu.matmul %22, %20, %cst_18 {dimension_numbers = #tpu.dot_dimension_numbers<[1], [0], [0], [1], [0, 0, 1, 1], [], []>} : vector<8x4xf32>, vector<4x384xf32>, vector<8x384xf32> -> vector<8x384xf32>
    %24 = arith.addf %19, %23 : vector<8x384xf32>
    %25 = vector.extract_strided_slice %3 {offsets = [0, 19], sizes = [4, 384], strides = [1, 1]} : vector<4x512xf32> to vector<4x384xf32>
    %c4 = arith.constant 4 : index
    %c0_19 = arith.constant 0 : index
    %c0_20 = arith.constant 0 : index
    %26 = vector.load %arg2[%c4, %c0_19, %c0_20] : memref<9x8x4xf32, #tpu.memory_space<vmem>>, vector<1x8x4xf32>
    %27 = vector.shape_cast %26 : vector<1x8x4xf32> to vector<8x4xf32>
    %cst_21 = arith.constant dense<0.000000e+00> : vector<8x384xf32>
    %28 = tpu.matmul %27, %25, %cst_21 {dimension_numbers = #tpu.dot_dimension_numbers<[1], [0], [0], [1], [0, 0, 1, 1], [], []>} : vector<8x4xf32>, vector<4x384xf32>, vector<8x384xf32> -> vector<8x384xf32>
    %29 = arith.addf %24, %28 : vector<8x384xf32>
    %30 = vector.extract_strided_slice %3 {offsets = [0, 20], sizes = [4, 384], strides = [1, 1]} : vector<4x512xf32> to vector<4x384xf32>
    %c5 = arith.constant 5 : index
    %c0_22 = arith.constant 0 : index
    %c0_23 = arith.constant 0 : index
    %31 = vector.load %arg2[%c5, %c0_22, %c0_23] : memref<9x8x4xf32, #tpu.memory_space<vmem>>, vector<1x8x4xf32>
    %32 = vector.shape_cast %31 : vector<1x8x4xf32> to vector<8x4xf32>
    %cst_24 = arith.constant dense<0.000000e+00> : vector<8x384xf32>
    %33 = tpu.matmul %32, %30, %cst_24 {dimension_numbers = #tpu.dot_dimension_numbers<[1], [0], [0], [1], [0, 0, 1, 1], [], []>} : vector<8x4xf32>, vector<4x384xf32>, vector<8x384xf32> -> vector<8x384xf32>
    %34 = arith.addf %29, %33 : vector<8x384xf32>
    %35 = vector.extract_strided_slice %3 {offsets = [0, 36], sizes = [4, 384], strides = [1, 1]} : vector<4x512xf32> to vector<4x384xf32>
    %c6 = arith.constant 6 : index
    %c0_25 = arith.constant 0 : index
    %c0_26 = arith.constant 0 : index
    %36 = vector.load %arg2[%c6, %c0_25, %c0_26] : memref<9x8x4xf32, #tpu.memory_space<vmem>>, vector<1x8x4xf32>
    %37 = vector.shape_cast %36 : vector<1x8x4xf32> to vector<8x4xf32>
    %cst_27 = arith.constant dense<0.000000e+00> : vector<8x384xf32>
    %38 = tpu.matmul %37, %35, %cst_27 {dimension_numbers = #tpu.dot_dimension_numbers<[1], [0], [0], [1], [0, 0, 1, 1], [], []>} : vector<8x4xf32>, vector<4x384xf32>, vector<8x384xf32> -> vector<8x384xf32>
    %39 = arith.addf %34, %38 : vector<8x384xf32>
    %40 = vector.extract_strided_slice %3 {offsets = [0, 37], sizes = [4, 384], strides = [1, 1]} : vector<4x512xf32> to vector<4x384xf32>
    %c7 = arith.constant 7 : index
    %c0_28 = arith.constant 0 : index
    %c0_29 = arith.constant 0 : index
    %41 = vector.load %arg2[%c7, %c0_28, %c0_29] : memref<9x8x4xf32, #tpu.memory_space<vmem>>, vector<1x8x4xf32>
    %42 = vector.shape_cast %41 : vector<1x8x4xf32> to vector<8x4xf32>
    %cst_30 = arith.constant dense<0.000000e+00> : vector<8x384xf32>
    %43 = tpu.matmul %42, %40, %cst_30 {dimension_numbers = #tpu.dot_dimension_numbers<[1], [0], [0], [1], [0, 0, 1, 1], [], []>} : vector<8x4xf32>, vector<4x384xf32>, vector<8x384xf32> -> vector<8x384xf32>
    %44 = arith.addf %39, %43 : vector<8x384xf32>
    %45 = vector.extract_strided_slice %3 {offsets = [0, 38], sizes = [4, 384], strides = [1, 1]} : vector<4x512xf32> to vector<4x384xf32>
    %c8 = arith.constant 8 : index
    %c0_31 = arith.constant 0 : index
    %c0_32 = arith.constant 0 : index
    %46 = vector.load %arg2[%c8, %c0_31, %c0_32] : memref<9x8x4xf32, #tpu.memory_space<vmem>>, vector<1x8x4xf32>
    %47 = vector.shape_cast %46 : vector<1x8x4xf32> to vector<8x4xf32>
    %cst_33 = arith.constant dense<0.000000e+00> : vector<8x384xf32>
    %48 = tpu.matmul %47, %45, %cst_33 {dimension_numbers = #tpu.dot_dimension_numbers<[1], [0], [0], [1], [0, 0, 1, 1], [], []>} : vector<8x4xf32>, vector<4x384xf32>, vector<8x384xf32> -> vector<8x384xf32>
    %49 = arith.addf %44, %48 : vector<8x384xf32>
    %50 = vector.broadcast %0 : vector<8x1xf32> to vector<8x384xf32>
    %51 = arith.mulf %49, %50 : vector<8x384xf32>
    %52 = vector.broadcast %1 : vector<8x1xf32> to vector<8x384xf32>
    %53 = arith.addf %51, %52 : vector<8x384xf32>
    %c0_34 = arith.constant 0 : index
    %c0_35 = arith.constant 0 : index
    %c0_36 = arith.constant 0 : index
    %54 = vector.load %arg5[%c0_34, %c0_35, %c0_36] : memref<2x8x384xf32, #tpu.memory_space<vmem>>, vector<1x8x384xf32>
    %55 = vector.shape_cast %54 : vector<1x8x384xf32> to vector<8x384xf32>
    %56 = vector.shape_cast %53 : vector<8x384xf32> to vector<1x8x384xf32>
    tpu.vector_store %arg5[%c0_34, %c0_35, %c0_36], %56 {strides = array<i32>} : memref<2x8x384xf32, #tpu.memory_space<vmem>>, vector<1x8x384xf32>,
    %c1_37 = arith.constant 1 : index
    %c0_38 = arith.constant 0 : index
    %c0_39 = arith.constant 0 : index
    %57 = vector.load %arg1[%c1_37, %c0_38, %c0_39] : memref<2x4x512xf32, #tpu.memory_space<vmem>>, vector<1x4x512xf32>
    %58 = vector.shape_cast %57 : vector<1x4x512xf32> to vector<4x512xf32>
    %cst_40 = arith.constant 0.000000e+00 : f32
    %59 = vector.broadcast %cst_40 : f32 to vector<8x384xf32>
    %60 = vector.extract_strided_slice %58 {offsets = [0, 0], sizes = [4, 384], strides = [1, 1]} : vector<4x512xf32> to vector<4x384xf32>
    %c0_41 = arith.constant 0 : index
    %c0_42 = arith.constant 0 : index
    %c0_43 = arith.constant 0 : index
    %61 = vector.load %arg2[%c0_41, %c0_42, %c0_43] : memref<9x8x4xf32, #tpu.memory_space<vmem>>, vector<1x8x4xf32>
    %62 = vector.shape_cast %61 : vector<1x8x4xf32> to vector<8x4xf32>
    %cst_44 = arith.constant dense<0.000000e+00> : vector<8x384xf32>
    %63 = tpu.matmul %62, %60, %cst_44 {dimension_numbers = #tpu.dot_dimension_numbers<[1], [0], [0], [1], [0, 0, 1, 1], [], []>} : vector<8x4xf32>, vector<4x384xf32>, vector<8x384xf32> -> vector<8x384xf32>
    %64 = arith.addf %59, %63 : vector<8x384xf32>
    %65 = vector.extract_strided_slice %58 {offsets = [0, 1], sizes = [4, 384], strides = [1, 1]} : vector<4x512xf32> to vector<4x384xf32>
    %c1_45 = arith.constant 1 : index
    %c0_46 = arith.constant 0 : index
    %c0_47 = arith.constant 0 : index
    %66 = vector.load %arg2[%c1_45, %c0_46, %c0_47] : memref<9x8x4xf32, #tpu.memory_space<vmem>>, vector<1x8x4xf32>
    %67 = vector.shape_cast %66 : vector<1x8x4xf32> to vector<8x4xf32>
    %cst_48 = arith.constant dense<0.000000e+00> : vector<8x384xf32>
    %68 = tpu.matmul %67, %65, %cst_48 {dimension_numbers = #tpu.dot_dimension_numbers<[1], [0], [0], [1], [0, 0, 1, 1], [], []>} : vector<8x4xf32>, vector<4x384xf32>, vector<8x384xf32> -> vector<8x384xf32>
    %69 = arith.addf %64, %68 : vector<8x384xf32>
    %70 = vector.extract_strided_slice %58 {offsets = [0, 2], sizes = [4, 384], strides = [1, 1]} : vector<4x512xf32> to vector<4x384xf32>
    %c2_49 = arith.constant 2 : index
    %c0_50 = arith.constant 0 : index
    %c0_51 = arith.constant 0 : index
    %71 = vector.load %arg2[%c2_49, %c0_50, %c0_51] : memref<9x8x4xf32, #tpu.memory_space<vmem>>, vector<1x8x4xf32>
    %72 = vector.shape_cast %71 : vector<1x8x4xf32> to vector<8x4xf32>
    %cst_52 = arith.constant dense<0.000000e+00> : vector<8x384xf32>
    %73 = tpu.matmul %72, %70, %cst_52 {dimension_numbers = #tpu.dot_dimension_numbers<[1], [0], [0], [1], [0, 0, 1, 1], [], []>} : vector<8x4xf32>, vector<4x384xf32>, vector<8x384xf32> -> vector<8x384xf32>
    %74 = arith.addf %69, %73 : vector<8x384xf32>
    %75 = vector.extract_strided_slice %58 {offsets = [0, 18], sizes = [4, 384], strides = [1, 1]} : vector<4x512xf32> to vector<4x384xf32>
    %c3_53 = arith.constant 3 : index
    %c0_54 = arith.constant 0 : index
    %c0_55 = arith.constant 0 : index
    %76 = vector.load %arg2[%c3_53, %c0_54, %c0_55] : memref<9x8x4xf32, #tpu.memory_space<vmem>>, vector<1x8x4xf32>
    %77 = vector.shape_cast %76 : vector<1x8x4xf32> to vector<8x4xf32>
    %cst_56 = arith.constant dense<0.000000e+00> : vector<8x384xf32>
    %78 = tpu.matmul %77, %75, %cst_56 {dimension_numbers = #tpu.dot_dimension_numbers<[1], [0], [0], [1], [0, 0, 1, 1], [], []>} : vector<8x4xf32>, vector<4x384xf32>, vector<8x384xf32> -> vector<8x384xf32>
    %79 = arith.addf %74, %78 : vector<8x384xf32>
    %80 = vector.extract_strided_slice %58 {offsets = [0, 19], sizes = [4, 384], strides = [1, 1]} : vector<4x512xf32> to vector<4x384xf32>
    %c4_57 = arith.constant 4 : index
    %c0_58 = arith.constant 0 : index
    %c0_59 = arith.constant 0 : index
    %81 = vector.load %arg2[%c4_57, %c0_58, %c0_59] : memref<9x8x4xf32, #tpu.memory_space<vmem>>, vector<1x8x4xf32>
    %82 = vector.shape_cast %81 : vector<1x8x4xf32> to vector<8x4xf32>
    %cst_60 = arith.constant dense<0.000000e+00> : vector<8x384xf32>
    %83 = tpu.matmul %82, %80, %cst_60 {dimension_numbers = #tpu.dot_dimension_numbers<[1], [0], [0], [1], [0, 0, 1, 1], [], []>} : vector<8x4xf32>, vector<4x384xf32>, vector<8x384xf32> -> vector<8x384xf32>
    %84 = arith.addf %79, %83 : vector<8x384xf32>
    %85 = vector.extract_strided_slice %58 {offsets = [0, 20], sizes = [4, 384], strides = [1, 1]} : vector<4x512xf32> to vector<4x384xf32>
    %c5_61 = arith.constant 5 : index
    %c0_62 = arith.constant 0 : index
    %c0_63 = arith.constant 0 : index
    %86 = vector.load %arg2[%c5_61, %c0_62, %c0_63] : memref<9x8x4xf32, #tpu.memory_space<vmem>>, vector<1x8x4xf32>
    %87 = vector.shape_cast %86 : vector<1x8x4xf32> to vector<8x4xf32>
    %cst_64 = arith.constant dense<0.000000e+00> : vector<8x384xf32>
    %88 = tpu.matmul %87, %85, %cst_64 {dimension_numbers = #tpu.dot_dimension_numbers<[1], [0], [0], [1], [0, 0, 1, 1], [], []>} : vector<8x4xf32>, vector<4x384xf32>, vector<8x384xf32> -> vector<8x384xf32>
    %89 = arith.addf %84, %88 : vector<8x384xf32>
    %90 = vector.extract_strided_slice %58 {offsets = [0, 36], sizes = [4, 384], strides = [1, 1]} : vector<4x512xf32> to vector<4x384xf32>
    %c6_65 = arith.constant 6 : index
    %c0_66 = arith.constant 0 : index
    %c0_67 = arith.constant 0 : index
    %91 = vector.load %arg2[%c6_65, %c0_66, %c0_67] : memref<9x8x4xf32, #tpu.memory_space<vmem>>, vector<1x8x4xf32>
    %92 = vector.shape_cast %91 : vector<1x8x4xf32> to vector<8x4xf32>
    %cst_68 = arith.constant dense<0.000000e+00> : vector<8x384xf32>
    %93 = tpu.matmul %92, %90, %cst_68 {dimension_numbers = #tpu.dot_dimension_numbers<[1], [0], [0], [1], [0, 0, 1, 1], [], []>} : vector<8x4xf32>, vector<4x384xf32>, vector<8x384xf32> -> vector<8x384xf32>
    %94 = arith.addf %89, %93 : vector<8x384xf32>
    %95 = vector.extract_strided_slice %58 {offsets = [0, 37], sizes = [4, 384], strides = [1, 1]} : vector<4x512xf32> to vector<4x384xf32>
    %c7_69 = arith.constant 7 : index
    %c0_70 = arith.constant 0 : index
    %c0_71 = arith.constant 0 : index
    %96 = vector.load %arg2[%c7_69, %c0_70, %c0_71] : memref<9x8x4xf32, #tpu.memory_space<vmem>>, vector<1x8x4xf32>
    %97 = vector.shape_cast %96 : vector<1x8x4xf32> to vector<8x4xf32>
    %cst_72 = arith.constant dense<0.000000e+00> : vector<8x384xf32>
    %98 = tpu.matmul %97, %95, %cst_72 {dimension_numbers = #tpu.dot_dimension_numbers<[1], [0], [0], [1], [0, 0, 1, 1], [], []>} : vector<8x4xf32>, vector<4x384xf32>, vector<8x384xf32> -> vector<8x384xf32>
    %99 = arith.addf %94, %98 : vector<8x384xf32>
    %100 = vector.extract_strided_slice %58 {offsets = [0, 38], sizes = [4, 384], strides = [1, 1]} : vector<4x512xf32> to vector<4x384xf32>
    %c8_73 = arith.constant 8 : index
    %c0_74 = arith.constant 0 : index
    %c0_75 = arith.constant 0 : index
    %101 = vector.load %arg2[%c8_73, %c0_74, %c0_75] : memref<9x8x4xf32, #tpu.memory_space<vmem>>, vector<1x8x4xf32>
    %102 = vector.shape_cast %101 : vector<1x8x4xf32> to vector<8x4xf32>
    %cst_76 = arith.constant dense<0.000000e+00> : vector<8x384xf32>
    %103 = tpu.matmul %102, %100, %cst_76 {dimension_numbers = #tpu.dot_dimension_numbers<[1], [0], [0], [1], [0, 0, 1, 1], [], []>} : vector<8x4xf32>, vector<4x384xf32>, vector<8x384xf32> -> vector<8x384xf32>
    %104 = arith.addf %99, %103 : vector<8x384xf32>
    %105 = vector.broadcast %0 : vector<8x1xf32> to vector<8x384xf32>
    %106 = arith.mulf %104, %105 : vector<8x384xf32>
    %107 = vector.broadcast %1 : vector<8x1xf32> to vector<8x384xf32>
    %108 = arith.addf %106, %107 : vector<8x384xf32>
    %c1_77 = arith.constant 1 : index
    %c0_78 = arith.constant 0 : index
    %c0_79 = arith.constant 0 : index
    %109 = vector.load %arg5[%c1_77, %c0_78, %c0_79] : memref<2x8x384xf32, #tpu.memory_space<vmem>>, vector<1x8x384xf32>
    %110 = vector.shape_cast %109 : vector<1x8x384xf32> to vector<8x384xf32>
    %111 = vector.shape_cast %108 : vector<8x384xf32> to vector<1x8x384xf32>
    tpu.vector_store %arg5[%c1_77, %c0_78, %c0_79], %111 {strides = array<i32>} : memref<2x8x384xf32, #tpu.memory_space<vmem>>, vector<1x8x384xf32>,
    return
  }
  func.func @transform_0(%arg0: i32) -> (i32, i32, i32) {
    %c0_i32 = arith.constant 0 : i32
    %c0_i32_0 = arith.constant 0 : i32
    %c0_i32_1 = arith.constant 0 : i32
    return %arg0, %c0_i32, %c0_i32_0 : i32, i32, i32
  }
  func.func @transform_1(%arg0: i32) -> (i32, i32, i32) {
    %c0_i32 = arith.constant 0 : i32
    %c0_i32_0 = arith.constant 0 : i32
    %c0_i32_1 = arith.constant 0 : i32
    %c0_i32_2 = arith.constant 0 : i32
    return %c0_i32, %c0_i32_0, %c0_i32_1 : i32, i32, i32
  }
  func.func @transform_2(%arg0: i32) -> (i32, i32) {
    %c0_i32 = arith.constant 0 : i32
    %c0_i32_0 = arith.constant 0 : i32
    %c0_i32_1 = arith.constant 0 : i32
    return %c0_i32, %c0_i32_0 : i32, i32
  }
  func.func @transform_3(%arg0: i32) -> (i32, i32) {
    %c0_i32 = arith.constant 0 : i32
    %c0_i32_0 = arith.constant 0 : i32
    %c0_i32_1 = arith.constant 0 : i32
    return %c0_i32, %c0_i32_0 : i32, i32
  }
  func.func @transform_4(%arg0: i32) -> (i32, i32, i32) {
    %c0_i32 = arith.constant 0 : i32
    %c0_i32_0 = arith.constant 0 : i32
    %c0_i32_1 = arith.constant 0 : i32
    return %arg0, %c0_i32, %c0_i32_0 : i32, i32, i32
  }
}

</mosaic_0001>

<llo_original>
// kernel: conv_bn_forward.1
$region0: #{conv_bn_forward.1}
  #allocation0 [shape = 'u32[]', space=smem, size = 0x4, offset = 0x4, fixed_abs, tag = 'smem constant byte address 0x4 - core index']
  #allocation1 [shape = 'u32[144,128]{1,0:T(1,128)}', space=vmem, size = 0x12000, scoped, tag = 'internal scratch']
  %s0 = inlined_call_operand.vmem [shape: f32[2,4,512], index: 0, kind: input, shape index: {}]
  %s1 = inlined_call_operand.vmem [shape: f32[9,8,4], index: 1, kind: input, shape index: {}]
  %s2 = inlined_call_operand.vmem [shape: f32[8,1], index: 2, kind: input, shape index: {}]
  %s3 = inlined_call_operand.vmem [shape: f32[8,1], index: 3, kind: input, shape index: {}]
  %s4 = inlined_call_operand.vmem [shape: f32[2,8,384], index: 4, kind: output, shape index: {}]
  %s5 = sld [smem:[#allocation0]]
  $region26: #{conv_bn_forward.1} parent=0
    _
  %s7 = ssub.s32 1, %s5
  %s8 = scalar_select 0, %s7, %s5
  // Predicated region
  $region2: #{conv_bn_forward.1} parent=0 // pred_check
    _
  $region3: #{conv_bn_forward.1} parent=0 // pred_check_branch
    %10 = sbr.rel (0) target = $region5
  $region4: #{conv_bn_forward.1} parent=0 // pred_region
    _
  $region5: #{conv_bn_forward.1} parent=0 // pred_fallthru
    _
  // Predicated region
  $region6: #{conv_bn_forward.1} parent=0 // pred_check
    _
  $region7: #{conv_bn_forward.1} parent=0 // pred_check_branch
    %12 = sbr.rel (0) target = $region9
  $region8: #{conv_bn_forward.1} parent=0 // pred_region
    _
  $region9: #{conv_bn_forward.1} parent=0 // pred_fallthru
    _
  // Predicated region
  $region10: #{conv_bn_forward.1} parent=0 // pred_check
    _
  $region11: #{conv_bn_forward.1} parent=0 // pred_check_branch
    %14 = sbr.rel (0) target = $region13
  $region12: #{conv_bn_forward.1} parent=0 // pred_region
    _
  $region13: #{conv_bn_forward.1} parent=0 // pred_fallthru
    _
  // Predicated region
  $region14: #{conv_bn_forward.1} parent=0 // pred_check
    _
  $region15: #{conv_bn_forward.1} parent=0 // pred_check_branch
    %16 = sbr.rel (0) target = $region17
  $region16: #{conv_bn_forward.1} parent=0 // pred_region
    _
  $region17: #{conv_bn_forward.1} parent=0 // pred_fallthru
    _
  %v17 = vld [vmem:[%s2] sm:$0xff]
  %v18 = vld [vmem:[%s3] sm:$0xff]
  %v19 = vld [vmem:[%s0] sm:$0xff]
  %v20 = vld [vmem:[%s0 + $0x8] sm:$0xff]
  %v21 = vld [vmem:[%s1] sm:$0xff]
  %s22 = scalar_lea.vmem %s1, 8
  %v23 = vld [vmem:[%s22] sm:$0xff]
  %v26 = vcombine.high %v19, %v19
  %v27 = vcombine.high %v20, %v20
  %28 = vrot.lane.b32.xlu0 %v19, 127
  %v29 = vpop.permute.xlu0 %28
  %30 = vrot.lane.b32.xlu0 %v26, 127
  %v31 = vpop.permute.xlu0 %30
  %32 = vrot.lane.b32.xlu0 %v20, 127
  %v33 = vpop.permute.xlu0 %32
  %34 = vrot.lane.b32.xlu0 %v27, 127
  %v35 = vpop.permute.xlu0 %34
  %vm36 = vcmask 1039360
  %v37 = vsel %vm36, %v29, %v31
  %v38 = vsel %vm36, %v31, %v33
  %v39 = vsel %vm36, %v33, %v35
  %vm40 = vcmask 31744
  %v42 = vsel %vm40, %v23, 0
  %vm44 = vcmask 1043456
  %v45 = vsel %vm44, %v37, 0
  %v47 = vsel %vm44, %v38, 0
  %v49 = vsel %vm44, %v39, 0
  %51 = vmatprep.subr.mxu0 0.0
  %52 = vmatpush1.msra.mxu0 0.0
  %53 = vmatprep.subr.mxu0 0.0
  %54 = vmatpush1.msra.mxu0 0.0
  %55 = vmatprep.subr.mxu0 0.0
  %56 = vmatpush1.msra.mxu0 0.0
  %57 = vmatprep.subr.mxu0 0.0
  %58 = vmatpush1.msra.mxu0 0.0
  %59 = vmatprep.subr.mxu0 0.0
  %60 = vmatpush1.msra.mxu0 0.0
  %61 = vmatprep.subr.mxu0 0.0
  %62 = vmatpush1.msra.mxu0 0.0
  %63 = vmatprep.subr.mxu0 0.0
  %64 = vmatpush1.msra.mxu0 0.0
  %65 = vmatprep.subr.mxu0 0.0
  %66 = vmatpush1.msra.mxu0 0.0
  %67 = vmatprep.subr.mxu0 0.0
  %68 = vmatpush1.msra.mxu0 0.0
  %69 = vmatprep.subr.mxu0 0.0
  %70 = vmatpush1.msra.mxu0 0.0
  %71 = vmatprep.subr.mxu0 0.0
  %72 = vmatpush1.msra.mxu0 0.0
  %73 = vmatprep.subr.mxu0 0.0
  %74 = vmatpush1.msra.mxu0 0.0
  %75 = vmatprep.subr.mxu0 0.0
  %76 = vmatpush1.msra.mxu0 0.0
  %77 = vmatprep.subr.mxu0 0.0
  %78 = vmatpush1.msra.mxu0 0.0
  %79 = vmatprep.subr.mxu0 0.0
  %80 = vmatpush1.msra.mxu0 0.0
  %81 = vmatprep.subr.mxu0 %v47
  %82 = vmatpush1.msra.mxu0 %v45
  %83 = vmatprep.subr.mxu0 0.0
  %84 = vmatpush2.msra.mxu0 0.0
  %85 = vmatprep.subr.mxu0 0.0
  %86 = vmatpush2.msra.mxu0 0.0
  %87 = vmatprep.subr.mxu0 0.0
  %88 = vmatpush2.msra.mxu0 0.0
  %89 = vmatprep.subr.mxu0 0.0
  %90 = vmatpush2.msra.mxu0 0.0
  %91 = vmatprep.subr.mxu0 0.0
  %92 = vmatpush2.msra.mxu0 0.0
  %93 = vmatprep.subr.mxu0 0.0
  %94 = vmatpush2.msra.mxu0 0.0
  %95 = vmatprep.subr.mxu0 0.0
  %96 = vmatpush2.msra.mxu0 0.0
  %97 = vmatprep.subr.mxu0 0.0
  %98 = vmatpush2.msra.mxu0 0.0
  %99 = vmatprep.subr.mxu0 0.0
  %100 = vmatpush2.msra.mxu0 0.0
  %101 = vmatprep.subr.mxu0 0.0
  %102 = vmatpush2.msra.mxu0 0.0
  %103 = vmatprep.subr.mxu0 0.0
  %104 = vmatpush2.msra.mxu0 0.0
  %105 = vmatprep.subr.mxu0 0.0
  %106 = vmatpush2.msra.mxu0 0.0
  %107 = vmatprep.subr.mxu0 0.0
  %108 = vmatpush2.msra.mxu0 0.0
  %109 = vmatprep.subr.mxu0 0.0
  %110 = vmatpush2.msra.mxu0 0.0
  %111 = vmatprep.subr.mxu0 0.0
  %112 = vmatpush2.msra.mxu0 0.0
  %113 = vmatprep.subr.mxu0 0.0
  %114 = vmatpush2.msra.mxu0 0.0
  %115 = vmatprep.mubr.f32.mxu0 0.0
  %116 = vmatmul.mubr.f32.gmra.mxu0 %v42
  %v117 = vpop.f32.mrf.mxu0
  %v118 = vadd.f32 0.0, %v117
  %v119 = vpop.f32.mrf.mxu0
  %v120 = vadd.f32 0.0, %v119
  %121 = vdwg.mxu0
  %122 = vmatprep.subr.mxu0 0.0
  %123 = vmatpush1.msra.mxu0 0.0
  %124 = vmatprep.subr.mxu0 0.0
  %125 = vmatpush1.msra.mxu0 0.0
  %126 = vmatprep.subr.mxu0 0.0
  %127 = vmatpush1.msra.mxu0 0.0
  %128 = vmatprep.subr.mxu0 0.0
  %129 = vmatpush1.msra.mxu0 0.0
  %130 = vmatprep.subr.mxu0 0.0
  %131 = vmatpush1.msra.mxu0 0.0
  %132 = vmatprep.subr.mxu0 0.0
  %133 = vmatpush1.msra.mxu0 0.0
  %134 = vmatprep.subr.mxu0 0.0
  %135 = vmatpush1.msra.mxu0 0.0
  %136 = vmatprep.subr.mxu0 0.0
  %137 = vmatpush1.msra.mxu0 0.0
  %138 = vmatprep.subr.mxu0 0.0
  %139 = vmatpush1.msra.mxu0 0.0
  %140 = vmatprep.subr.mxu0 0.0
  %141 = vmatpush1.msra.mxu0 0.0
  %142 = vmatprep.subr.mxu0 0.0
  %143 = vmatpush1.msra.mxu0 0.0
  %144 = vmatprep.subr.mxu0 0.0
  %145 = vmatpush1.msra.mxu0 0.0
  %146 = vmatprep.subr.mxu0 0.0
  %147 = vmatpush1.msra.mxu0 0.0
  %148 = vmatprep.subr.mxu0 0.0
  %149 = vmatpush1.msra.mxu0 0.0
  %150 = vmatprep.subr.mxu0 0.0
  %151 = vmatpush1.msra.mxu0 0.0
  %152 = vmatprep.subr.mxu0 0.0
  %153 = vmatpush1.msra.mxu0 %v49
  %154 = vmatprep.subr.mxu0 0.0
  %155 = vmatpush2.msra.mxu0 0.0
  %156 = vmatprep.subr.mxu0 0.0
  %157 = vmatpush2.msra.mxu0 0.0
  %158 = vmatprep.subr.mxu0 0.0
  %159 = vmatpush2.msra.mxu0 0.0
  %160 = vmatprep.subr.mxu0 0.0
  %161 = vmatpush2.msra.mxu0 0.0
  %162 = vmatprep.subr.mxu0 0.0
  %163 = vmatpush2.msra.mxu0 0.0
  %164 = vmatprep.subr.mxu0 0.0
  %165 = vmatpush2.msra.mxu0 0.0
  %166 = vmatprep.subr.mxu0 0.0
  %167 = vmatpush2.msra.mxu0 0.0
  %168 = vmatprep.subr.mxu0 0.0
  %169 = vmatpush2.msra.mxu0 0.0
  %170 = vmatprep.subr.mxu0 0.0
  %171 = vmatpush2.msra.mxu0 0.0
  %172 = vmatprep.subr.mxu0 0.0
  %173 = vmatpush2.msra.mxu0 0.0
  %174 = vmatprep.subr.mxu0 0.0
  %175 = vmatpush2.msra.mxu0 0.0
  %176 = vmatprep.subr.mxu0 0.0
  %177 = vmatpush2.msra.mxu0 0.0
  %178 = vmatprep.subr.mxu0 0.0
  %179 = vmatpush2.msra.mxu0 0.0
  %180 = vmatprep.subr.mxu0 0.0
  %181 = vmatpush2.msra.mxu0 0.0
  %182 = vmatprep.subr.mxu0 0.0
  %183 = vmatpush2.msra.mxu0 0.0
  %184 = vmatprep.subr.mxu0 0.0
  %185 = vmatpush2.msra.mxu0 0.0
  %186 = vmatprep.mubr.f32.mxu0 0.0
  %187 = vmatmul.mubr.f32.gmra.mxu0 %v42
  %v188 = vpop.f32.mrf.mxu0
  %v189 = vadd.f32 0.0, %v188
  %v190 = vpop.f32.mrf.mxu0
  %191 = vdwg.mxu0
  %v193 = vsel %vm40, %v21, 0
  %v195 = vsel %vm44, %v19, 0
  %v197 = vsel %vm44, %v26, 0
  %v199 = vsel %vm44, %v20, 0
  %201 = vmatprep.subr.mxu0 0.0
  %202 = vmatpush1.msra.mxu0 0.0
  %203 = vmatprep.subr.mxu0 0.0
  %204 = vmatpush1.msra.mxu0 0.0
  %205 = vmatprep.subr.mxu0 0.0
  %206 = vmatpush1.msra.mxu0 0.0
  %207 = vmatprep.subr.mxu0 0.0
  %208 = vmatpush1.msra.mxu0 0.0
  %209 = vmatprep.subr.mxu0 0.0
  %210 = vmatpush1.msra.mxu0 0.0
  %211 = vmatprep.subr.mxu0 0.0
  %212 = vmatpush1.msra.mxu0 0.0
  %213 = vmatprep.subr.mxu0 0.0
  %214 = vmatpush1.msra.mxu0 0.0
  %215 = vmatprep.subr.mxu0 0.0
  %216 = vmatpush1.msra.mxu0 0.0
  %217 = vmatprep.subr.mxu0 0.0
  %218 = vmatpush1.msra.mxu0 0.0
  %219 = vmatprep.subr.mxu0 0.0
  %220 = vmatpush1.msra.mxu0 0.0
  %221 = vmatprep.subr.mxu0 0.0
  %222 = vmatpush1.msra.mxu0 0.0
  %223 = vmatprep.subr.mxu0 0.0
  %224 = vmatpush1.msra.mxu0 0.0
  %225 = vmatprep.subr.mxu0 0.0
  %226 = vmatpush1.msra.mxu0 0.0
  %227 = vmatprep.subr.mxu0 0.0
  %228 = vmatpush1.msra.mxu0 0.0
  %229 = vmatprep.subr.mxu0 0.0
  %230 = vmatpush1.msra.mxu0 0.0
  %231 = vmatprep.subr.mxu0 %v197
  %232 = vmatpush1.msra.mxu0 %v195
  %233 = vmatprep.subr.mxu0 0.0
  %234 = vmatpush2.msra.mxu0 0.0
  %235 = vmatprep.subr.mxu0 0.0
  %236 = vmatpush2.msra.mxu0 0.0
  %237 = vmatprep.subr.mxu0 0.0
  %238 = vmatpush2.msra.mxu0 0.0
  %239 = vmatprep.subr.mxu0 0.0
  %240 = vmatpush2.msra.mxu0 0.0
  %241 = vmatprep.subr.mxu0 0.0
  %242 = vmatpush2.msra.mxu0 0.0
  %243 = vmatprep.subr.mxu0 0.0
  %244 = vmatpush2.msra.mxu0 0.0
  %245 = vmatprep.subr.mxu0 0.0
  %246 = vmatpush2.msra.mxu0 0.0
  %247 = vmatprep.subr.mxu0 0.0
  %248 = vmatpush2.msra.mxu0 0.0
  %249 = vmatprep.subr.mxu0 0.0
  %250 = vmatpush2.msra.mxu0 0.0
  %251 = vmatprep.subr.mxu0 0.0
  %252 = vmatpush2.msra.mxu0 0.0
  %253 = vmatprep.subr.mxu0 0.0
  %254 = vmatpush2.msra.mxu0 0.0
  %255 = vmatprep.subr.mxu0 0.0
  %256 = vmatpush2.msra.mxu0 0.0
  %257 = vmatprep.subr.mxu0 0.0
  %258 = vmatpush2.msra.mxu0 0.0
  %259 = vmatprep.subr.mxu0 0.0
  %260 = vmatpush2.msra.mxu0 0.0
  %261 = vmatprep.subr.mxu0 0.0
  %262 = vmatpush2.msra.mxu0 0.0
  %263 = vmatprep.subr.mxu0 0.0
  %264 = vmatpush2.msra.mxu0 0.0
  %265 = vmatprep.mubr.f32.mxu0 0.0
  %266 = vmatmul.mubr.f32.gmra.mxu0 %v193
  %v267 = vpop.f32.mrf.mxu0
  %v268 = vadd.f32 %v118, %v267
  %v269 = vpop.f32.mrf.mxu0
  %v270 = vadd.f32 %v120, %v269
  %271 = vdwg.mxu0
  %272 = vmatprep.subr.mxu0 0.0
  %273 = vmatpush1.msra.mxu0 0.0
  %274 = vmatprep.subr.mxu0 0.0
  %275 = vmatpush1.msra.mxu0 0.0
  %276 = vmatprep.subr.mxu0 0.0
  %277 = vmatpush1.msra.mxu0 0.0
  %278 = vmatprep.subr.mxu0 0.0
  %279 = vmatpush1.msra.mxu0 0.0
  %280 = vmatprep.subr.mxu0 0.0
  %281 = vmatpush1.msra.mxu0 0.0
  %282 = vmatprep.subr.mxu0 0.0
  %283 = vmatpush1.msra.mxu0 0.0
  %284 = vmatprep.subr.mxu0 0.0
  %285 = vmatpush1.msra.mxu0 0.0
  %286 = vmatprep.subr.mxu0 0.0
  %287 = vmatpush1.msra.mxu0 0.0
  %288 = vmatprep.subr.mxu0 0.0
  %289 = vmatpush1.msra.mxu0 0.0
  %290 = vmatprep.subr.mxu0 0.0
  %291 = vmatpush1.msra.mxu0 0.0
  %292 = vmatprep.subr.mxu0 0.0
  %293 = vmatpush1.msra.mxu0 0.0
  %294 = vmatprep.subr.mxu0 0.0
  %295 = vmatpush1.msra.mxu0 0.0
  %296 = vmatprep.subr.mxu0 0.0
  %297 = vmatpush1.msra.mxu0 0.0
  %298 = vmatprep.subr.mxu0 0.0
  %299 = vmatpush1.msra.mxu0 0.0
  %300 = vmatprep.subr.mxu0 0.0
  %301 = vmatpush1.msra.mxu0 0.0
  %302 = vmatprep.subr.mxu0 0.0
  %303 = vmatpush1.msra.mxu0 %v199
  %304 = vmatprep.subr.mxu0 0.0
  %305 = vmatpush2.msra.mxu0 0.0
  %306 = vmatprep.subr.mxu0 0.0
  %307 = vmatpush2.msra.mxu0 0.0
  %308 = vmatprep.subr.mxu0 0.0
  %309 = vmatpush2.msra.mxu0 0.0
  %310 = vmatprep.subr.mxu0 0.0
  %311 = vmatpush2.msra.mxu0 0.0
  %312 = vmatprep.subr.mxu0 0.0
  %313 = vmatpush2.msra.mxu0 0.0
  %314 = vmatprep.subr.mxu0 0.0
  %315 = vmatpush2.msra.mxu0 0.0
  %316 = vmatprep.subr.mxu0 0.0
  %317 = vmatpush2.msra.mxu0 0.0
  %318 = vmatprep.subr.mxu0 0.0
  %319 = vmatpush2.msra.mxu0 0.0
  %320 = vmatprep.subr.mxu0 0.0
  %321 = vmatpush2.msra.mxu0 0.0
  %322 = vmatprep.subr.mxu0 0.0
  %323 = vmatpush2.msra.mxu0 0.0
  %324 = vmatprep.subr.mxu0 0.0
  %325 = vmatpush2.msra.mxu0 0.0
  %326 = vmatprep.subr.mxu0 0.0
  %327 = vmatpush2.msra.mxu0 0.0
  %328 = vmatprep.subr.mxu0 0.0
  %329 = vmatpush2.msra.mxu0 0.0
  %330 = vmatprep.subr.mxu0 0.0
  %331 = vmatpush2.msra.mxu0 0.0
  %332 = vmatprep.subr.mxu0 0.0
  %333 = vmatpush2.msra.mxu0 0.0
  %334 = vmatprep.subr.mxu0 0.0
  %335 = vmatpush2.msra.mxu0 0.0
  %336 = vmatprep.mubr.f32.mxu0 0.0
  %337 = vmatmul.mubr.f32.gmra.mxu0 %v193
  %v338 = vpop.f32.mrf.mxu0
  %v339 = vadd.f32 %v189, %v338
  %v340 = vpop.f32.mrf.mxu0
  %341 = vdwg.mxu0
  %s342 = scalar_lea.vmem %s1, 16
  %v343 = vld [vmem:[%s342] sm:$0xff]
  %344 = vrot.lane.b32.xlu0 %v19, 126
  %v345 = vpop.permute.xlu0 %344
  %346 = vrot.lane.b32.xlu0 %v26, 126
  %v347 = vpop.permute.xlu0 %346
  %348 = vrot.lane.b32.xlu0 %v20, 126
  %v349 = vpop.permute.xlu0 %348
  %350 = vrot.lane.b32.xlu0 %v27, 126
  %v351 = vpop.permute.xlu0 %350
  %vm352 = vcmask 1031168
  %v353 = vsel %vm352, %v345, %v347
  %v354 = vsel %vm352, %v347, %v349
  %v355 = vsel %vm352, %v349, %v351
  %v357 = vsel %vm40, %v343, 0
  %v359 = vsel %vm44, %v353, 0
  %v361 = vsel %vm44, %v354, 0
  %v363 = vsel %vm44, %v355, 0
  %365 = vmatprep.subr.mxu0 0.0
  %366 = vmatpush1.msra.mxu0 0.0
  %367 = vmatprep.subr.mxu0 0.0
  %368 = vmatpush1.msra.mxu0 0.0
  %369 = vmatprep.subr.mxu0 0.0
  %370 = vmatpush1.msra.mxu0 0.0
  %371 = vmatprep.subr.mxu0 0.0
  %372 = vmatpush1.msra.mxu0 0.0
  %373 = vmatprep.subr.mxu0 0.0
  %374 = vmatpush1.msra.mxu0 0.0
  %375 = vmatprep.subr.mxu0 0.0
  %376 = vmatpush1.msra.mxu0 0.0
  %377 = vmatprep.subr.mxu0 0.0
  %378 = vmatpush1.msra.mxu0 0.0
  %379 = vmatprep.subr.mxu0 0.0
  %380 = vmatpush1.msra.mxu0 0.0
  %381 = vmatprep.subr.mxu0 0.0
  %382 = vmatpush1.msra.mxu0 0.0
  %383 = vmatprep.subr.mxu0 0.0
  %384 = vmatpush1.msra.mxu0 0.0
  %385 = vmatprep.subr.mxu0 0.0
  %386 = vmatpush1.msra.mxu0 0.0
  %387 = vmatprep.subr.mxu0 0.0
  %388 = vmatpush1.msra.mxu0 0.0
  %389 = vmatprep.subr.mxu0 0.0
  %390 = vmatpush1.msra.mxu0 0.0
  %391 = vmatprep.subr.mxu0 0.0
  %392 = vmatpush1.msra.mxu0 0.0
  %393 = vmatprep.subr.mxu0 0.0
  %394 = vmatpush1.msra.mxu0 0.0
  %395 = vmatprep.subr.mxu0 %v361
  %396 = vmatpush1.msra.mxu0 %v359
  %397 = vmatprep.subr.mxu0 0.0
  %398 = vmatpush2.msra.mxu0 0.0
  %399 = vmatprep.subr.mxu0 0.0
  %400 = vmatpush2.msra.mxu0 0.0
  %401 = vmatprep.subr.mxu0 0.0
  %402 = vmatpush2.msra.mxu0 0.0
  %403 = vmatprep.subr.mxu0 0.0
  %404 = vmatpush2.msra.mxu0 0.0
  %405 = vmatprep.subr.mxu0 0.0
  %406 = vmatpush2.msra.mxu0 0.0
  %407 = vmatprep.subr.mxu0 0.0
  %408 = vmatpush2.msra.mxu0 0.0
  %409 = vmatprep.subr.mxu0 0.0
  %410 = vmatpush2.msra.mxu0 0.0
  %411 = vmatprep.subr.mxu0 0.0
  %412 = vmatpush2.msra.mxu0 0.0
  %413 = vmatprep.subr.mxu0 0.0
  %414 = vmatpush2.msra.mxu0 0.0
  %415 = vmatprep.subr.mxu0 0.0
  %416 = vmatpush2.msra.mxu0 0.0
  %417 = vmatprep.subr.mxu0 0.0
  %418 = vmatpush2.msra.mxu0 0.0
  %419 = vmatprep.subr.mxu0 0.0
  %420 = vmatpush2.msra.mxu0 0.0
  %421 = vmatprep.subr.mxu0 0.0
  %422 = vmatpush2.msra.mxu0 0.0
  %423 = vmatprep.subr.mxu0 0.0
  %424 = vmatpush2.msra.mxu0 0.0
  %425 = vmatprep.subr.mxu0 0.0
  %426 = vmatpush2.msra.mxu0 0.0
  %427 = vmatprep.subr.mxu0 0.0
  %428 = vmatpush2.msra.mxu0 0.0
  %429 = vmatprep.mubr.f32.mxu0 0.0
  %430 = vmatmul.mubr.f32.gmra.mxu0 %v357
  %v431 = vpop.f32.mrf.mxu0
  %v432 = vadd.f32 0.0, %v431
  %v433 = vpop.f32.mrf.mxu0
  %v434 = vadd.f32 0.0, %v433
  %435 = vdwg.mxu0
  %436 = vmatprep.subr.mxu0 0.0
  %437 = vmatpush1.msra.mxu0 0.0
  %438 = vmatprep.subr.mxu0 0.0
  %439 = vmatpush1.msra.mxu0 0.0
  %440 = vmatprep.subr.mxu0 0.0
  %441 = vmatpush1.msra.mxu0 0.0
  %442 = vmatprep.subr.mxu0 0.0
  %443 = vmatpush1.msra.mxu0 0.0
  %444 = vmatprep.subr.mxu0 0.0
  %445 = vmatpush1.msra.mxu0 0.0
  %446 = vmatprep.subr.mxu0 0.0
  %447 = vmatpush1.msra.mxu0 0.0
  %448 = vmatprep.subr.mxu0 0.0
  %449 = vmatpush1.msra.mxu0 0.0
  %450 = vmatprep.subr.mxu0 0.0
  %451 = vmatpush1.msra.mxu0 0.0
  %452 = vmatprep.subr.mxu0 0.0
  %453 = vmatpush1.msra.mxu0 0.0
  %454 = vmatprep.subr.mxu0 0.0
  %455 = vmatpush1.msra.mxu0 0.0
  %456 = vmatprep.subr.mxu0 0.0
  %457 = vmatpush1.msra.mxu0 0.0
  %458 = vmatprep.subr.mxu0 0.0
  %459 = vmatpush1.msra.mxu0 0.0
  %460 = vmatprep.subr.mxu0 0.0
  %461 = vmatpush1.msra.mxu0 0.0
  %462 = vmatprep.subr.mxu0 0.0
  %463 = vmatpush1.msra.mxu0 0.0
  %464 = vmatprep.subr.mxu0 0.0
  %465 = vmatpush1.msra.mxu0 0.0
  %466 = vmatprep.subr.mxu0 0.0
  %467 = vmatpush1.msra.mxu0 %v363
  %468 = vmatprep.subr.mxu0 0.0
  %469 = vmatpush2.msra.mxu0 0.0
  %470 = vmatprep.subr.mxu0 0.0
  %471 = vmatpush2.msra.mxu0 0.0
  %472 = vmatprep.subr.mxu0 0.0
  %473 = vmatpush2.msra.mxu0 0.0
  %474 = vmatprep.subr.mxu0 0.0
  %475 = vmatpush2.msra.mxu0 0.0
  %476 = vmatprep.subr.mxu0 0.0
  %477 = vmatpush2.msra.mxu0 0.0
  %478 = vmatprep.subr.mxu0 0.0
  %479 = vmatpush2.msra.mxu0 0.0
  %480 = vmatprep.subr.mxu0 0.0
  %481 = vmatpush2.msra.mxu0 0.0
  %482 = vmatprep.subr.mxu0 0.0
  %483 = vmatpush2.msra.mxu0 0.0
  %484 = vmatprep.subr.mxu0 0.0
  %485 = vmatpush2.msra.mxu0 0.0
  %486 = vmatprep.subr.mxu0 0.0
  %487 = vmatpush2.msra.mxu0 0.0
  %488 = vmatprep.subr.mxu0 0.0
  %489 = vmatpush2.msra.mxu0 0.0
  %490 = vmatprep.subr.mxu0 0.0
  %491 = vmatpush2.msra.mxu0 0.0
  %492 = vmatprep.subr.mxu0 0.0
  %493 = vmatpush2.msra.mxu0 0.0
  %494 = vmatprep.subr.mxu0 0.0
  %495 = vmatpush2.msra.mxu0 0.0
  %496 = vmatprep.subr.mxu0 0.0
  %497 = vmatpush2.msra.mxu0 0.0
  %498 = vmatprep.subr.mxu0 0.0
  %499 = vmatpush2.msra.mxu0 0.0
  %500 = vmatprep.mubr.f32.mxu0 0.0
  %501 = vmatmul.mubr.f32.gmra.mxu0 %v357
  %v502 = vpop.f32.mrf.mxu0
  %v503 = vadd.f32 0.0, %v502
  %v504 = vpop.f32.mrf.mxu0
  %505 = vdwg.mxu0
  %v506 = vadd.f32 %v268, %v432
  %v507 = vadd.f32 %v270, %v434
  %v508 = vadd.f32 %v339, %v503
  %s509 = scalar_lea.vmem %s1, 24
  %v510 = vld [vmem:[%s509] sm:$0xff]
  %511 = vrot.lane.b32.xlu0 %v19, 110
  %v512 = vpop.permute.xlu0 %511
  %513 = vrot.lane.b32.xlu0 %v26, 110
  %v514 = vpop.permute.xlu0 %513
  %515 = vrot.lane.b32.xlu0 %v20, 110
  %v516 = vpop.permute.xlu0 %515
  %517 = vrot.lane.b32.xlu0 %v27, 110
  %v518 = vpop.permute.xlu0 %517
  %vm519 = vcmask 900096
  %v520 = vsel %vm519, %v512, %v514
  %v521 = vsel %vm519, %v514, %v516
  %v522 = vsel %vm519, %v516, %v518
  %v524 = vsel %vm40, %v510, 0
  %v526 = vsel %vm44, %v520, 0
  %v528 = vsel %vm44, %v521, 0
  %v530 = vsel %vm44, %v522, 0
  %532 = vmatprep.subr.mxu0 0.0
  %533 = vmatpush1.msra.mxu0 0.0
  %534 = vmatprep.subr.mxu0 0.0
  %535 = vmatpush1.msra.mxu0 0.0
  %536 = vmatprep.subr.mxu0 0.0
  %537 = vmatpush1.msra.mxu0 0.0
  %538 = vmatprep.subr.mxu0 0.0
  %539 = vmatpush1.msra.mxu0 0.0
  %540 = vmatprep.subr.mxu0 0.0
  %541 = vmatpush1.msra.mxu0 0.0
  %542 = vmatprep.subr.mxu0 0.0
  %543 = vmatpush1.msra.mxu0 0.0
  %544 = vmatprep.subr.mxu0 0.0
  %545 = vmatpush1.msra.mxu0 0.0
  %546 = vmatprep.subr.mxu0 0.0
  %547 = vmatpush1.msra.mxu0 0.0
  %548 = vmatprep.subr.mxu0 0.0
  %549 = vmatpush1.msra.mxu0 0.0
  %550 = vmatprep.subr.mxu0 0.0
  %551 = vmatpush1.msra.mxu0 0.0
  %552 = vmatprep.subr.mxu0 0.0
  %553 = vmatpush1.msra.mxu0 0.0
  %554 = vmatprep.subr.mxu0 0.0
  %555 = vmatpush1.msra.mxu0 0.0
  %556 = vmatprep.subr.mxu0 0.0
  %557 = vmatpush1.msra.mxu0 0.0
  %558 = vmatprep.subr.mxu0 0.0
  %559 = vmatpush1.msra.mxu0 0.0
  %560 = vmatprep.subr.mxu0 0.0
  %561 = vmatpush1.msra.mxu0 0.0
  %562 = vmatprep.subr.mxu0 %v528
  %563 = vmatpush1.msra.mxu0 %v526
  %564 = vmatprep.subr.mxu0 0.0
  %565 = vmatpush2.msra.mxu0 0.0
  %566 = vmatprep.subr.mxu0 0.0
  %567 = vmatpush2.msra.mxu0 0.0
  %568 = vmatprep.subr.mxu0 0.0
  %569 = vmatpush2.msra.mxu0 0.0
  %570 = vmatprep.subr.mxu0 0.0
  %571 = vmatpush2.msra.mxu0 0.0
  %572 = vmatprep.subr.mxu0 0.0
  %573 = vmatpush2.msra.mxu0 0.0
  %574 = vmatprep.subr.mxu0 0.0
  %575 = vmatpush2.msra.mxu0 0.0
  %576 = vmatprep.subr.mxu0 0.0
  %577 = vmatpush2.msra.mxu0 0.0
  %578 = vmatprep.subr.mxu0 0.0
  %579 = vmatpush2.msra.mxu0 0.0
  %580 = vmatprep.subr.mxu0 0.0
  %581 = vmatpush2.msra.mxu0 0.0
  %582 = vmatprep.subr.mxu0 0.0
  %583 = vmatpush2.msra.mxu0 0.0
  %584 = vmatprep.subr.mxu0 0.0
  %585 = vmatpush2.msra.mxu0 0.0
  %586 = vmatprep.subr.mxu0 0.0
  %587 = vmatpush2.msra.mxu0 0.0
  %588 = vmatprep.subr.mxu0 0.0
  %589 = vmatpush2.msra.mxu0 0.0
  %590 = vmatprep.subr.mxu0 0.0
  %591 = vmatpush2.msra.mxu0 0.0
  %592 = vmatprep.subr.mxu0 0.0
  %593 = vmatpush2.msra.mxu0 0.0
  %594 = vmatprep.subr.mxu0 0.0
  %595 = vmatpush2.msra.mxu0 0.0
  %596 = vmatprep.mubr.f32.mxu0 0.0
  %597 = vmatmul.mubr.f32.gmra.mxu0 %v524
  %v598 = vpop.f32.mrf.mxu0
  %v599 = vadd.f32 0.0, %v598
  %v600 = vpop.f32.mrf.mxu0
  %v601 = vadd.f32 0.0, %v600
  %602 = vdwg.mxu0
  %603 = vmatprep.subr.mxu0 0.0
  %604 = vmatpush1.msra.mxu0 0.0
  %605 = vmatprep.subr.mxu0 0.0
  %606 = vmatpush1.msra.mxu0 0.0
  %607 = vmatprep.subr.mxu0 0.0
  %608 = vmatpush1.msra.mxu0 0.0
  %609 = vmatprep.subr.mxu0 0.0
  %610 = vmatpush1.msra.mxu0 0.0
  %611 = vmatprep.subr.mxu0 0.0
  %612 = vmatpush1.msra.mxu0 0.0
  %613 = vmatprep.subr.mxu0 0.0
  %614 = vmatpush1.msra.mxu0 0.0
  %615 = vmatprep.subr.mxu0 0.0
  %616 = vmatpush1.msra.mxu0 0.0
  %617 = vmatprep.subr.mxu0 0.0
  %618 = vmatpush1.msra.mxu0 0.0
  %619 = vmatprep.subr.mxu0 0.0
  %620 = vmatpush1.msra.mxu0 0.0
  %621 = vmatprep.subr.mxu0 0.0
  %622 = vmatpush1.msra.mxu0 0.0
  %623 = vmatprep.subr.mxu0 0.0
  %624 = vmatpush1.msra.mxu0 0.0
  %625 = vmatprep.subr.mxu0 0.0
  %626 = vmatpush1.msra.mxu0 0.0
  %627 = vmatprep.subr.mxu0 0.0
  %628 = vmatpush1.msra.mxu0 0.0
  %629 = vmatprep.subr.mxu0 0.0
  %630 = vmatpush1.msra.mxu0 0.0
  %631 = vmatprep.subr.mxu0 0.0
  %632 = vmatpush1.msra.mxu0 0.0
  %633 = vmatprep.subr.mxu0 0.0
  %634 = vmatpush1.msra.mxu0 %v530
  %635 = vmatprep.subr.mxu0 0.0
  %636 = vmatpush2.msra.mxu0 0.0
  %637 = vmatprep.subr.mxu0 0.0
  %638 = vmatpush2.msra.mxu0 0.0
  %639 = vmatprep.subr.mxu0 0.0
  %640 = vmatpush2.msra.mxu0 0.0
  %641 = vmatprep.subr.mxu0 0.0
  %642 = vmatpush2.msra.mxu0 0.0
  %643 = vmatprep.subr.mxu0 0.0
  %644 = vmatpush2.msra.mxu0 0.0
  %645 = vmatprep.subr.mxu0 0.0
  %646 = vmatpush2.msra.mxu0 0.0
  %647 = vmatprep.subr.mxu0 0.0
  %648 = vmatpush2.msra.mxu0 0.0
  %649 = vmatprep.subr.mxu0 0.0
  %650 = vmatpush2.msra.mxu0 0.0
  %651 = vmatprep.subr.mxu0 0.0
  %652 = vmatpush2.msra.mxu0 0.0
  %653 = vmatprep.subr.mxu0 0.0
  %654 = vmatpush2.msra.mxu0 0.0
  %655 = vmatprep.subr.mxu0 0.0
  %656 = vmatpush2.msra.mxu0 0.0
  %657 = vmatprep.subr.mxu0 0.0
  %658 = vmatpush2.msra.mxu0 0.0
  %659 = vmatprep.subr.mxu0 0.0
  %660 = vmatpush2.msra.mxu0 0.0
  %661 = vmatprep.subr.mxu0 0.0
  %662 = vmatpush2.msra.mxu0 0.0
  %663 = vmatprep.subr.mxu0 0.0
  %664 = vmatpush2.msra.mxu0 0.0
  %665 = vmatprep.subr.mxu0 0.0
  %666 = vmatpush2.msra.mxu0 0.0
  %667 = vmatprep.mubr.f32.mxu0 0.0
  %668 = vmatmul.mubr.f32.gmra.mxu0 %v524
  %v669 = vpop.f32.mrf.mxu0
  %v670 = vadd.f32 0.0, %v669
  %v671 = vpop.f32.mrf.mxu0
  %672 = vdwg.mxu0
  %v673 = vadd.f32 %v506, %v599
  %v674 = vadd.f32 %v507, %v601
  %v675 = vadd.f32 %v508, %v670
  %s676 = scalar_lea.vmem %s1, 32
  %v677 = vld [vmem:[%s676] sm:$0xff]
  %678 = vrot.lane.b32.xlu0 %v19, 109
  %v679 = vpop.permute.xlu0 %678
  %680 = vrot.lane.b32.xlu0 %v26, 109
  %v681 = vpop.permute.xlu0 %680
  %682 = vrot.lane.b32.xlu0 %v20, 109
  %v683 = vpop.permute.xlu0 %682
  %684 = vrot.lane.b32.xlu0 %v27, 109
  %v685 = vpop.permute.xlu0 %684
  %vm686 = vcmask 891904
  %v687 = vsel %vm686, %v679, %v681
  %v688 = vsel %vm686, %v681, %v683
  %v689 = vsel %vm686, %v683, %v685
  %v691 = vsel %vm40, %v677, 0
  %v693 = vsel %vm44, %v687, 0
  %v695 = vsel %vm44, %v688, 0
  %v697 = vsel %vm44, %v689, 0
  %699 = vmatprep.subr.mxu0 0.0
  %700 = vmatpush1.msra.mxu0 0.0
  %701 = vmatprep.subr.mxu0 0.0
  %702 = vmatpush1.msra.mxu0 0.0
  %703 = vmatprep.subr.mxu0 0.0
  %704 = vmatpush1.msra.mxu0 0.0
  %705 = vmatprep.subr.mxu0 0.0
  %706 = vmatpush1.msra.mxu0 0.0
  %707 = vmatprep.subr.mxu0 0.0
  %708 = vmatpush1.msra.mxu0 0.0
  %709 = vmatprep.subr.mxu0 0.0
  %710 = vmatpush1.msra.mxu0 0.0
  %711 = vmatprep.subr.mxu0 0.0
  %712 = vmatpush1.msra.mxu0 0.0
  %713 = vmatprep.subr.mxu0 0.0
  %714 = vmatpush1.msra.mxu0 0.0
  %715 = vmatprep.subr.mxu0 0.0
  %716 = vmatpush1.msra.mxu0 0.0
  %717 = vmatprep.subr.mxu0 0.0
  %718 = vmatpush1.msra.mxu0 0.0
  %719 = vmatprep.subr.mxu0 0.0
  %720 = vmatpush1.msra.mxu0 0.0
  %721 = vmatprep.subr.mxu0 0.0
  %722 = vmatpush1.msra.mxu0 0.0
  %723 = vmatprep.subr.mxu0 0.0
  %724 = vmatpush1.msra.mxu0 0.0
  %725 = vmatprep.subr.mxu0 0.0
  %726 = vmatpush1.msra.mxu0 0.0
  %727 = vmatprep.subr.mxu0 0.0
  %728 = vmatpush1.msra.mxu0 0.0
  %729 = vmatprep.subr.mxu0 %v695
  %730 = vmatpush1.msra.mxu0 %v693
  %731 = vmatprep.subr.mxu0 0.0
  %732 = vmatpush2.msra.mxu0 0.0
  %733 = vmatprep.subr.mxu0 0.0
  %734 = vmatpush2.msra.mxu0 0.0
  %735 = vmatprep.subr.mxu0 0.0
  %736 = vmatpush2.msra.mxu0 0.0
  %737 = vmatprep.subr.mxu0 0.0
  %738 = vmatpush2.msra.mxu0 0.0
  %739 = vmatprep.subr.mxu0 0.0
  %740 = vmatpush2.msra.mxu0 0.0
  %741 = vmatprep.subr.mxu0 0.0
  %742 = vmatpush2.msra.mxu0 0.0
  %743 = vmatprep.subr.mxu0 0.0
  %744 = vmatpush2.msra.mxu0 0.0
  %745 = vmatprep.subr.mxu0 0.0
  %746 = vmatpush2.msra.mxu0 0.0
  %747 = vmatprep.subr.mxu0 0.0
  %748 = vmatpush2.msra.mxu0 0.0
  %749 = vmatprep.subr.mxu0 0.0
  %750 = vmatpush2.msra.mxu0 0.0
  %751 = vmatprep.subr.mxu0 0.0
  %752 = vmatpush2.msra.mxu0 0.0
  %753 = vmatprep.subr.mxu0 0.0
  %754 = vmatpush2.msra.mxu0 0.0
  %755 = vmatprep.subr.mxu0 0.0
  %756 = vmatpush2.msra.mxu0 0.0
  %757 = vmatprep.subr.mxu0 0.0
  %758 = vmatpush2.msra.mxu0 0.0
  %759 = vmatprep.subr.mxu0 0.0
  %760 = vmatpush2.msra.mxu0 0.0
  %761 = vmatprep.subr.mxu0 0.0
  %762 = vmatpush2.msra.mxu0 0.0
  %763 = vmatprep.mubr.f32.mxu0 0.0
  %764 = vmatmul.mubr.f32.gmra.mxu0 %v691
  %v765 = vpop.f32.mrf.mxu0
  %v766 = vadd.f32 0.0, %v765
  %v767 = vpop.f32.mrf.mxu0
  %v768 = vadd.f32 0.0, %v767
  %769 = vdwg.mxu0
  %770 = vmatprep.subr.mxu0 0.0
  %771 = vmatpush1.msra.mxu0 0.0
  %772 = vmatprep.subr.mxu0 0.0
  %773 = vmatpush1.msra.mxu0 0.0
  %774 = vmatprep.subr.mxu0 0.0
  %775 = vmatpush1.msra.mxu0 0.0
  %776 = vmatprep.subr.mxu0 0.0
  %777 = vmatpush1.msra.mxu0 0.0
  %778 = vmatprep.subr.mxu0 0.0
  %779 = vmatpush1.msra.mxu0 0.0
  %780 = vmatprep.subr.mxu0 0.0
  %781 = vmatpush1.msra.mxu0 0.0
  %782 = vmatprep.subr.mxu0 0.0
  %783 = vmatpush1.msra.mxu0 0.0
  %784 = vmatprep.subr.mxu0 0.0
  %785 = vmatpush1.msra.mxu0 0.0
  %786 = vmatprep.subr.mxu0 0.0
  %787 = vmatpush1.msra.mxu0 0.0
  %788 = vmatprep.subr.mxu0 0.0
  %789 = vmatpush1.msra.mxu0 0.0
  %790 = vmatprep.subr.mxu0 0.0
  %791 = vmatpush1.msra.mxu0 0.0
  %792 = vmatprep.subr.mxu0 0.0
  %793 = vmatpush1.msra.mxu0 0.0
  %794 = vmatprep.subr.mxu0 0.0
  %795 = vmatpush1.msra.mxu0 0.0
  %796 = vmatprep.subr.mxu0 0.0
  %797 = vmatpush1.msra.mxu0 0.0
  %798 = vmatprep.subr.mxu0 0.0
  %799 = vmatpush1.msra.mxu0 0.0
  %800 = vmatprep.subr.mxu0 0.0
  %801 = vmatpush1.msra.mxu0 %v697
  %802 = vmatprep.subr.mxu0 0.0
  %803 = vmatpush2.msra.mxu0 0.0
  %804 = vmatprep.subr.mxu0 0.0
  %805 = vmatpush2.msra.mxu0 0.0
  %806 = vmatprep.subr.mxu0 0.0
  %807 = vmatpush2.msra.mxu0 0.0
  %808 = vmatprep.subr.mxu0 0.0
  %809 = vmatpush2.msra.mxu0 0.0
  %810 = vmatprep.subr.mxu0 0.0
  %811 = vmatpush2.msra.mxu0 0.0
  %812 = vmatprep.subr.mxu0 0.0
  %813 = vmatpush2.msra.mxu0 0.0
  %814 = vmatprep.subr.mxu0 0.0
  %815 = vmatpush2.msra.mxu0 0.0
  %816 = vmatprep.subr.mxu0 0.0
  %817 = vmatpush2.msra.mxu0 0.0
  %818 = vmatprep.subr.mxu0 0.0
  %819 = vmatpush2.msra.mxu0 0.0
  %820 = vmatprep.subr.mxu0 0.0
  %821 = vmatpush2.msra.mxu0 0.0
  %822 = vmatprep.subr.mxu0 0.0
  %823 = vmatpush2.msra.mxu0 0.0
  %824 = vmatprep.subr.mxu0 0.0
  %825 = vmatpush2.msra.mxu0 0.0
  %826 = vmatprep.subr.mxu0 0.0
  %827 = vmatpush2.msra.mxu0 0.0
  %828 = vmatprep.subr.mxu0 0.0
  %829 = vmatpush2.msra.mxu0 0.0
  %830 = vmatprep.subr.mxu0 0.0
  %831 = vmatpush2.msra.mxu0 0.0
  %832 = vmatprep.subr.mxu0 0.0
  %833 = vmatpush2.msra.mxu0 0.0
  %834 = vmatprep.mubr.f32.mxu0 0.0
  %835 = vmatmul.mubr.f32.gmra.mxu0 %v691
  %v836 = vpop.f32.mrf.mxu0
  %v837 = vadd.f32 0.0, %v836
  %v838 = vpop.f32.mrf.mxu0
  %839 = vdwg.mxu0
  %v840 = vadd.f32 %v673, %v766
  %v841 = vadd.f32 %v674, %v768
  %v842 = vadd.f32 %v675, %v837
  %s843 = scalar_lea.vmem %s1, 40
  %v844 = vld [vmem:[%s843] sm:$0xff]
  %845 = vrot.lane.b32.xlu0 %v19, 108
  %v846 = vpop.permute.xlu0 %845
  %847 = vrot.lane.b32.xlu0 %v26, 108
  %v848 = vpop.permute.xlu0 %847
  %849 = vrot.lane.b32.xlu0 %v20, 108
  %v850 = vpop.permute.xlu0 %849
  %851 = vrot.lane.b32.xlu0 %v27, 108
  %v852 = vpop.permute.xlu0 %851
  %vm853 = vcmask 883712
  %v854 = vsel %vm853, %v846, %v848
  %v855 = vsel %vm853, %v848, %v850
  %v856 = vsel %vm853, %v850, %v852
  %v858 = vsel %vm40, %v844, 0
  %v860 = vsel %vm44, %v854, 0
  %v862 = vsel %vm44, %v855, 0
  %v864 = vsel %vm44, %v856, 0
  %866 = vmatprep.subr.mxu0 0.0
  %867 = vmatpush1.msra.mxu0 0.0
  %868 = vmatprep.subr.mxu0 0.0
  %869 = vmatpush1.msra.mxu0 0.0
  %870 = vmatprep.subr.mxu0 0.0
  %871 = vmatpush1.msra.mxu0 0.0
  %872 = vmatprep.subr.mxu0 0.0
  %873 = vmatpush1.msra.mxu0 0.0
  %874 = vmatprep.subr.mxu0 0.0
  %875 = vmatpush1.msra.mxu0 0.0
  %876 = vmatprep.subr.mxu0 0.0
  %877 = vmatpush1.msra.mxu0 0.0
  %878 = vmatprep.subr.mxu0 0.0
  %879 = vmatpush1.msra.mxu0 0.0
  %880 = vmatprep.subr.mxu0 0.0
  %881 = vmatpush1.msra.mxu0 0.0
  %882 = vmatprep.subr.mxu0 0.0
  %883 = vmatpush1.msra.mxu0 0.0
  %884 = vmatprep.subr.mxu0 0.0
  %885 = vmatpush1.msra.mxu0 0.0
  %886 = vmatprep.subr.mxu0 0.0
  %887 = vmatpush1.msra.mxu0 0.0
  %888 = vmatprep.subr.mxu0 0.0
  %889 = vmatpush1.msra.mxu0 0.0
  %890 = vmatprep.subr.mxu0 0.0
  %891 = vmatpush1.msra.mxu0 0.0
  %892 = vmatprep.subr.mxu0 0.0
  %893 = vmatpush1.msra.mxu0 0.0
  %894 = vmatprep.subr.mxu0 0.0
  %895 = vmatpush1.msra.mxu0 0.0
  %896 = vmatprep.subr.mxu0 %v862
  %897 = vmatpush1.msra.mxu0 %v860
  %898 = vmatprep.subr.mxu0 0.0
  %899 = vmatpush2.msra.mxu0 0.0
  %900 = vmatprep.subr.mxu0 0.0
  %901 = vmatpush2.msra.mxu0 0.0
  %902 = vmatprep.subr.mxu0 0.0
  %903 = vmatpush2.msra.mxu0 0.0
  %904 = vmatprep.subr.mxu0 0.0
  %905 = vmatpush2.msra.mxu0 0.0
  %906 = vmatprep.subr.mxu0 0.0
  %907 = vmatpush2.msra.mxu0 0.0
  %908 = vmatprep.subr.mxu0 0.0
  %909 = vmatpush2.msra.mxu0 0.0
  %910 = vmatprep.subr.mxu0 0.0
  %911 = vmatpush2.msra.mxu0 0.0
  %912 = vmatprep.subr.mxu0 0.0
  %913 = vmatpush2.msra.mxu0 0.0
  %914 = vmatprep.subr.mxu0 0.0
  %915 = vmatpush2.msra.mxu0 0.0
  %916 = vmatprep.subr.mxu0 0.0
  %917 = vmatpush2.msra.mxu0 0.0
  %918 = vmatprep.subr.mxu0 0.0
  %919 = vmatpush2.msra.mxu0 0.0
  %920 = vmatprep.subr.mxu0 0.0
  %921 = vmatpush2.msra.mxu0 0.0
  %922 = vmatprep.subr.mxu0 0.0
  %923 = vmatpush2.msra.mxu0 0.0
  %924 = vmatprep.subr.mxu0 0.0
  %925 = vmatpush2.msra.mxu0 0.0
  %926 = vmatprep.subr.mxu0 0.0
  %927 = vmatpush2.msra.mxu0 0.0
  %928 = vmatprep.subr.mxu0 0.0
  %929 = vmatpush2.msra.mxu0 0.0
  %930 = vmatprep.mubr.f32.mxu0 0.0
  %931 = vmatmul.mubr.f32.gmra.mxu0 %v858
  %v932 = vpop.f32.mrf.mxu0
  %v933 = vadd.f32 0.0, %v932
  %v934 = vpop.f32.mrf.mxu0
  %v935 = vadd.f32 0.0, %v934
  %936 = vdwg.mxu0
  %937 = vmatprep.subr.mxu0 0.0
  %938 = vmatpush1.msra.mxu0 0.0
  %939 = vmatprep.subr.mxu0 0.0
  %940 = vmatpush1.msra.mxu0 0.0
  %941 = vmatprep.subr.mxu0 0.0
  %942 = vmatpush1.msra.mxu0 0.0
  %943 = vmatprep.subr.mxu0 0.0
  %944 = vmatpush1.msra.mxu0 0.0
  %945 = vmatprep.subr.mxu0 0.0
  %946 = vmatpush1.msra.mxu0 0.0
  %947 = vmatprep.subr.mxu0 0.0
  %948 = vmatpush1.msra.mxu0 0.0
  %949 = vmatprep.subr.mxu0 0.0
  %950 = vmatpush1.msra.mxu0 0.0
  %951 = vmatprep.subr.mxu0 0.0
  %952 = vmatpush1.msra.mxu0 0.0
  %953 = vmatprep.subr.mxu0 0.0
  %954 = vmatpush1.msra.mxu0 0.0
  %955 = vmatprep.subr.mxu0 0.0
  %956 = vmatpush1.msra.mxu0 0.0
  %957 = vmatprep.subr.mxu0 0.0
  %958 = vmatpush1.msra.mxu0 0.0
  %959 = vmatprep.subr.mxu0 0.0
  %960 = vmatpush1.msra.mxu0 0.0
  %961 = vmatprep.subr.mxu0 0.0
  %962 = vmatpush1.msra.mxu0 0.0
  %963 = vmatprep.subr.mxu0 0.0
  %964 = vmatpush1.msra.mxu0 0.0
  %965 = vmatprep.subr.mxu0 0.0
  %966 = vmatpush1.msra.mxu0 0.0
  %967 = vmatprep.subr.mxu0 0.0
  %968 = vmatpush1.msra.mxu0 %v864
  %969 = vmatprep.subr.mxu0 0.0
  %970 = vmatpush2.msra.mxu0 0.0
  %971 = vmatprep.subr.mxu0 0.0
  %972 = vmatpush2.msra.mxu0 0.0
  %973 = vmatprep.subr.mxu0 0.0
  %974 = vmatpush2.msra.mxu0 0.0
  %975 = vmatprep.subr.mxu0 0.0
  %976 = vmatpush2.msra.mxu0 0.0
  %977 = vmatprep.subr.mxu0 0.0
  %978 = vmatpush2.msra.mxu0 0.0
  %979 = vmatprep.subr.mxu0 0.0
  %980 = vmatpush2.msra.mxu0 0.0
  %981 = vmatprep.subr.mxu0 0.0
  %982 = vmatpush2.msra.mxu0 0.0
  %983 = vmatprep.subr.mxu0 0.0
  %984 = vmatpush2.msra.mxu0 0.0
  %985 = vmatprep.subr.mxu0 0.0
  %986 = vmatpush2.msra.mxu0 0.0
  %987 = vmatprep.subr.mxu0 0.0
  %988 = vmatpush2.msra.mxu0 0.0
  %989 = vmatprep.subr.mxu0 0.0
  %990 = vmatpush2.msra.mxu0 0.0
  %991 = vmatprep.subr.mxu0 0.0
  %992 = vmatpush2.msra.mxu0 0.0
  %993 = vmatprep.subr.mxu0 0.0
  %994 = vmatpush2.msra.mxu0 0.0
  %995 = vmatprep.subr.mxu0 0.0
  %996 = vmatpush2.msra.mxu0 0.0
  %997 = vmatprep.subr.mxu0 0.0
  %998 = vmatpush2.msra.mxu0 0.0
  %999 = vmatprep.subr.mxu0 0.0
  %1000 = vmatpush2.msra.mxu0 0.0
  %1001 = vmatprep.mubr.f32.mxu0 0.0
  %1002 = vmatmul.mubr.f32.gmra.mxu0 %v858
  %v1003 = vpop.f32.mrf.mxu0
  %v1004 = vadd.f32 0.0, %v1003
  %v1005 = vpop.f32.mrf.mxu0
  %1006 = vdwg.mxu0
  %v1007 = vadd.f32 %v840, %v933
  %v1008 = vadd.f32 %v841, %v935
  %v1009 = vadd.f32 %v842, %v1004
  %s1010 = scalar_lea.vmem %s1, 48
  %v1011 = vld [vmem:[%s1010] sm:$0xff]
  %1012 = vrot.lane.b32.xlu0 %v19, 92
  %v1013 = vpop.permute.xlu0 %1012
  %1014 = vrot.lane.b32.xlu0 %v26, 92
  %v1015 = vpop.permute.xlu0 %1014
  %1016 = vrot.lane.b32.xlu0 %v20, 92
  %v1017 = vpop.permute.xlu0 %1016
  %1018 = vrot.lane.b32.xlu0 %v27, 92
  %v1019 = vpop.permute.xlu0 %1018
  %vm1020 = vcmask 752640
  %v1021 = vsel %vm1020, %v1013, %v1015
  %v1022 = vsel %vm1020, %v1015, %v1017
  %v1023 = vsel %vm1020, %v1017, %v1019
  %v1025 = vsel %vm40, %v1011, 0
  %v1027 = vsel %vm44, %v1021, 0
  %v1029 = vsel %vm44, %v1022, 0
  %v1031 = vsel %vm44, %v1023, 0
  %1033 = vmatprep.subr.mxu0 0.0
  %1034 = vmatpush1.msra.mxu0 0.0
  %1035 = vmatprep.subr.mxu0 0.0
  %1036 = vmatpush1.msra.mxu0 0.0
  %1037 = vmatprep.subr.mxu0 0.0
  %1038 = vmatpush1.msra.mxu0 0.0
  %1039 = vmatprep.subr.mxu0 0.0
  %1040 = vmatpush1.msra.mxu0 0.0
  %1041 = vmatprep.subr.mxu0 0.0
  %1042 = vmatpush1.msra.mxu0 0.0
  %1043 = vmatprep.subr.mxu0 0.0
  %1044 = vmatpush1.msra.mxu0 0.0
  %1045 = vmatprep.subr.mxu0 0.0
  %1046 = vmatpush1.msra.mxu0 0.0
  %1047 = vmatprep.subr.mxu0 0.0
  %1048 = vmatpush1.msra.mxu0 0.0
  %1049 = vmatprep.subr.mxu0 0.0
  %1050 = vmatpush1.msra.mxu0 0.0
  %1051 = vmatprep.subr.mxu0 0.0
  %1052 = vmatpush1.msra.mxu0 0.0
  %1053 = vmatprep.subr.mxu0 0.0
  %1054 = vmatpush1.msra.mxu0 0.0
  %1055 = vmatprep.subr.mxu0 0.0
  %1056 = vmatpush1.msra.mxu0 0.0
  %1057 = vmatprep.subr.mxu0 0.0
  %1058 = vmatpush1.msra.mxu0 0.0
  %1059 = vmatprep.subr.mxu0 0.0
  %1060 = vmatpush1.msra.mxu0 0.0
  %1061 = vmatprep.subr.mxu0 0.0
  %1062 = vmatpush1.msra.mxu0 0.0
  %1063 = vmatprep.subr.mxu0 %v1029
  %1064 = vmatpush1.msra.mxu0 %v1027
  %1065 = vmatprep.subr.mxu0 0.0
  %1066 = vmatpush2.msra.mxu0 0.0
  %1067 = vmatprep.subr.mxu0 0.0
  %1068 = vmatpush2.msra.mxu0 0.0
  %1069 = vmatprep.subr.mxu0 0.0
  %1070 = vmatpush2.msra.mxu0 0.0
  %1071 = vmatprep.subr.mxu0 0.0
  %1072 = vmatpush2.msra.mxu0 0.0
  %1073 = vmatprep.subr.mxu0 0.0
  %1074 = vmatpush2.msra.mxu0 0.0
  %1075 = vmatprep.subr.mxu0 0.0
  %1076 = vmatpush2.msra.mxu0 0.0
  %1077 = vmatprep.subr.mxu0 0.0
  %1078 = vmatpush2.msra.mxu0 0.0
  %1079 = vmatprep.subr.mxu0 0.0
  %1080 = vmatpush2.msra.mxu0 0.0
  %1081 = vmatprep.subr.mxu0 0.0
  %1082 = vmatpush2.msra.mxu0 0.0
  %1083 = vmatprep.subr.mxu0 0.0
  %1084 = vmatpush2.msra.mxu0 0.0
  %1085 = vmatprep.subr.mxu0 0.0
  %1086 = vmatpush2.msra.mxu0 0.0
  %1087 = vmatprep.subr.mxu0 0.0
  %1088 = vmatpush2.msra.mxu0 0.0
  %1089 = vmatprep.subr.mxu0 0.0
  %1090 = vmatpush2.msra.mxu0 0.0
  %1091 = vmatprep.subr.mxu0 0.0
  %1092 = vmatpush2.msra.mxu0 0.0
  %1093 = vmatprep.subr.mxu0 0.0
  %1094 = vmatpush2.msra.mxu0 0.0
  %1095 = vmatprep.subr.mxu0 0.0
  %1096 = vmatpush2.msra.mxu0 0.0
  %1097 = vmatprep.mubr.f32.mxu0 0.0
  %1098 = vmatmul.mubr.f32.gmra.mxu0 %v1025
  %v1099 = vpop.f32.mrf.mxu0
  %v1100 = vadd.f32 0.0, %v1099
  %v1101 = vpop.f32.mrf.mxu0
  %v1102 = vadd.f32 0.0, %v1101
  %1103 = vdwg.mxu0
  %1104 = vmatprep.subr.mxu0 0.0
  %1105 = vmatpush1.msra.mxu0 0.0
  %1106 = vmatprep.subr.mxu0 0.0
  %1107 = vmatpush1.msra.mxu0 0.0
  %1108 = vmatprep.subr.mxu0 0.0
  %1109 = vmatpush1.msra.mxu0 0.0
  %1110 = vmatprep.subr.mxu0 0.0
  %1111 = vmatpush1.msra.mxu0 0.0
  %1112 = vmatprep.subr.mxu0 0.0
  %1113 = vmatpush1.msra.mxu0 0.0
  %1114 = vmatprep.subr.mxu0 0.0
  %1115 = vmatpush1.msra.mxu0 0.0
  %1116 = vmatprep.subr.mxu0 0.0
  %1117 = vmatpush1.msra.mxu0 0.0
  %1118 = vmatprep.subr.mxu0 0.0
  %1119 = vmatpush1.msra.mxu0 0.0
  %1120 = vmatprep.subr.mxu0 0.0
  %1121 = vmatpush1.msra.mxu0 0.0
  %1122 = vmatprep.subr.mxu0 0.0
  %1123 = vmatpush1.msra.mxu0 0.0
  %1124 = vmatprep.subr.mxu0 0.0
  %1125 = vmatpush1.msra.mxu0 0.0
  %1126 = vmatprep.subr.mxu0 0.0
  %1127 = vmatpush1.msra.mxu0 0.0
  %1128 = vmatprep.subr.mxu0 0.0
  %1129 = vmatpush1.msra.mxu0 0.0
  %1130 = vmatprep.subr.mxu0 0.0
  %1131 = vmatpush1.msra.mxu0 0.0
  %1132 = vmatprep.subr.mxu0 0.0
  %1133 = vmatpush1.msra.mxu0 0.0
  %1134 = vmatprep.subr.mxu0 0.0
  %1135 = vmatpush1.msra.mxu0 %v1031
  %1136 = vmatprep.subr.mxu0 0.0
  %1137 = vmatpush2.msra.mxu0 0.0
  %1138 = vmatprep.subr.mxu0 0.0
  %1139 = vmatpush2.msra.mxu0 0.0
  %1140 = vmatprep.subr.mxu0 0.0
  %1141 = vmatpush2.msra.mxu0 0.0
  %1142 = vmatprep.subr.mxu0 0.0
  %1143 = vmatpush2.msra.mxu0 0.0
  %1144 = vmatprep.subr.mxu0 0.0
  %1145 = vmatpush2.msra.mxu0 0.0
  %1146 = vmatprep.subr.mxu0 0.0
  %1147 = vmatpush2.msra.mxu0 0.0
  %1148 = vmatprep.subr.mxu0 0.0
  %1149 = vmatpush2.msra.mxu0 0.0
  %1150 = vmatprep.subr.mxu0 0.0
  %1151 = vmatpush2.msra.mxu0 0.0
  %1152 = vmatprep.subr.mxu0 0.0
  %1153 = vmatpush2.msra.mxu0 0.0
  %1154 = vmatprep.subr.mxu0 0.0
  %1155 = vmatpush2.msra.mxu0 0.0
  %1156 = vmatprep.subr.mxu0 0.0
  %1157 = vmatpush2.msra.mxu0 0.0
  %1158 = vmatprep.subr.mxu0 0.0
  %1159 = vmatpush2.msra.mxu0 0.0
  %1160 = vmatprep.subr.mxu0 0.0
  %1161 = vmatpush2.msra.mxu0 0.0
  %1162 = vmatprep.subr.mxu0 0.0
  %1163 = vmatpush2.msra.mxu0 0.0
  %1164 = vmatprep.subr.mxu0 0.0
  %1165 = vmatpush2.msra.mxu0 0.0
  %1166 = vmatprep.subr.mxu0 0.0
  %1167 = vmatpush2.msra.mxu0 0.0
  %1168 = vmatprep.mubr.f32.mxu0 0.0
  %1169 = vmatmul.mubr.f32.gmra.mxu0 %v1025
  %v1170 = vpop.f32.mrf.mxu0
  %v1171 = vadd.f32 0.0, %v1170
  %v1172 = vpop.f32.mrf.mxu0
  %1173 = vdwg.mxu0
  %v1174 = vadd.f32 %v1007, %v1100
  %v1175 = vadd.f32 %v1008, %v1102
  %v1176 = vadd.f32 %v1009, %v1171
  %s1177 = scalar_lea.vmem %s1, 56
  %v1178 = vld [vmem:[%s1177] sm:$0xff]
  %1179 = vrot.lane.b32.xlu0 %v19, 91
  %v1180 = vpop.permute.xlu0 %1179
  %1181 = vrot.lane.b32.xlu0 %v26, 91
  %v1182 = vpop.permute.xlu0 %1181
  %1183 = vrot.lane.b32.xlu0 %v20, 91
  %v1184 = vpop.permute.xlu0 %1183
  %1185 = vrot.lane.b32.xlu0 %v27, 91
  %v1186 = vpop.permute.xlu0 %1185
  %vm1187 = vcmask 744448
  %v1188 = vsel %vm1187, %v1180, %v1182
  %v1189 = vsel %vm1187, %v1182, %v1184
  %v1190 = vsel %vm1187, %v1184, %v1186
  %v1192 = vsel %vm40, %v1178, 0
  %v1194 = vsel %vm44, %v1188, 0
  %v1196 = vsel %vm44, %v1189, 0
  %v1198 = vsel %vm44, %v1190, 0
  %1200 = vmatprep.subr.mxu0 0.0
  %1201 = vmatpush1.msra.mxu0 0.0
  %1202 = vmatprep.subr.mxu0 0.0
  %1203 = vmatpush1.msra.mxu0 0.0
  %1204 = vmatprep.subr.mxu0 0.0
  %1205 = vmatpush1.msra.mxu0 0.0
  %1206 = vmatprep.subr.mxu0 0.0
  %1207 = vmatpush1.msra.mxu0 0.0
  %1208 = vmatprep.subr.mxu0 0.0
  %1209 = vmatpush1.msra.mxu0 0.0
  %1210 = vmatprep.subr.mxu0 0.0
  %1211 = vmatpush1.msra.mxu0 0.0
  %1212 = vmatprep.subr.mxu0 0.0
  %1213 = vmatpush1.msra.mxu0 0.0
  %1214 = vmatprep.subr.mxu0 0.0
  %1215 = vmatpush1.msra.mxu0 0.0
  %1216 = vmatprep.subr.mxu0 0.0
  %1217 = vmatpush1.msra.mxu0 0.0
  %1218 = vmatprep.subr.mxu0 0.0
  %1219 = vmatpush1.msra.mxu0 0.0
  %1220 = vmatprep.subr.mxu0 0.0
  %1221 = vmatpush1.msra.mxu0 0.0
  %1222 = vmatprep.subr.mxu0 0.0
  %1223 = vmatpush1.msra.mxu0 0.0
  %1224 = vmatprep.subr.mxu0 0.0
  %1225 = vmatpush1.msra.mxu0 0.0
  %1226 = vmatprep.subr.mxu0 0.0
  %1227 = vmatpush1.msra.mxu0 0.0
  %1228 = vmatprep.subr.mxu0 0.0
  %1229 = vmatpush1.msra.mxu0 0.0
  %1230 = vmatprep.subr.mxu0 %v1196
  %1231 = vmatpush1.msra.mxu0 %v1194
  %1232 = vmatprep.subr.mxu0 0.0
  %1233 = vmatpush2.msra.mxu0 0.0
  %1234 = vmatprep.subr.mxu0 0.0
  %1235 = vmatpush2.msra.mxu0 0.0
  %1236 = vmatprep.subr.mxu0 0.0
  %1237 = vmatpush2.msra.mxu0 0.0
  %1238 = vmatprep.subr.mxu0 0.0
  %1239 = vmatpush2.msra.mxu0 0.0
  %1240 = vmatprep.subr.mxu0 0.0
  %1241 = vmatpush2.msra.mxu0 0.0
  %1242 = vmatprep.subr.mxu0 0.0
  %1243 = vmatpush2.msra.mxu0 0.0
  %1244 = vmatprep.subr.mxu0 0.0
  %1245 = vmatpush2.msra.mxu0 0.0
  %1246 = vmatprep.subr.mxu0 0.0
  %1247 = vmatpush2.msra.mxu0 0.0
  %1248 = vmatprep.subr.mxu0 0.0
  %1249 = vmatpush2.msra.mxu0 0.0
  %1250 = vmatprep.subr.mxu0 0.0
  %1251 = vmatpush2.msra.mxu0 0.0
  %1252 = vmatprep.subr.mxu0 0.0
  %1253 = vmatpush2.msra.mxu0 0.0
  %1254 = vmatprep.subr.mxu0 0.0
  %1255 = vmatpush2.msra.mxu0 0.0
  %1256 = vmatprep.subr.mxu0 0.0
  %1257 = vmatpush2.msra.mxu0 0.0
  %1258 = vmatprep.subr.mxu0 0.0
  %1259 = vmatpush2.msra.mxu0 0.0
  %1260 = vmatprep.subr.mxu0 0.0
  %1261 = vmatpush2.msra.mxu0 0.0
  %1262 = vmatprep.subr.mxu0 0.0
  %1263 = vmatpush2.msra.mxu0 0.0
  %1264 = vmatprep.mubr.f32.mxu0 0.0
  %1265 = vmatmul.mubr.f32.gmra.mxu0 %v1192
  %v1266 = vpop.f32.mrf.mxu0
  %v1267 = vadd.f32 0.0, %v1266
  %v1268 = vpop.f32.mrf.mxu0
  %v1269 = vadd.f32 0.0, %v1268
  %1270 = vdwg.mxu0
  %1271 = vmatprep.subr.mxu0 0.0
  %1272 = vmatpush1.msra.mxu0 0.0
  %1273 = vmatprep.subr.mxu0 0.0
  %1274 = vmatpush1.msra.mxu0 0.0
  %1275 = vmatprep.subr.mxu0 0.0
  %1276 = vmatpush1.msra.mxu0 0.0
  %1277 = vmatprep.subr.mxu0 0.0
  %1278 = vmatpush1.msra.mxu0 0.0
  %1279 = vmatprep.subr.mxu0 0.0
  %1280 = vmatpush1.msra.mxu0 0.0
  %1281 = vmatprep.subr.mxu0 0.0
  %1282 = vmatpush1.msra.mxu0 0.0
  %1283 = vmatprep.subr.mxu0 0.0
  %1284 = vmatpush1.msra.mxu0 0.0
  %1285 = vmatprep.subr.mxu0 0.0
  %1286 = vmatpush1.msra.mxu0 0.0
  %1287 = vmatprep.subr.mxu0 0.0
  %1288 = vmatpush1.msra.mxu0 0.0
  %1289 = vmatprep.subr.mxu0 0.0
  %1290 = vmatpush1.msra.mxu0 0.0
  %1291 = vmatprep.subr.mxu0 0.0
  %1292 = vmatpush1.msra.mxu0 0.0
  %1293 = vmatprep.subr.mxu0 0.0
  %1294 = vmatpush1.msra.mxu0 0.0
  %1295 = vmatprep.subr.mxu0 0.0
  %1296 = vmatpush1.msra.mxu0 0.0
  %1297 = vmatprep.subr.mxu0 0.0
  %1298 = vmatpush1.msra.mxu0 0.0
  %1299 = vmatprep.subr.mxu0 0.0
  %1300 = vmatpush1.msra.mxu0 0.0
  %1301 = vmatprep.subr.mxu0 0.0
  %1302 = vmatpush1.msra.mxu0 %v1198
  %1303 = vmatprep.subr.mxu0 0.0
  %1304 = vmatpush2.msra.mxu0 0.0
  %1305 = vmatprep.subr.mxu0 0.0
  %1306 = vmatpush2.msra.mxu0 0.0
  %1307 = vmatprep.subr.mxu0 0.0
  %1308 = vmatpush2.msra.mxu0 0.0
  %1309 = vmatprep.subr.mxu0 0.0
  %1310 = vmatpush2.msra.mxu0 0.0
  %1311 = vmatprep.subr.mxu0 0.0
  %1312 = vmatpush2.msra.mxu0 0.0
  %1313 = vmatprep.subr.mxu0 0.0
  %1314 = vmatpush2.msra.mxu0 0.0
  %1315 = vmatprep.subr.mxu0 0.0
  %1316 = vmatpush2.msra.mxu0 0.0
  %1317 = vmatprep.subr.mxu0 0.0
  %1318 = vmatpush2.msra.mxu0 0.0
  %1319 = vmatprep.subr.mxu0 0.0
  %1320 = vmatpush2.msra.mxu0 0.0
  %1321 = vmatprep.subr.mxu0 0.0
  %1322 = vmatpush2.msra.mxu0 0.0
  %1323 = vmatprep.subr.mxu0 0.0
  %1324 = vmatpush2.msra.mxu0 0.0
  %1325 = vmatprep.subr.mxu0 0.0
  %1326 = vmatpush2.msra.mxu0 0.0
  %1327 = vmatprep.subr.mxu0 0.0
  %1328 = vmatpush2.msra.mxu0 0.0
  %1329 = vmatprep.subr.mxu0 0.0
  %1330 = vmatpush2.msra.mxu0 0.0
  %1331 = vmatprep.subr.mxu0 0.0
  %1332 = vmatpush2.msra.mxu0 0.0
  %1333 = vmatprep.subr.mxu0 0.0
  %1334 = vmatpush2.msra.mxu0 0.0
  %1335 = vmatprep.mubr.f32.mxu0 0.0
  %1336 = vmatmul.mubr.f32.gmra.mxu0 %v1192
  %v1337 = vpop.f32.mrf.mxu0
  %v1338 = vadd.f32 0.0, %v1337
  %v1339 = vpop.f32.mrf.mxu0
  %1340 = vdwg.mxu0
  %v1341 = vadd.f32 %v1174, %v1267
  %v1342 = vadd.f32 %v1175, %v1269
  %v1343 = vadd.f32 %v1176, %v1338
  %s1344 = scalar_lea.vmem %s1, 64
  %v1345 = vld [vmem:[%s1344] sm:$0xff]
  %1346 = vrot.lane.b32.xlu0 %v19, 90
  %v1347 = vpop.permute.xlu0 %1346
  %1348 = vrot.lane.b32.xlu0 %v26, 90
  %v1349 = vpop.permute.xlu0 %1348
  %1350 = vrot.lane.b32.xlu0 %v20, 90
  %v1351 = vpop.permute.xlu0 %1350
  %1352 = vrot.lane.b32.xlu0 %v27, 90
  %v1353 = vpop.permute.xlu0 %1352
  %vm1354 = vcmask 736256
  %v1355 = vsel %vm1354, %v1347, %v1349
  %v1356 = vsel %vm1354, %v1349, %v1351
  %v1357 = vsel %vm1354, %v1351, %v1353
  %v1359 = vsel %vm40, %v1345, 0
  %v1361 = vsel %vm44, %v1355, 0
  %v1363 = vsel %vm44, %v1356, 0
  %v1365 = vsel %vm44, %v1357, 0
  %1367 = vmatprep.subr.mxu0 0.0
  %1368 = vmatpush1.msra.mxu0 0.0
  %1369 = vmatprep.subr.mxu0 0.0
  %1370 = vmatpush1.msra.mxu0 0.0
  %1371 = vmatprep.subr.mxu0 0.0
  %1372 = vmatpush1.msra.mxu0 0.0
  %1373 = vmatprep.subr.mxu0 0.0
  %1374 = vmatpush1.msra.mxu0 0.0
  %1375 = vmatprep.subr.mxu0 0.0
  %1376 = vmatpush1.msra.mxu0 0.0
  %1377 = vmatprep.subr.mxu0 0.0
  %1378 = vmatpush1.msra.mxu0 0.0
  %1379 = vmatprep.subr.mxu0 0.0
  %1380 = vmatpush1.msra.mxu0 0.0
  %1381 = vmatprep.subr.mxu0 0.0
  %1382 = vmatpush1.msra.mxu0 0.0
  %1383 = vmatprep.subr.mxu0 0.0
  %1384 = vmatpush1.msra.mxu0 0.0
  %1385 = vmatprep.subr.mxu0 0.0
  %1386 = vmatpush1.msra.mxu0 0.0
  %1387 = vmatprep.subr.mxu0 0.0
  %1388 = vmatpush1.msra.mxu0 0.0
  %1389 = vmatprep.subr.mxu0 0.0
  %1390 = vmatpush1.msra.mxu0 0.0
  %1391 = vmatprep.subr.mxu0 0.0
  %1392 = vmatpush1.msra.mxu0 0.0
  %1393 = vmatprep.subr.mxu0 0.0
  %1394 = vmatpush1.msra.mxu0 0.0
  %1395 = vmatprep.subr.mxu0 0.0
  %1396 = vmatpush1.msra.mxu0 0.0
  %1397 = vmatprep.subr.mxu0 %v1363
  %1398 = vmatpush1.msra.mxu0 %v1361
  %1399 = vmatprep.subr.mxu0 0.0
  %1400 = vmatpush2.msra.mxu0 0.0
  %1401 = vmatprep.subr.mxu0 0.0
  %1402 = vmatpush2.msra.mxu0 0.0
  %1403 = vmatprep.subr.mxu0 0.0
  %1404 = vmatpush2.msra.mxu0 0.0
  %1405 = vmatprep.subr.mxu0 0.0
  %1406 = vmatpush2.msra.mxu0 0.0
  %1407 = vmatprep.subr.mxu0 0.0
  %1408 = vmatpush2.msra.mxu0 0.0
  %1409 = vmatprep.subr.mxu0 0.0
  %1410 = vmatpush2.msra.mxu0 0.0
  %1411 = vmatprep.subr.mxu0 0.0
  %1412 = vmatpush2.msra.mxu0 0.0
  %1413 = vmatprep.subr.mxu0 0.0
  %1414 = vmatpush2.msra.mxu0 0.0
  %1415 = vmatprep.subr.mxu0 0.0
  %1416 = vmatpush2.msra.mxu0 0.0
  %1417 = vmatprep.subr.mxu0 0.0
  %1418 = vmatpush2.msra.mxu0 0.0
  %1419 = vmatprep.subr.mxu0 0.0
  %1420 = vmatpush2.msra.mxu0 0.0
  %1421 = vmatprep.subr.mxu0 0.0
  %1422 = vmatpush2.msra.mxu0 0.0
  %1423 = vmatprep.subr.mxu0 0.0
  %1424 = vmatpush2.msra.mxu0 0.0
  %1425 = vmatprep.subr.mxu0 0.0
  %1426 = vmatpush2.msra.mxu0 0.0
  %1427 = vmatprep.subr.mxu0 0.0
  %1428 = vmatpush2.msra.mxu0 0.0
  %1429 = vmatprep.subr.mxu0 0.0
  %1430 = vmatpush2.msra.mxu0 0.0
  %1431 = vmatprep.mubr.f32.mxu0 0.0
  %1432 = vmatmul.mubr.f32.gmra.mxu0 %v1359
  %v1433 = vpop.f32.mrf.mxu0
  %v1434 = vadd.f32 0.0, %v1433
  %v1435 = vpop.f32.mrf.mxu0
  %v1436 = vadd.f32 0.0, %v1435
  %1437 = vdwg.mxu0
  %1438 = vmatprep.subr.mxu0 0.0
  %1439 = vmatpush1.msra.mxu0 0.0
  %1440 = vmatprep.subr.mxu0 0.0
  %1441 = vmatpush1.msra.mxu0 0.0
  %1442 = vmatprep.subr.mxu0 0.0
  %1443 = vmatpush1.msra.mxu0 0.0
  %1444 = vmatprep.subr.mxu0 0.0
  %1445 = vmatpush1.msra.mxu0 0.0
  %1446 = vmatprep.subr.mxu0 0.0
  %1447 = vmatpush1.msra.mxu0 0.0
  %1448 = vmatprep.subr.mxu0 0.0
  %1449 = vmatpush1.msra.mxu0 0.0
  %1450 = vmatprep.subr.mxu0 0.0
  %1451 = vmatpush1.msra.mxu0 0.0
  %1452 = vmatprep.subr.mxu0 0.0
  %1453 = vmatpush1.msra.mxu0 0.0
  %1454 = vmatprep.subr.mxu0 0.0
  %1455 = vmatpush1.msra.mxu0 0.0
  %1456 = vmatprep.subr.mxu0 0.0
  %1457 = vmatpush1.msra.mxu0 0.0
  %1458 = vmatprep.subr.mxu0 0.0
  %1459 = vmatpush1.msra.mxu0 0.0
  %1460 = vmatprep.subr.mxu0 0.0
  %1461 = vmatpush1.msra.mxu0 0.0
  %1462 = vmatprep.subr.mxu0 0.0
  %1463 = vmatpush1.msra.mxu0 0.0
  %1464 = vmatprep.subr.mxu0 0.0
  %1465 = vmatpush1.msra.mxu0 0.0
  %1466 = vmatprep.subr.mxu0 0.0
  %1467 = vmatpush1.msra.mxu0 0.0
  %1468 = vmatprep.subr.mxu0 0.0
  %1469 = vmatpush1.msra.mxu0 %v1365
  %1470 = vmatprep.subr.mxu0 0.0
  %1471 = vmatpush2.msra.mxu0 0.0
  %1472 = vmatprep.subr.mxu0 0.0
  %1473 = vmatpush2.msra.mxu0 0.0
  %1474 = vmatprep.subr.mxu0 0.0
  %1475 = vmatpush2.msra.mxu0 0.0
  %1476 = vmatprep.subr.mxu0 0.0
  %1477 = vmatpush2.msra.mxu0 0.0
  %1478 = vmatprep.subr.mxu0 0.0
  %1479 = vmatpush2.msra.mxu0 0.0
  %1480 = vmatprep.subr.mxu0 0.0
  %1481 = vmatpush2.msra.mxu0 0.0
  %1482 = vmatprep.subr.mxu0 0.0
  %1483 = vmatpush2.msra.mxu0 0.0
  %1484 = vmatprep.subr.mxu0 0.0
  %1485 = vmatpush2.msra.mxu0 0.0
  %1486 = vmatprep.subr.mxu0 0.0
  %1487 = vmatpush2.msra.mxu0 0.0
  %1488 = vmatprep.subr.mxu0 0.0
  %1489 = vmatpush2.msra.mxu0 0.0
  %1490 = vmatprep.subr.mxu0 0.0
  %1491 = vmatpush2.msra.mxu0 0.0
  %1492 = vmatprep.subr.mxu0 0.0
  %1493 = vmatpush2.msra.mxu0 0.0
  %1494 = vmatprep.subr.mxu0 0.0
  %1495 = vmatpush2.msra.mxu0 0.0
  %1496 = vmatprep.subr.mxu0 0.0
  %1497 = vmatpush2.msra.mxu0 0.0
  %1498 = vmatprep.subr.mxu0 0.0
  %1499 = vmatpush2.msra.mxu0 0.0
  %1500 = vmatprep.subr.mxu0 0.0
  %1501 = vmatpush2.msra.mxu0 0.0
  %1502 = vmatprep.mubr.f32.mxu0 0.0
  %1503 = vmatmul.mubr.f32.gmra.mxu0 %v1359
  %v1504 = vpop.f32.mrf.mxu0
  %v1505 = vadd.f32 0.0, %v1504
  %v1506 = vpop.f32.mrf.mxu0
  %1507 = vdwg.mxu0
  %v1508 = vadd.f32 %v1341, %v1434
  %v1509 = vadd.f32 %v1342, %v1436
  %v1510 = vadd.f32 %v1343, %v1505
  %1512 = vset.pattern.permute.xlu0 0
  %1513 = vperm.xlu0 %1512, %v17
  %v1514 = vpop.permute.xlu0 %1513
  %v1516 = vmul.f32 %v1508, %v1514
  %v1517 = vmul.f32 %v1509, %v1514
  %v1518 = vmul.f32 %v1510, %v1514
  %1520 = vset.pattern.permute.xlu0 0
  %1521 = vperm.xlu0 %1520, %v18
  %v1522 = vpop.permute.xlu0 %1521
  %v1524 = vadd.f32 %v1516, %v1522
  %v1525 = vadd.f32 %v1517, %v1522
  %v1526 = vadd.f32 %v1518, %v1522
  %1527 = vst [vmem:[%s4] sm:$0xff] %v1524
  %1528 = vst [vmem:[%s4 + $0x8] sm:$0xff] %v1525
  %1529 = vst [vmem:[%s4 + $0x10] sm:$0xff] %v1526
  %s1530 = scalar_lea.vmem %s0, 16
  %v1531 = vld [vmem:[%s1530] sm:$0xff]
  %v1532 = vld [vmem:[%s1530 + $0x8] sm:$0xff]
  %v1533 = vld [vmem:[%s1] sm:$0xff]
  %v1534 = vld [vmem:[%s22] sm:$0xff]
  %v1537 = vcombine.high %v1531, %v1531
  %v1538 = vcombine.high %v1532, %v1532
  %1539 = vrot.lane.b32.xlu0 %v1531, 127
  %v1540 = vpop.permute.xlu0 %1539
  %1541 = vrot.lane.b32.xlu0 %v1537, 127
  %v1542 = vpop.permute.xlu0 %1541
  %1543 = vrot.lane.b32.xlu0 %v1532, 127
  %v1544 = vpop.permute.xlu0 %1543
  %1545 = vrot.lane.b32.xlu0 %v1538, 127
  %v1546 = vpop.permute.xlu0 %1545
  %v1547 = vsel %vm36, %v1540, %v1542
  %v1548 = vsel %vm36, %v1542, %v1544
  %v1549 = vsel %vm36, %v1544, %v1546
  %v1551 = vsel %vm40, %v1534, 0
  %v1553 = vsel %vm44, %v1547, 0
  %v1555 = vsel %vm44, %v1548, 0
  %v1557 = vsel %vm44, %v1549, 0
  %1559 = vmatprep.subr.mxu0 0.0
  %1560 = vmatpush1.msra.mxu0 0.0
  %1561 = vmatprep.subr.mxu0 0.0
  %1562 = vmatpush1.msra.mxu0 0.0
  %1563 = vmatprep.subr.mxu0 0.0
  %1564 = vmatpush1.msra.mxu0 0.0
  %1565 = vmatprep.subr.mxu0 0.0
  %1566 = vmatpush1.msra.mxu0 0.0
  %1567 = vmatprep.subr.mxu0 0.0
  %1568 = vmatpush1.msra.mxu0 0.0
  %1569 = vmatprep.subr.mxu0 0.0
  %1570 = vmatpush1.msra.mxu0 0.0
  %1571 = vmatprep.subr.mxu0 0.0
  %1572 = vmatpush1.msra.mxu0 0.0
  %1573 = vmatprep.subr.mxu0 0.0
  %1574 = vmatpush1.msra.mxu0 0.0
  %1575 = vmatprep.subr.mxu0 0.0
  %1576 = vmatpush1.msra.mxu0 0.0
  %1577 = vmatprep.subr.mxu0 0.0
  %1578 = vmatpush1.msra.mxu0 0.0
  %1579 = vmatprep.subr.mxu0 0.0
  %1580 = vmatpush1.msra.mxu0 0.0
  %1581 = vmatprep.subr.mxu0 0.0
  %1582 = vmatpush1.msra.mxu0 0.0
  %1583 = vmatprep.subr.mxu0 0.0
  %1584 = vmatpush1.msra.mxu0 0.0
  %1585 = vmatprep.subr.mxu0 0.0
  %1586 = vmatpush1.msra.mxu0 0.0
  %1587 = vmatprep.subr.mxu0 0.0
  %1588 = vmatpush1.msra.mxu0 0.0
  %1589 = vmatprep.subr.mxu0 %v1555
  %1590 = vmatpush1.msra.mxu0 %v1553
  %1591 = vmatprep.subr.mxu0 0.0
  %1592 = vmatpush2.msra.mxu0 0.0
  %1593 = vmatprep.subr.mxu0 0.0
  %1594 = vmatpush2.msra.mxu0 0.0
  %1595 = vmatprep.subr.mxu0 0.0
  %1596 = vmatpush2.msra.mxu0 0.0
  %1597 = vmatprep.subr.mxu0 0.0
  %1598 = vmatpush2.msra.mxu0 0.0
  %1599 = vmatprep.subr.mxu0 0.0
  %1600 = vmatpush2.msra.mxu0 0.0
  %1601 = vmatprep.subr.mxu0 0.0
  %1602 = vmatpush2.msra.mxu0 0.0
  %1603 = vmatprep.subr.mxu0 0.0
  %1604 = vmatpush2.msra.mxu0 0.0
  %1605 = vmatprep.subr.mxu0 0.0
  %1606 = vmatpush2.msra.mxu0 0.0
  %1607 = vmatprep.subr.mxu0 0.0
  %1608 = vmatpush2.msra.mxu0 0.0
  %1609 = vmatprep.subr.mxu0 0.0
  %1610 = vmatpush2.msra.mxu0 0.0
  %1611 = vmatprep.subr.mxu0 0.0
  %1612 = vmatpush2.msra.mxu0 0.0
  %1613 = vmatprep.subr.mxu0 0.0
  %1614 = vmatpush2.msra.mxu0 0.0
  %1615 = vmatprep.subr.mxu0 0.0
  %1616 = vmatpush2.msra.mxu0 0.0
  %1617 = vmatprep.subr.mxu0 0.0
  %1618 = vmatpush2.msra.mxu0 0.0
  %1619 = vmatprep.subr.mxu0 0.0
  %1620 = vmatpush2.msra.mxu0 0.0
  %1621 = vmatprep.subr.mxu0 0.0
  %1622 = vmatpush2.msra.mxu0 0.0
  %1623 = vmatprep.mubr.f32.mxu0 0.0
  %1624 = vmatmul.mubr.f32.gmra.mxu0 %v1551
  %v1625 = vpop.f32.mrf.mxu0
  %v1626 = vadd.f32 0.0, %v1625
  %v1627 = vpop.f32.mrf.mxu0
  %v1628 = vadd.f32 0.0, %v1627
  %1629 = vdwg.mxu0
  %1630 = vmatprep.subr.mxu0 0.0
  %1631 = vmatpush1.msra.mxu0 0.0
  %1632 = vmatprep.subr.mxu0 0.0
  %1633 = vmatpush1.msra.mxu0 0.0
  %1634 = vmatprep.subr.mxu0 0.0
  %1635 = vmatpush1.msra.mxu0 0.0
  %1636 = vmatprep.subr.mxu0 0.0
  %1637 = vmatpush1.msra.mxu0 0.0
  %1638 = vmatprep.subr.mxu0 0.0
  %1639 = vmatpush1.msra.mxu0 0.0
  %1640 = vmatprep.subr.mxu0 0.0
  %1641 = vmatpush1.msra.mxu0 0.0
  %1642 = vmatprep.subr.mxu0 0.0
  %1643 = vmatpush1.msra.mxu0 0.0
  %1644 = vmatprep.subr.mxu0 0.0
  %1645 = vmatpush1.msra.mxu0 0.0
  %1646 = vmatprep.subr.mxu0 0.0
  %1647 = vmatpush1.msra.mxu0 0.0
  %1648 = vmatprep.subr.mxu0 0.0
  %1649 = vmatpush1.msra.mxu0 0.0
  %1650 = vmatprep.subr.mxu0 0.0
  %1651 = vmatpush1.msra.mxu0 0.0
  %1652 = vmatprep.subr.mxu0 0.0
  %1653 = vmatpush1.msra.mxu0 0.0
  %1654 = vmatprep.subr.mxu0 0.0
  %1655 = vmatpush1.msra.mxu0 0.0
  %1656 = vmatprep.subr.mxu0 0.0
  %1657 = vmatpush1.msra.mxu0 0.0
  %1658 = vmatprep.subr.mxu0 0.0
  %1659 = vmatpush1.msra.mxu0 0.0
  %1660 = vmatprep.subr.mxu0 0.0
  %1661 = vmatpush1.msra.mxu0 %v1557
  %1662 = vmatprep.subr.mxu0 0.0
  %1663 = vmatpush2.msra.mxu0 0.0
  %1664 = vmatprep.subr.mxu0 0.0
  %1665 = vmatpush2.msra.mxu0 0.0
  %1666 = vmatprep.subr.mxu0 0.0
  %1667 = vmatpush2.msra.mxu0 0.0
  %1668 = vmatprep.subr.mxu0 0.0
  %1669 = vmatpush2.msra.mxu0 0.0
  %1670 = vmatprep.subr.mxu0 0.0
  %1671 = vmatpush2.msra.mxu0 0.0
  %1672 = vmatprep.subr.mxu0 0.0
  %1673 = vmatpush2.msra.mxu0 0.0
  %1674 = vmatprep.subr.mxu0 0.0
  %1675 = vmatpush2.msra.mxu0 0.0
  %1676 = vmatprep.subr.mxu0 0.0
  %1677 = vmatpush2.msra.mxu0 0.0
  %1678 = vmatprep.subr.mxu0 0.0
  %1679 = vmatpush2.msra.mxu0 0.0
  %1680 = vmatprep.subr.mxu0 0.0
  %1681 = vmatpush2.msra.mxu0 0.0
  %1682 = vmatprep.subr.mxu0 0.0
  %1683 = vmatpush2.msra.mxu0 0.0
  %1684 = vmatprep.subr.mxu0 0.0
  %1685 = vmatpush2.msra.mxu0 0.0
  %1686 = vmatprep.subr.mxu0 0.0
  %1687 = vmatpush2.msra.mxu0 0.0
  %1688 = vmatprep.subr.mxu0 0.0
  %1689 = vmatpush2.msra.mxu0 0.0
  %1690 = vmatprep.subr.mxu0 0.0
  %1691 = vmatpush2.msra.mxu0 0.0
  %1692 = vmatprep.subr.mxu0 0.0
  %1693 = vmatpush2.msra.mxu0 0.0
  %1694 = vmatprep.mubr.f32.mxu0 0.0
  %1695 = vmatmul.mubr.f32.gmra.mxu0 %v1551
  %v1696 = vpop.f32.mrf.mxu0
  %v1697 = vadd.f32 0.0, %v1696
  %v1698 = vpop.f32.mrf.mxu0
  %1699 = vdwg.mxu0
  %v1701 = vsel %vm40, %v1533, 0
  %v1703 = vsel %vm44, %v1531, 0
  %v1705 = vsel %vm44, %v1537, 0
  %v1707 = vsel %vm44, %v1532, 0
  %1709 = vmatprep.subr.mxu0 0.0
  %1710 = vmatpush1.msra.mxu0 0.0
  %1711 = vmatprep.subr.mxu0 0.0
  %1712 = vmatpush1.msra.mxu0 0.0
  %1713 = vmatprep.subr.mxu0 0.0
  %1714 = vmatpush1.msra.mxu0 0.0
  %1715 = vmatprep.subr.mxu0 0.0
  %1716 = vmatpush1.msra.mxu0 0.0
  %1717 = vmatprep.subr.mxu0 0.0
  %1718 = vmatpush1.msra.mxu0 0.0
  %1719 = vmatprep.subr.mxu0 0.0
  %1720 = vmatpush1.msra.mxu0 0.0
  %1721 = vmatprep.subr.mxu0 0.0
  %1722 = vmatpush1.msra.mxu0 0.0
  %1723 = vmatprep.subr.mxu0 0.0
  %1724 = vmatpush1.msra.mxu0 0.0
  %1725 = vmatprep.subr.mxu0 0.0
  %1726 = vmatpush1.msra.mxu0 0.0
  %1727 = vmatprep.subr.mxu0 0.0
  %1728 = vmatpush1.msra.mxu0 0.0
  %1729 = vmatprep.subr.mxu0 0.0
  %1730 = vmatpush1.msra.mxu0 0.0
  %1731 = vmatprep.subr.mxu0 0.0
  %1732 = vmatpush1.msra.mxu0 0.0
  %1733 = vmatprep.subr.mxu0 0.0
  %1734 = vmatpush1.msra.mxu0 0.0
  %1735 = vmatprep.subr.mxu0 0.0
  %1736 = vmatpush1.msra.mxu0 0.0
  %1737 = vmatprep.subr.mxu0 0.0
  %1738 = vmatpush1.msra.mxu0 0.0
  %1739 = vmatprep.subr.mxu0 %v1705
  %1740 = vmatpush1.msra.mxu0 %v1703
  %1741 = vmatprep.subr.mxu0 0.0
  %1742 = vmatpush2.msra.mxu0 0.0
  %1743 = vmatprep.subr.mxu0 0.0
  %1744 = vmatpush2.msra.mxu0 0.0
  %1745 = vmatprep.subr.mxu0 0.0
  %1746 = vmatpush2.msra.mxu0 0.0
  %1747 = vmatprep.subr.mxu0 0.0
  %1748 = vmatpush2.msra.mxu0 0.0
  %1749 = vmatprep.subr.mxu0 0.0
  %1750 = vmatpush2.msra.mxu0 0.0
  %1751 = vmatprep.subr.mxu0 0.0
  %1752 = vmatpush2.msra.mxu0 0.0
  %1753 = vmatprep.subr.mxu0 0.0
  %1754 = vmatpush2.msra.mxu0 0.0
  %1755 = vmatprep.subr.mxu0 0.0
  %1756 = vmatpush2.msra.mxu0 0.0
  %1757 = vmatprep.subr.mxu0 0.0
  %1758 = vmatpush2.msra.mxu0 0.0
  %1759 = vmatprep.subr.mxu0 0.0
  %1760 = vmatpush2.msra.mxu0 0.0
  %1761 = vmatprep.subr.mxu0 0.0
  %1762 = vmatpush2.msra.mxu0 0.0
  %1763 = vmatprep.subr.mxu0 0.0
  %1764 = vmatpush2.msra.mxu0 0.0
  %1765 = vmatprep.subr.mxu0 0.0
  %1766 = vmatpush2.msra.mxu0 0.0
  %1767 = vmatprep.subr.mxu0 0.0
  %1768 = vmatpush2.msra.mxu0 0.0
  %1769 = vmatprep.subr.mxu0 0.0
  %1770 = vmatpush2.msra.mxu0 0.0
  %1771 = vmatprep.subr.mxu0 0.0
  %1772 = vmatpush2.msra.mxu0 0.0
  %1773 = vmatprep.mubr.f32.mxu0 0.0
  %1774 = vmatmul.mubr.f32.gmra.mxu0 %v1701
  %v1775 = vpop.f32.mrf.mxu0
  %v1776 = vadd.f32 %v1626, %v1775
  %v1777 = vpop.f32.mrf.mxu0
  %v1778 = vadd.f32 %v1628, %v1777
  %1779 = vdwg.mxu0
  %1780 = vmatprep.subr.mxu0 0.0
  %1781 = vmatpush1.msra.mxu0 0.0
  %1782 = vmatprep.subr.mxu0 0.0
  %1783 = vmatpush1.msra.mxu0 0.0
  %1784 = vmatprep.subr.mxu0 0.0
  %1785 = vmatpush1.msra.mxu0 0.0
  %1786 = vmatprep.subr.mxu0 0.0
  %1787 = vmatpush1.msra.mxu0 0.0
  %1788 = vmatprep.subr.mxu0 0.0
  %1789 = vmatpush1.msra.mxu0 0.0
  %1790 = vmatprep.subr.mxu0 0.0
  %1791 = vmatpush1.msra.mxu0 0.0
  %1792 = vmatprep.subr.mxu0 0.0
  %1793 = vmatpush1.msra.mxu0 0.0
  %1794 = vmatprep.subr.mxu0 0.0
  %1795 = vmatpush1.msra.mxu0 0.0
  %1796 = vmatprep.subr.mxu0 0.0
  %1797 = vmatpush1.msra.mxu0 0.0
  %1798 = vmatprep.subr.mxu0 0.0
  %1799 = vmatpush1.msra.mxu0 0.0
  %1800 = vmatprep.subr.mxu0 0.0
  %1801 = vmatpush1.msra.mxu0 0.0
  %1802 = vmatprep.subr.mxu0 0.0
  %1803 = vmatpush1.msra.mxu0 0.0
  %1804 = vmatprep.subr.mxu0 0.0
  %1805 = vmatpush1.msra.mxu0 0.0
  %1806 = vmatprep.subr.mxu0 0.0
  %1807 = vmatpush1.msra.mxu0 0.0
  %1808 = vmatprep.subr.mxu0 0.0
  %1809 = vmatpush1.msra.mxu0 0.0
  %1810 = vmatprep.subr.mxu0 0.0
  %1811 = vmatpush1.msra.mxu0 %v1707
  %1812 = vmatprep.subr.mxu0 0.0
  %1813 = vmatpush2.msra.mxu0 0.0
  %1814 = vmatprep.subr.mxu0 0.0
  %1815 = vmatpush2.msra.mxu0 0.0
  %1816 = vmatprep.subr.mxu0 0.0
  %1817 = vmatpush2.msra.mxu0 0.0
  %1818 = vmatprep.subr.mxu0 0.0
  %1819 = vmatpush2.msra.mxu0 0.0
  %1820 = vmatprep.subr.mxu0 0.0
  %1821 = vmatpush2.msra.mxu0 0.0
  %1822 = vmatprep.subr.mxu0 0.0
  %1823 = vmatpush2.msra.mxu0 0.0
  %1824 = vmatprep.subr.mxu0 0.0
  %1825 = vmatpush2.msra.mxu0 0.0
  %1826 = vmatprep.subr.mxu0 0.0
  %1827 = vmatpush2.msra.mxu0 0.0
  %1828 = vmatprep.subr.mxu0 0.0
  %1829 = vmatpush2.msra.mxu0 0.0
  %1830 = vmatprep.subr.mxu0 0.0
  %1831 = vmatpush2.msra.mxu0 0.0
  %1832 = vmatprep.subr.mxu0 0.0
  %1833 = vmatpush2.msra.mxu0 0.0
  %1834 = vmatprep.subr.mxu0 0.0
  %1835 = vmatpush2.msra.mxu0 0.0
  %1836 = vmatprep.subr.mxu0 0.0
  %1837 = vmatpush2.msra.mxu0 0.0
  %1838 = vmatprep.subr.mxu0 0.0
  %1839 = vmatpush2.msra.mxu0 0.0
  %1840 = vmatprep.subr.mxu0 0.0
  %1841 = vmatpush2.msra.mxu0 0.0
  %1842 = vmatprep.subr.mxu0 0.0
  %1843 = vmatpush2.msra.mxu0 0.0
  %1844 = vmatprep.mubr.f32.mxu0 0.0
  %1845 = vmatmul.mubr.f32.gmra.mxu0 %v1701
  %v1846 = vpop.f32.mrf.mxu0
  %v1847 = vadd.f32 %v1697, %v1846
  %v1848 = vpop.f32.mrf.mxu0
  %1849 = vdwg.mxu0
  %v1850 = vld [vmem:[%s342] sm:$0xff]
  %1851 = vrot.lane.b32.xlu0 %v1531, 126
  %v1852 = vpop.permute.xlu0 %1851
  %1853 = vrot.lane.b32.xlu0 %v1537, 126
  %v1854 = vpop.permute.xlu0 %1853
  %1855 = vrot.lane.b32.xlu0 %v1532, 126
  %v1856 = vpop.permute.xlu0 %1855
  %1857 = vrot.lane.b32.xlu0 %v1538, 126
  %v1858 = vpop.permute.xlu0 %1857
  %v1859 = vsel %vm352, %v1852, %v1854
  %v1860 = vsel %vm352, %v1854, %v1856
  %v1861 = vsel %vm352, %v1856, %v1858
  %v1863 = vsel %vm40, %v1850, 0
  %v1865 = vsel %vm44, %v1859, 0
  %v1867 = vsel %vm44, %v1860, 0
  %v1869 = vsel %vm44, %v1861, 0
  %1871 = vmatprep.subr.mxu0 0.0
  %1872 = vmatpush1.msra.mxu0 0.0
  %1873 = vmatprep.subr.mxu0 0.0
  %1874 = vmatpush1.msra.mxu0 0.0
  %1875 = vmatprep.subr.mxu0 0.0
  %1876 = vmatpush1.msra.mxu0 0.0
  %1877 = vmatprep.subr.mxu0 0.0
  %1878 = vmatpush1.msra.mxu0 0.0
  %1879 = vmatprep.subr.mxu0 0.0
  %1880 = vmatpush1.msra.mxu0 0.0
  %1881 = vmatprep.subr.mxu0 0.0
  %1882 = vmatpush1.msra.mxu0 0.0
  %1883 = vmatprep.subr.mxu0 0.0
  %1884 = vmatpush1.msra.mxu0 0.0
  %1885 = vmatprep.subr.mxu0 0.0
  %1886 = vmatpush1.msra.mxu0 0.0
  %1887 = vmatprep.subr.mxu0 0.0
  %1888 = vmatpush1.msra.mxu0 0.0
  %1889 = vmatprep.subr.mxu0 0.0
  %1890 = vmatpush1.msra.mxu0 0.0
  %1891 = vmatprep.subr.mxu0 0.0
  %1892 = vmatpush1.msra.mxu0 0.0
  %1893 = vmatprep.subr.mxu0 0.0
  %1894 = vmatpush1.msra.mxu0 0.0
  %1895 = vmatprep.subr.mxu0 0.0
  %1896 = vmatpush1.msra.mxu0 0.0
  %1897 = vmatprep.subr.mxu0 0.0
  %1898 = vmatpush1.msra.mxu0 0.0
  %1899 = vmatprep.subr.mxu0 0.0
  %1900 = vmatpush1.msra.mxu0 0.0
  %1901 = vmatprep.subr.mxu0 %v1867
  %1902 = vmatpush1.msra.mxu0 %v1865
  %1903 = vmatprep.subr.mxu0 0.0
  %1904 = vmatpush2.msra.mxu0 0.0
  %1905 = vmatprep.subr.mxu0 0.0
  %1906 = vmatpush2.msra.mxu0 0.0
  %1907 = vmatprep.subr.mxu0 0.0
  %1908 = vmatpush2.msra.mxu0 0.0
  %1909 = vmatprep.subr.mxu0 0.0
  %1910 = vmatpush2.msra.mxu0 0.0
  %1911 = vmatprep.subr.mxu0 0.0
  %1912 = vmatpush2.msra.mxu0 0.0
  %1913 = vmatprep.subr.mxu0 0.0
  %1914 = vmatpush2.msra.mxu0 0.0
  %1915 = vmatprep.subr.mxu0 0.0
  %1916 = vmatpush2.msra.mxu0 0.0
  %1917 = vmatprep.subr.mxu0 0.0
  %1918 = vmatpush2.msra.mxu0 0.0
  %1919 = vmatprep.subr.mxu0 0.0
  %1920 = vmatpush2.msra.mxu0 0.0
  %1921 = vmatprep.subr.mxu0 0.0
  %1922 = vmatpush2.msra.mxu0 0.0
  %1923 = vmatprep.subr.mxu0 0.0
  %1924 = vmatpush2.msra.mxu0 0.0
  %1925 = vmatprep.subr.mxu0 0.0
  %1926 = vmatpush2.msra.mxu0 0.0
  %1927 = vmatprep.subr.mxu0 0.0
  %1928 = vmatpush2.msra.mxu0 0.0
  %1929 = vmatprep.subr.mxu0 0.0
  %1930 = vmatpush2.msra.mxu0 0.0
  %1931 = vmatprep.subr.mxu0 0.0
  %1932 = vmatpush2.msra.mxu0 0.0
  %1933 = vmatprep.subr.mxu0 0.0
  %1934 = vmatpush2.msra.mxu0 0.0
  %1935 = vmatprep.mubr.f32.mxu0 0.0
  %1936 = vmatmul.mubr.f32.gmra.mxu0 %v1863
  %v1937 = vpop.f32.mrf.mxu0
  %v1938 = vadd.f32 0.0, %v1937
  %v1939 = vpop.f32.mrf.mxu0
  %v1940 = vadd.f32 0.0, %v1939
  %1941 = vdwg.mxu0
  %1942 = vmatprep.subr.mxu0 0.0
  %1943 = vmatpush1.msra.mxu0 0.0
  %1944 = vmatprep.subr.mxu0 0.0
  %1945 = vmatpush1.msra.mxu0 0.0
  %1946 = vmatprep.subr.mxu0 0.0
  %1947 = vmatpush1.msra.mxu0 0.0
  %1948 = vmatprep.subr.mxu0 0.0
  %1949 = vmatpush1.msra.mxu0 0.0
  %1950 = vmatprep.subr.mxu0 0.0
  %1951 = vmatpush1.msra.mxu0 0.0
  %1952 = vmatprep.subr.mxu0 0.0
  %1953 = vmatpush1.msra.mxu0 0.0
  %1954 = vmatprep.subr.mxu0 0.0
  %1955 = vmatpush1.msra.mxu0 0.0
  %1956 = vmatprep.subr.mxu0 0.0
  %1957 = vmatpush1.msra.mxu0 0.0
  %1958 = vmatprep.subr.mxu0 0.0
  %1959 = vmatpush1.msra.mxu0 0.0
  %1960 = vmatprep.subr.mxu0 0.0
  %1961 = vmatpush1.msra.mxu0 0.0
  %1962 = vmatprep.subr.mxu0 0.0
  %1963 = vmatpush1.msra.mxu0 0.0
  %1964 = vmatprep.subr.mxu0 0.0
  %1965 = vmatpush1.msra.mxu0 0.0
  %1966 = vmatprep.subr.mxu0 0.0
  %1967 = vmatpush1.msra.mxu0 0.0
  %1968 = vmatprep.subr.mxu0 0.0
  %1969 = vmatpush1.msra.mxu0 0.0
  %1970 = vmatprep.subr.mxu0 0.0
  %1971 = vmatpush1.msra.mxu0 0.0
  %1972 = vmatprep.subr.mxu0 0.0
  %1973 = vmatpush1.msra.mxu0 %v1869
  %1974 = vmatprep.subr.mxu0 0.0
  %1975 = vmatpush2.msra.mxu0 0.0
  %1976 = vmatprep.subr.mxu0 0.0
  %1977 = vmatpush2.msra.mxu0 0.0
  %1978 = vmatprep.subr.mxu0 0.0
  %1979 = vmatpush2.msra.mxu0 0.0
  %1980 = vmatprep.subr.mxu0 0.0
  %1981 = vmatpush2.msra.mxu0 0.0
  %1982 = vmatprep.subr.mxu0 0.0
  %1983 = vmatpush2.msra.mxu0 0.0
  %1984 = vmatprep.subr.mxu0 0.0
  %1985 = vmatpush2.msra.mxu0 0.0
  %1986 = vmatprep.subr.mxu0 0.0
  %1987 = vmatpush2.msra.mxu0 0.0
  %1988 = vmatprep.subr.mxu0 0.0
  %1989 = vmatpush2.msra.mxu0 0.0
  %1990 = vmatprep.subr.mxu0 0.0
  %1991 = vmatpush2.msra.mxu0 0.0
  %1992 = vmatprep.subr.mxu0 0.0
  %1993 = vmatpush2.msra.mxu0 0.0
  %1994 = vmatprep.subr.mxu0 0.0
  %1995 = vmatpush2.msra.mxu0 0.0
  %1996 = vmatprep.subr.mxu0 0.0
  %1997 = vmatpush2.msra.mxu0 0.0
  %1998 = vmatprep.subr.mxu0 0.0
  %1999 = vmatpush2.msra.mxu0 0.0
  %2000 = vmatprep.subr.mxu0 0.0
  %2001 = vmatpush2.msra.mxu0 0.0
  %2002 = vmatprep.subr.mxu0 0.0
  %2003 = vmatpush2.msra.mxu0 0.0
  %2004 = vmatprep.subr.mxu0 0.0
  %2005 = vmatpush2.msra.mxu0 0.0
  %2006 = vmatprep.mubr.f32.mxu0 0.0
  %2007 = vmatmul.mubr.f32.gmra.mxu0 %v1863
  %v2008 = vpop.f32.mrf.mxu0
  %v2009 = vadd.f32 0.0, %v2008
  %v2010 = vpop.f32.mrf.mxu0
  %2011 = vdwg.mxu0
  %v2012 = vadd.f32 %v1776, %v1938
  %v2013 = vadd.f32 %v1778, %v1940
  %v2014 = vadd.f32 %v1847, %v2009
  %v2015 = vld [vmem:[%s509] sm:$0xff]
  %2016 = vrot.lane.b32.xlu0 %v1531, 110
  %v2017 = vpop.permute.xlu0 %2016
  %2018 = vrot.lane.b32.xlu0 %v1537, 110
  %v2019 = vpop.permute.xlu0 %2018
  %2020 = vrot.lane.b32.xlu0 %v1532, 110
  %v2021 = vpop.permute.xlu0 %2020
  %2022 = vrot.lane.b32.xlu0 %v1538, 110
  %v2023 = vpop.permute.xlu0 %2022
  %v2024 = vsel %vm519, %v2017, %v2019
  %v2025 = vsel %vm519, %v2019, %v2021
  %v2026 = vsel %vm519, %v2021, %v2023
  %v2028 = vsel %vm40, %v2015, 0
  %v2030 = vsel %vm44, %v2024, 0
  %v2032 = vsel %vm44, %v2025, 0
  %v2034 = vsel %vm44, %v2026, 0
  %2036 = vmatprep.subr.mxu0 0.0
  %2037 = vmatpush1.msra.mxu0 0.0
  %2038 = vmatprep.subr.mxu0 0.0
  %2039 = vmatpush1.msra.mxu0 0.0
  %2040 = vmatprep.subr.mxu0 0.0
  %2041 = vmatpush1.msra.mxu0 0.0
  %2042 = vmatprep.subr.mxu0 0.0
  %2043 = vmatpush1.msra.mxu0 0.0
  %2044 = vmatprep.subr.mxu0 0.0
  %2045 = vmatpush1.msra.mxu0 0.0
  %2046 = vmatprep.subr.mxu0 0.0
  %2047 = vmatpush1.msra.mxu0 0.0
  %2048 = vmatprep.subr.mxu0 0.0
  %2049 = vmatpush1.msra.mxu0 0.0
  %2050 = vmatprep.subr.mxu0 0.0
  %2051 = vmatpush1.msra.mxu0 0.0
  %2052 = vmatprep.subr.mxu0 0.0
  %2053 = vmatpush1.msra.mxu0 0.0
  %2054 = vmatprep.subr.mxu0 0.0
  %2055 = vmatpush1.msra.mxu0 0.0
  %2056 = vmatprep.subr.mxu0 0.0
  %2057 = vmatpush1.msra.mxu0 0.0
  %2058 = vmatprep.subr.mxu0 0.0
  %2059 = vmatpush1.msra.mxu0 0.0
  %2060 = vmatprep.subr.mxu0 0.0
  %2061 = vmatpush1.msra.mxu0 0.0
  %2062 = vmatprep.subr.mxu0 0.0
  %2063 = vmatpush1.msra.mxu0 0.0
  %2064 = vmatprep.subr.mxu0 0.0
  %2065 = vmatpush1.msra.mxu0 0.0
  %2066 = vmatprep.subr.mxu0 %v2032
  %2067 = vmatpush1.msra.mxu0 %v2030
  %2068 = vmatprep.subr.mxu0 0.0
  %2069 = vmatpush2.msra.mxu0 0.0
  %2070 = vmatprep.subr.mxu0 0.0
  %2071 = vmatpush2.msra.mxu0 0.0
  %2072 = vmatprep.subr.mxu0 0.0
  %2073 = vmatpush2.msra.mxu0 0.0
  %2074 = vmatprep.subr.mxu0 0.0
  %2075 = vmatpush2.msra.mxu0 0.0
  %2076 = vmatprep.subr.mxu0 0.0
  %2077 = vmatpush2.msra.mxu0 0.0
  %2078 = vmatprep.subr.mxu0 0.0
  %2079 = vmatpush2.msra.mxu0 0.0
  %2080 = vmatprep.subr.mxu0 0.0
  %2081 = vmatpush2.msra.mxu0 0.0
  %2082 = vmatprep.subr.mxu0 0.0
  %2083 = vmatpush2.msra.mxu0 0.0
  %2084 = vmatprep.subr.mxu0 0.0
  %2085 = vmatpush2.msra.mxu0 0.0
  %2086 = vmatprep.subr.mxu0 0.0
  %2087 = vmatpush2.msra.mxu0 0.0
  %2088 = vmatprep.subr.mxu0 0.0
  %2089 = vmatpush2.msra.mxu0 0.0
  %2090 = vmatprep.subr.mxu0 0.0
  %2091 = vmatpush2.msra.mxu0 0.0
  %2092 = vmatprep.subr.mxu0 0.0
  %2093 = vmatpush2.msra.mxu0 0.0
  %2094 = vmatprep.subr.mxu0 0.0
  %2095 = vmatpush2.msra.mxu0 0.0
  %2096 = vmatprep.subr.mxu0 0.0
  %2097 = vmatpush2.msra.mxu0 0.0
  %2098 = vmatprep.subr.mxu0 0.0
  %2099 = vmatpush2.msra.mxu0 0.0
  %2100 = vmatprep.mubr.f32.mxu0 0.0
  %2101 = vmatmul.mubr.f32.gmra.mxu0 %v2028
  %v2102 = vpop.f32.mrf.mxu0
  %v2103 = vadd.f32 0.0, %v2102
  %v2104 = vpop.f32.mrf.mxu0
  %v2105 = vadd.f32 0.0, %v2104
  %2106 = vdwg.mxu0
  %2107 = vmatprep.subr.mxu0 0.0
  %2108 = vmatpush1.msra.mxu0 0.0
  %2109 = vmatprep.subr.mxu0 0.0
  %2110 = vmatpush1.msra.mxu0 0.0
  %2111 = vmatprep.subr.mxu0 0.0
  %2112 = vmatpush1.msra.mxu0 0.0
  %2113 = vmatprep.subr.mxu0 0.0
  %2114 = vmatpush1.msra.mxu0 0.0
  %2115 = vmatprep.subr.mxu0 0.0
  %2116 = vmatpush1.msra.mxu0 0.0
  %2117 = vmatprep.subr.mxu0 0.0
  %2118 = vmatpush1.msra.mxu0 0.0
  %2119 = vmatprep.subr.mxu0 0.0
  %2120 = vmatpush1.msra.mxu0 0.0
  %2121 = vmatprep.subr.mxu0 0.0
  %2122 = vmatpush1.msra.mxu0 0.0
  %2123 = vmatprep.subr.mxu0 0.0
  %2124 = vmatpush1.msra.mxu0 0.0
  %2125 = vmatprep.subr.mxu0 0.0
  %2126 = vmatpush1.msra.mxu0 0.0
  %2127 = vmatprep.subr.mxu0 0.0
  %2128 = vmatpush1.msra.mxu0 0.0
  %2129 = vmatprep.subr.mxu0 0.0
  %2130 = vmatpush1.msra.mxu0 0.0
  %2131 = vmatprep.subr.mxu0 0.0
  %2132 = vmatpush1.msra.mxu0 0.0
  %2133 = vmatprep.subr.mxu0 0.0
  %2134 = vmatpush1.msra.mxu0 0.0
  %2135 = vmatprep.subr.mxu0 0.0
  %2136 = vmatpush1.msra.mxu0 0.0
  %2137 = vmatprep.subr.mxu0 0.0
  %2138 = vmatpush1.msra.mxu0 %v2034
  %2139 = vmatprep.subr.mxu0 0.0
  %2140 = vmatpush2.msra.mxu0 0.0
  %2141 = vmatprep.subr.mxu0 0.0
  %2142 = vmatpush2.msra.mxu0 0.0
  %2143 = vmatprep.subr.mxu0 0.0
  %2144 = vmatpush2.msra.mxu0 0.0
  %2145 = vmatprep.subr.mxu0 0.0
  %2146 = vmatpush2.msra.mxu0 0.0
  %2147 = vmatprep.subr.mxu0 0.0
  %2148 = vmatpush2.msra.mxu0 0.0
  %2149 = vmatprep.subr.mxu0 0.0
  %2150 = vmatpush2.msra.mxu0 0.0
  %2151 = vmatprep.subr.mxu0 0.0
  %2152 = vmatpush2.msra.mxu0 0.0
  %2153 = vmatprep.subr.mxu0 0.0
  %2154 = vmatpush2.msra.mxu0 0.0
  %2155 = vmatprep.subr.mxu0 0.0
  %2156 = vmatpush2.msra.mxu0 0.0
  %2157 = vmatprep.subr.mxu0 0.0
  %2158 = vmatpush2.msra.mxu0 0.0
  %2159 = vmatprep.subr.mxu0 0.0
  %2160 = vmatpush2.msra.mxu0 0.0
  %2161 = vmatprep.subr.mxu0 0.0
  %2162 = vmatpush2.msra.mxu0 0.0
  %2163 = vmatprep.subr.mxu0 0.0
  %2164 = vmatpush2.msra.mxu0 0.0
  %2165 = vmatprep.subr.mxu0 0.0
  %2166 = vmatpush2.msra.mxu0 0.0
  %2167 = vmatprep.subr.mxu0 0.0
  %2168 = vmatpush2.msra.mxu0 0.0
  %2169 = vmatprep.subr.mxu0 0.0
  %2170 = vmatpush2.msra.mxu0 0.0
  %2171 = vmatprep.mubr.f32.mxu0 0.0
  %2172 = vmatmul.mubr.f32.gmra.mxu0 %v2028
  %v2173 = vpop.f32.mrf.mxu0
  %v2174 = vadd.f32 0.0, %v2173
  %v2175 = vpop.f32.mrf.mxu0
  %2176 = vdwg.mxu0
  %v2177 = vadd.f32 %v2012, %v2103
  %v2178 = vadd.f32 %v2013, %v2105
  %v2179 = vadd.f32 %v2014, %v2174
  %v2180 = vld [vmem:[%s676] sm:$0xff]
  %2181 = vrot.lane.b32.xlu0 %v1531, 109
  %v2182 = vpop.permute.xlu0 %2181
  %2183 = vrot.lane.b32.xlu0 %v1537, 109
  %v2184 = vpop.permute.xlu0 %2183
  %2185 = vrot.lane.b32.xlu0 %v1532, 109
  %v2186 = vpop.permute.xlu0 %2185
  %2187 = vrot.lane.b32.xlu0 %v1538, 109
  %v2188 = vpop.permute.xlu0 %2187
  %v2189 = vsel %vm686, %v2182, %v2184
  %v2190 = vsel %vm686, %v2184, %v2186
  %v2191 = vsel %vm686, %v2186, %v2188
  %v2193 = vsel %vm40, %v2180, 0
  %v2195 = vsel %vm44, %v2189, 0
  %v2197 = vsel %vm44, %v2190, 0
  %v2199 = vsel %vm44, %v2191, 0
  %2201 = vmatprep.subr.mxu0 0.0
  %2202 = vmatpush1.msra.mxu0 0.0
  %2203 = vmatprep.subr.mxu0 0.0
  %2204 = vmatpush1.msra.mxu0 0.0
  %2205 = vmatprep.subr.mxu0 0.0
  %2206 = vmatpush1.msra.mxu0 0.0
  %2207 = vmatprep.subr.mxu0 0.0
  %2208 = vmatpush1.msra.mxu0 0.0
  %2209 = vmatprep.subr.mxu0 0.0
  %2210 = vmatpush1.msra.mxu0 0.0
  %2211 = vmatprep.subr.mxu0 0.0
  %2212 = vmatpush1.msra.mxu0 0.0
  %2213 = vmatprep.subr.mxu0 0.0
  %2214 = vmatpush1.msra.mxu0 0.0
  %2215 = vmatprep.subr.mxu0 0.0
  %2216 = vmatpush1.msra.mxu0 0.0
  %2217 = vmatprep.subr.mxu0 0.0
  %2218 = vmatpush1.msra.mxu0 0.0
  %2219 = vmatprep.subr.mxu0 0.0
  %2220 = vmatpush1.msra.mxu0 0.0
  %2221 = vmatprep.subr.mxu0 0.0
  %2222 = vmatpush1.msra.mxu0 0.0
  %2223 = vmatprep.subr.mxu0 0.0
  %2224 = vmatpush1.msra.mxu0 0.0
  %2225 = vmatprep.subr.mxu0 0.0
  %2226 = vmatpush1.msra.mxu0 0.0
  %2227 = vmatprep.subr.mxu0 0.0
  %2228 = vmatpush1.msra.mxu0 0.0
  %2229 = vmatprep.subr.mxu0 0.0
  %2230 = vmatpush1.msra.mxu0 0.0
  %2231 = vmatprep.subr.mxu0 %v2197
  %2232 = vmatpush1.msra.mxu0 %v2195
  %2233 = vmatprep.subr.mxu0 0.0
  %2234 = vmatpush2.msra.mxu0 0.0
  %2235 = vmatprep.subr.mxu0 0.0
  %2236 = vmatpush2.msra.mxu0 0.0
  %2237 = vmatprep.subr.mxu0 0.0
  %2238 = vmatpush2.msra.mxu0 0.0
  %2239 = vmatprep.subr.mxu0 0.0
  %2240 = vmatpush2.msra.mxu0 0.0
  %2241 = vmatprep.subr.mxu0 0.0
  %2242 = vmatpush2.msra.mxu0 0.0
  %2243 = vmatprep.subr.mxu0 0.0
  %2244 = vmatpush2.msra.mxu0 0.0
  %2245 = vmatprep.subr.mxu0 0.0
  %2246 = vmatpush2.msra.mxu0 0.0
  %2247 = vmatprep.subr.mxu0 0.0
  %2248 = vmatpush2.msra.mxu0 0.0
  %2249 = vmatprep.subr.mxu0 0.0
  %2250 = vmatpush2.msra.mxu0 0.0
  %2251 = vmatprep.subr.mxu0 0.0
  %2252 = vmatpush2.msra.mxu0 0.0
  %2253 = vmatprep.subr.mxu0 0.0
  %2254 = vmatpush2.msra.mxu0 0.0
  %2255 = vmatprep.subr.mxu0 0.0
  %2256 = vmatpush2.msra.mxu0 0.0
  %2257 = vmatprep.subr.mxu0 0.0
  %2258 = vmatpush2.msra.mxu0 0.0
  %2259 = vmatprep.subr.mxu0 0.0
  %2260 = vmatpush2.msra.mxu0 0.0
  %2261 = vmatprep.subr.mxu0 0.0
  %2262 = vmatpush2.msra.mxu0 0.0
  %2263 = vmatprep.subr.mxu0 0.0
  %2264 = vmatpush2.msra.mxu0 0.0
  %2265 = vmatprep.mubr.f32.mxu0 0.0
  %2266 = vmatmul.mubr.f32.gmra.mxu0 %v2193
  %v2267 = vpop.f32.mrf.mxu0
  %v2268 = vadd.f32 0.0, %v2267
  %v2269 = vpop.f32.mrf.mxu0
  %v2270 = vadd.f32 0.0, %v2269
  %2271 = vdwg.mxu0
  %2272 = vmatprep.subr.mxu0 0.0
  %2273 = vmatpush1.msra.mxu0 0.0
  %2274 = vmatprep.subr.mxu0 0.0
  %2275 = vmatpush1.msra.mxu0 0.0
  %2276 = vmatprep.subr.mxu0 0.0
  %2277 = vmatpush1.msra.mxu0 0.0
  %2278 = vmatprep.subr.mxu0 0.0
  %2279 = vmatpush1.msra.mxu0 0.0
  %2280 = vmatprep.subr.mxu0 0.0
  %2281 = vmatpush1.msra.mxu0 0.0
  %2282 = vmatprep.subr.mxu0 0.0
  %2283 = vmatpush1.msra.mxu0 0.0
  %2284 = vmatprep.subr.mxu0 0.0
  %2285 = vmatpush1.msra.mxu0 0.0
  %2286 = vmatprep.subr.mxu0 0.0
  %2287 = vmatpush1.msra.mxu0 0.0
  %2288 = vmatprep.subr.mxu0 0.0
  %2289 = vmatpush1.msra.mxu0 0.0
  %2290 = vmatprep.subr.mxu0 0.0
  %2291 = vmatpush1.msra.mxu0 0.0
  %2292 = vmatprep.subr.mxu0 0.0
  %2293 = vmatpush1.msra.mxu0 0.0
  %2294 = vmatprep.subr.mxu0 0.0
  %2295 = vmatpush1.msra.mxu0 0.0
  %2296 = vmatprep.subr.mxu0 0.0
  %2297 = vmatpush1.msra.mxu0 0.0
  %2298 = vmatprep.subr.mxu0 0.0
  %2299 = vmatpush1.msra.mxu0 0.0
  %2300 = vmatprep.subr.mxu0 0.0
  %2301 = vmatpush1.msra.mxu0 0.0
  %2302 = vmatprep.subr.mxu0 0.0
  %2303 = vmatpush1.msra.mxu0 %v2199
  %2304 = vmatprep.subr.mxu0 0.0
  %2305 = vmatpush2.msra.mxu0 0.0
  %2306 = vmatprep.subr.mxu0 0.0
  %2307 = vmatpush2.msra.mxu0 0.0
  %2308 = vmatprep.subr.mxu0 0.0
  %2309 = vmatpush2.msra.mxu0 0.0
  %2310 = vmatprep.subr.mxu0 0.0
  %2311 = vmatpush2.msra.mxu0 0.0
  %2312 = vmatprep.subr.mxu0 0.0
  %2313 = vmatpush2.msra.mxu0 0.0
  %2314 = vmatprep.subr.mxu0 0.0
  %2315 = vmatpush2.msra.mxu0 0.0
  %2316 = vmatprep.subr.mxu0 0.0
  %2317 = vmatpush2.msra.mxu0 0.0
  %2318 = vmatprep.subr.mxu0 0.0
  %2319 = vmatpush2.msra.mxu0 0.0
  %2320 = vmatprep.subr.mxu0 0.0
  %2321 = vmatpush2.msra.mxu0 0.0
  %2322 = vmatprep.subr.mxu0 0.0
  %2323 = vmatpush2.msra.mxu0 0.0
  %2324 = vmatprep.subr.mxu0 0.0
  %2325 = vmatpush2.msra.mxu0 0.0
  %2326 = vmatprep.subr.mxu0 0.0
  %2327 = vmatpush2.msra.mxu0 0.0
  %2328 = vmatprep.subr.mxu0 0.0
  %2329 = vmatpush2.msra.mxu0 0.0
  %2330 = vmatprep.subr.mxu0 0.0
  %2331 = vmatpush2.msra.mxu0 0.0
  %2332 = vmatprep.subr.mxu0 0.0
  %2333 = vmatpush2.msra.mxu0 0.0
  %2334 = vmatprep.subr.mxu0 0.0
  %2335 = vmatpush2.msra.mxu0 0.0
  %2336 = vmatprep.mubr.f32.mxu0 0.0
  %2337 = vmatmul.mubr.f32.gmra.mxu0 %v2193
  %v2338 = vpop.f32.mrf.mxu0
  %v2339 = vadd.f32 0.0, %v2338
  %v2340 = vpop.f32.mrf.mxu0
  %2341 = vdwg.mxu0
  %v2342 = vadd.f32 %v2177, %v2268
  %v2343 = vadd.f32 %v2178, %v2270
  %v2344 = vadd.f32 %v2179, %v2339
  %v2345 = vld [vmem:[%s843] sm:$0xff]
  %2346 = vrot.lane.b32.xlu0 %v1531, 108
  %v2347 = vpop.permute.xlu0 %2346
  %2348 = vrot.lane.b32.xlu0 %v1537, 108
  %v2349 = vpop.permute.xlu0 %2348
  %2350 = vrot.lane.b32.xlu0 %v1532, 108
  %v2351 = vpop.permute.xlu0 %2350
  %2352 = vrot.lane.b32.xlu0 %v1538, 108
  %v2353 = vpop.permute.xlu0 %2352
  %v2354 = vsel %vm853, %v2347, %v2349
  %v2355 = vsel %vm853, %v2349, %v2351
  %v2356 = vsel %vm853, %v2351, %v2353
  %v2358 = vsel %vm40, %v2345, 0
  %v2360 = vsel %vm44, %v2354, 0
  %v2362 = vsel %vm44, %v2355, 0
  %v2364 = vsel %vm44, %v2356, 0
  %2366 = vmatprep.subr.mxu0 0.0
  %2367 = vmatpush1.msra.mxu0 0.0
  %2368 = vmatprep.subr.mxu0 0.0
  %2369 = vmatpush1.msra.mxu0 0.0
  %2370 = vmatprep.subr.mxu0 0.0
  %2371 = vmatpush1.msra.mxu0 0.0
  %2372 = vmatprep.subr.mxu0 0.0
  %2373 = vmatpush1.msra.mxu0 0.0
  %2374 = vmatprep.subr.mxu0 0.0
  %2375 = vmatpush1.msra.mxu0 0.0
  %2376 = vmatprep.subr.mxu0 0.0
  %2377 = vmatpush1.msra.mxu0 0.0
  %2378 = vmatprep.subr.mxu0 0.0
  %2379 = vmatpush1.msra.mxu0 0.0
  %2380 = vmatprep.subr.mxu0 0.0
  %2381 = vmatpush1.msra.mxu0 0.0
  %2382 = vmatprep.subr.mxu0 0.0
  %2383 = vmatpush1.msra.mxu0 0.0
  %2384 = vmatprep.subr.mxu0 0.0
  %2385 = vmatpush1.msra.mxu0 0.0
  %2386 = vmatprep.subr.mxu0 0.0
  %2387 = vmatpush1.msra.mxu0 0.0
  %2388 = vmatprep.subr.mxu0 0.0
  %2389 = vmatpush1.msra.mxu0 0.0
  %2390 = vmatprep.subr.mxu0 0.0
  %2391 = vmatpush1.msra.mxu0 0.0
  %2392 = vmatprep.subr.mxu0 0.0
  %2393 = vmatpush1.msra.mxu0 0.0
  %2394 = vmatprep.subr.mxu0 0.0
  %2395 = vmatpush1.msra.mxu0 0.0
  %2396 = vmatprep.subr.mxu0 %v2362
  %2397 = vmatpush1.msra.mxu0 %v2360
  %2398 = vmatprep.subr.mxu0 0.0
  %2399 = vmatpush2.msra.mxu0 0.0
  %2400 = vmatprep.subr.mxu0 0.0
  %2401 = vmatpush2.msra.mxu0 0.0
  %2402 = vmatprep.subr.mxu0 0.0
  %2403 = vmatpush2.msra.mxu0 0.0
  %2404 = vmatprep.subr.mxu0 0.0
  %2405 = vmatpush2.msra.mxu0 0.0
  %2406 = vmatprep.subr.mxu0 0.0
  %2407 = vmatpush2.msra.mxu0 0.0
  %2408 = vmatprep.subr.mxu0 0.0
  %2409 = vmatpush2.msra.mxu0 0.0
  %2410 = vmatprep.subr.mxu0 0.0
  %2411 = vmatpush2.msra.mxu0 0.0
  %2412 = vmatprep.subr.mxu0 0.0
  %2413 = vmatpush2.msra.mxu0 0.0
  %2414 = vmatprep.subr.mxu0 0.0
  %2415 = vmatpush2.msra.mxu0 0.0
  %2416 = vmatprep.subr.mxu0 0.0
  %2417 = vmatpush2.msra.mxu0 0.0
  %2418 = vmatprep.subr.mxu0 0.0
  %2419 = vmatpush2.msra.mxu0 0.0
  %2420 = vmatprep.subr.mxu0 0.0
  %2421 = vmatpush2.msra.mxu0 0.0
  %2422 = vmatprep.subr.mxu0 0.0
  %2423 = vmatpush2.msra.mxu0 0.0
  %2424 = vmatprep.subr.mxu0 0.0
  %2425 = vmatpush2.msra.mxu0 0.0
  %2426 = vmatprep.subr.mxu0 0.0
  %2427 = vmatpush2.msra.mxu0 0.0
  %2428 = vmatprep.subr.mxu0 0.0
  %2429 = vmatpush2.msra.mxu0 0.0
  %2430 = vmatprep.mubr.f32.mxu0 0.0
  %2431 = vmatmul.mubr.f32.gmra.mxu0 %v2358
  %v2432 = vpop.f32.mrf.mxu0
  %v2433 = vadd.f32 0.0, %v2432
  %v2434 = vpop.f32.mrf.mxu0
  %v2435 = vadd.f32 0.0, %v2434
  %2436 = vdwg.mxu0
  %2437 = vmatprep.subr.mxu0 0.0
  %2438 = vmatpush1.msra.mxu0 0.0
  %2439 = vmatprep.subr.mxu0 0.0
  %2440 = vmatpush1.msra.mxu0 0.0
  %2441 = vmatprep.subr.mxu0 0.0
  %2442 = vmatpush1.msra.mxu0 0.0
  %2443 = vmatprep.subr.mxu0 0.0
  %2444 = vmatpush1.msra.mxu0 0.0
  %2445 = vmatprep.subr.mxu0 0.0
  %2446 = vmatpush1.msra.mxu0 0.0
  %2447 = vmatprep.subr.mxu0 0.0
  %2448 = vmatpush1.msra.mxu0 0.0
  %2449 = vmatprep.subr.mxu0 0.0
  %2450 = vmatpush1.msra.mxu0 0.0
  %2451 = vmatprep.subr.mxu0 0.0
  %2452 = vmatpush1.msra.mxu0 0.0
  %2453 = vmatprep.subr.mxu0 0.0
  %2454 = vmatpush1.msra.mxu0 0.0
  %2455 = vmatprep.subr.mxu0 0.0
  %2456 = vmatpush1.msra.mxu0 0.0
  %2457 = vmatprep.subr.mxu0 0.0
  %2458 = vmatpush1.msra.mxu0 0.0
  %2459 = vmatprep.subr.mxu0 0.0
  %2460 = vmatpush1.msra.mxu0 0.0
  %2461 = vmatprep.subr.mxu0 0.0
  %2462 = vmatpush1.msra.mxu0 0.0
  %2463 = vmatprep.subr.mxu0 0.0
  %2464 = vmatpush1.msra.mxu0 0.0
  %2465 = vmatprep.subr.mxu0 0.0
  %2466 = vmatpush1.msra.mxu0 0.0
  %2467 = vmatprep.subr.mxu0 0.0
  %2468 = vmatpush1.msra.mxu0 %v2364
  %2469 = vmatprep.subr.mxu0 0.0
  %2470 = vmatpush2.msra.mxu0 0.0
  %2471 = vmatprep.subr.mxu0 0.0
  %2472 = vmatpush2.msra.mxu0 0.0
  %2473 = vmatprep.subr.mxu0 0.0
  %2474 = vmatpush2.msra.mxu0 0.0
  %2475 = vmatprep.subr.mxu0 0.0
  %2476 = vmatpush2.msra.mxu0 0.0
  %2477 = vmatprep.subr.mxu0 0.0
  %2478 = vmatpush2.msra.mxu0 0.0
  %2479 = vmatprep.subr.mxu0 0.0
  %2480 = vmatpush2.msra.mxu0 0.0
  %2481 = vmatprep.subr.mxu0 0.0
  %2482 = vmatpush2.msra.mxu0 0.0
  %2483 = vmatprep.subr.mxu0 0.0
  %2484 = vmatpush2.msra.mxu0 0.0
  %2485 = vmatprep.subr.mxu0 0.0
  %2486 = vmatpush2.msra.mxu0 0.0
  %2487 = vmatprep.subr.mxu0 0.0
  %2488 = vmatpush2.msra.mxu0 0.0
  %2489 = vmatprep.subr.mxu0 0.0
  %2490 = vmatpush2.msra.mxu0 0.0
  %2491 = vmatprep.subr.mxu0 0.0
  %2492 = vmatpush2.msra.mxu0 0.0
  %2493 = vmatprep.subr.mxu0 0.0
  %2494 = vmatpush2.msra.mxu0 0.0
  %2495 = vmatprep.subr.mxu0 0.0
  %2496 = vmatpush2.msra.mxu0 0.0
  %2497 = vmatprep.subr.mxu0 0.0
  %2498 = vmatpush2.msra.mxu0 0.0
  %2499 = vmatprep.subr.mxu0 0.0
  %2500 = vmatpush2.msra.mxu0 0.0
  %2501 = vmatprep.mubr.f32.mxu0 0.0
  %2502 = vmatmul.mubr.f32.gmra.mxu0 %v2358
  %v2503 = vpop.f32.mrf.mxu0
  %v2504 = vadd.f32 0.0, %v2503
  %v2505 = vpop.f32.mrf.mxu0
  %2506 = vdwg.mxu0
  %v2507 = vadd.f32 %v2342, %v2433
  %v2508 = vadd.f32 %v2343, %v2435
  %v2509 = vadd.f32 %v2344, %v2504
  %v2510 = vld [vmem:[%s1010] sm:$0xff]
  %2511 = vrot.lane.b32.xlu0 %v1531, 92
  %v2512 = vpop.permute.xlu0 %2511
  %2513 = vrot.lane.b32.xlu0 %v1537, 92
  %v2514 = vpop.permute.xlu0 %2513
  %2515 = vrot.lane.b32.xlu0 %v1532, 92
  %v2516 = vpop.permute.xlu0 %2515
  %2517 = vrot.lane.b32.xlu0 %v1538, 92
  %v2518 = vpop.permute.xlu0 %2517
  %v2519 = vsel %vm1020, %v2512, %v2514
  %v2520 = vsel %vm1020, %v2514, %v2516
  %v2521 = vsel %vm1020, %v2516, %v2518
  %v2523 = vsel %vm40, %v2510, 0
  %v2525 = vsel %vm44, %v2519, 0
  %v2527 = vsel %vm44, %v2520, 0
  %v2529 = vsel %vm44, %v2521, 0
  %2531 = vmatprep.subr.mxu0 0.0
  %2532 = vmatpush1.msra.mxu0 0.0
  %2533 = vmatprep.subr.mxu0 0.0
  %2534 = vmatpush1.msra.mxu0 0.0
  %2535 = vmatprep.subr.mxu0 0.0
  %2536 = vmatpush1.msra.mxu0 0.0
  %2537 = vmatprep.subr.mxu0 0.0
  %2538 = vmatpush1.msra.mxu0 0.0
  %2539 = vmatprep.subr.mxu0 0.0
  %2540 = vmatpush1.msra.mxu0 0.0
  %2541 = vmatprep.subr.mxu0 0.0
  %2542 = vmatpush1.msra.mxu0 0.0
  %2543 = vmatprep.subr.mxu0 0.0
  %2544 = vmatpush1.msra.mxu0 0.0
  %2545 = vmatprep.subr.mxu0 0.0
  %2546 = vmatpush1.msra.mxu0 0.0
  %2547 = vmatprep.subr.mxu0 0.0
  %2548 = vmatpush1.msra.mxu0 0.0
  %2549 = vmatprep.subr.mxu0 0.0
  %2550 = vmatpush1.msra.mxu0 0.0
  %2551 = vmatprep.subr.mxu0 0.0
  %2552 = vmatpush1.msra.mxu0 0.0
  %2553 = vmatprep.subr.mxu0 0.0
  %2554 = vmatpush1.msra.mxu0 0.0
  %2555 = vmatprep.subr.mxu0 0.0
  %2556 = vmatpush1.msra.mxu0 0.0
  %2557 = vmatprep.subr.mxu0 0.0
  %2558 = vmatpush1.msra.mxu0 0.0
  %2559 = vmatprep.subr.mxu0 0.0
  %2560 = vmatpush1.msra.mxu0 0.0
  %2561 = vmatprep.subr.mxu0 %v2527
  %2562 = vmatpush1.msra.mxu0 %v2525
  %2563 = vmatprep.subr.mxu0 0.0
  %2564 = vmatpush2.msra.mxu0 0.0
  %2565 = vmatprep.subr.mxu0 0.0
  %2566 = vmatpush2.msra.mxu0 0.0
  %2567 = vmatprep.subr.mxu0 0.0
  %2568 = vmatpush2.msra.mxu0 0.0
  %2569 = vmatprep.subr.mxu0 0.0
  %2570 = vmatpush2.msra.mxu0 0.0
  %2571 = vmatprep.subr.mxu0 0.0
  %2572 = vmatpush2.msra.mxu0 0.0
  %2573 = vmatprep.subr.mxu0 0.0
  %2574 = vmatpush2.msra.mxu0 0.0
  %2575 = vmatprep.subr.mxu0 0.0
  %2576 = vmatpush2.msra.mxu0 0.0
  %2577 = vmatprep.subr.mxu0 0.0
  %2578 = vmatpush2.msra.mxu0 0.0
  %2579 = vmatprep.subr.mxu0 0.0
  %2580 = vmatpush2.msra.mxu0 0.0
  %2581 = vmatprep.subr.mxu0 0.0
  %2582 = vmatpush2.msra.mxu0 0.0
  %2583 = vmatprep.subr.mxu0 0.0
  %2584 = vmatpush2.msra.mxu0 0.0
  %2585 = vmatprep.subr.mxu0 0.0
  %2586 = vmatpush2.msra.mxu0 0.0
  %2587 = vmatprep.subr.mxu0 0.0
  %2588 = vmatpush2.msra.mxu0 0.0
  %2589 = vmatprep.subr.mxu0 0.0
  %2590 = vmatpush2.msra.mxu0 0.0
  %2591 = vmatprep.subr.mxu0 0.0
  %2592 = vmatpush2.msra.mxu0 0.0
  %2593 = vmatprep.subr.mxu0 0.0
  %2594 = vmatpush2.msra.mxu0 0.0
  %2595 = vmatprep.mubr.f32.mxu0 0.0
  %2596 = vmatmul.mubr.f32.gmra.mxu0 %v2523
  %v2597 = vpop.f32.mrf.mxu0
  %v2598 = vadd.f32 0.0, %v2597
  %v2599 = vpop.f32.mrf.mxu0
  %v2600 = vadd.f32 0.0, %v2599
  %2601 = vdwg.mxu0
  %2602 = vmatprep.subr.mxu0 0.0
  %2603 = vmatpush1.msra.mxu0 0.0
  %2604 = vmatprep.subr.mxu0 0.0
  %2605 = vmatpush1.msra.mxu0 0.0
  %2606 = vmatprep.subr.mxu0 0.0
  %2607 = vmatpush1.msra.mxu0 0.0
  %2608 = vmatprep.subr.mxu0 0.0
  %2609 = vmatpush1.msra.mxu0 0.0
  %2610 = vmatprep.subr.mxu0 0.0
  %2611 = vmatpush1.msra.mxu0 0.0
  %2612 = vmatprep.subr.mxu0 0.0
  %2613 = vmatpush1.msra.mxu0 0.0
  %2614 = vmatprep.subr.mxu0 0.0
  %2615 = vmatpush1.msra.mxu0 0.0
  %2616 = vmatprep.subr.mxu0 0.0
  %2617 = vmatpush1.msra.mxu0 0.0
  %2618 = vmatprep.subr.mxu0 0.0
  %2619 = vmatpush1.msra.mxu0 0.0
  %2620 = vmatprep.subr.mxu0 0.0
  %2621 = vmatpush1.msra.mxu0 0.0
  %2622 = vmatprep.subr.mxu0 0.0
  %2623 = vmatpush1.msra.mxu0 0.0
  %2624 = vmatprep.subr.mxu0 0.0
  %2625 = vmatpush1.msra.mxu0 0.0
  %2626 = vmatprep.subr.mxu0 0.0
  %2627 = vmatpush1.msra.mxu0 0.0
  %2628 = vmatprep.subr.mxu0 0.0
  %2629 = vmatpush1.msra.mxu0 0.0
  %2630 = vmatprep.subr.mxu0 0.0
  %2631 = vmatpush1.msra.mxu0 0.0
  %2632 = vmatprep.subr.mxu0 0.0
  %2633 = vmatpush1.msra.mxu0 %v2529
  %2634 = vmatprep.subr.mxu0 0.0
  %2635 = vmatpush2.msra.mxu0 0.0
  %2636 = vmatprep.subr.mxu0 0.0
  %2637 = vmatpush2.msra.mxu0 0.0
  %2638 = vmatprep.subr.mxu0 0.0
  %2639 = vmatpush2.msra.mxu0 0.0
  %2640 = vmatprep.subr.mxu0 0.0
  %2641 = vmatpush2.msra.mxu0 0.0
  %2642 = vmatprep.subr.mxu0 0.0
  %2643 = vmatpush2.msra.mxu0 0.0
  %2644 = vmatprep.subr.mxu0 0.0
  %2645 = vmatpush2.msra.mxu0 0.0
  %2646 = vmatprep.subr.mxu0 0.0
  %2647 = vmatpush2.msra.mxu0 0.0
  %2648 = vmatprep.subr.mxu0 0.0
  %2649 = vmatpush2.msra.mxu0 0.0
  %2650 = vmatprep.subr.mxu0 0.0
  %2651 = vmatpush2.msra.mxu0 0.0
  %2652 = vmatprep.subr.mxu0 0.0
  %2653 = vmatpush2.msra.mxu0 0.0
  %2654 = vmatprep.subr.mxu0 0.0
  %2655 = vmatpush2.msra.mxu0 0.0
  %2656 = vmatprep.subr.mxu0 0.0
  %2657 = vmatpush2.msra.mxu0 0.0
  %2658 = vmatprep.subr.mxu0 0.0
  %2659 = vmatpush2.msra.mxu0 0.0
  %2660 = vmatprep.subr.mxu0 0.0
  %2661 = vmatpush2.msra.mxu0 0.0
  %2662 = vmatprep.subr.mxu0 0.0
  %2663 = vmatpush2.msra.mxu0 0.0
  %2664 = vmatprep.subr.mxu0 0.0
  %2665 = vmatpush2.msra.mxu0 0.0
  %2666 = vmatprep.mubr.f32.mxu0 0.0
  %2667 = vmatmul.mubr.f32.gmra.mxu0 %v2523
  %v2668 = vpop.f32.mrf.mxu0
  %v2669 = vadd.f32 0.0, %v2668
  %v2670 = vpop.f32.mrf.mxu0
  %2671 = vdwg.mxu0
  %v2672 = vadd.f32 %v2507, %v2598
  %v2673 = vadd.f32 %v2508, %v2600
  %v2674 = vadd.f32 %v2509, %v2669
  %v2675 = vld [vmem:[%s1177] sm:$0xff]
  %2676 = vrot.lane.b32.xlu0 %v1531, 91
  %v2677 = vpop.permute.xlu0 %2676
  %2678 = vrot.lane.b32.xlu0 %v1537, 91
  %v2679 = vpop.permute.xlu0 %2678
  %2680 = vrot.lane.b32.xlu0 %v1532, 91
  %v2681 = vpop.permute.xlu0 %2680
  %2682 = vrot.lane.b32.xlu0 %v1538, 91
  %v2683 = vpop.permute.xlu0 %2682
  %v2684 = vsel %vm1187, %v2677, %v2679
  %v2685 = vsel %vm1187, %v2679, %v2681
  %v2686 = vsel %vm1187, %v2681, %v2683
  %v2688 = vsel %vm40, %v2675, 0
  %v2690 = vsel %vm44, %v2684, 0
  %v2692 = vsel %vm44, %v2685, 0
  %v2694 = vsel %vm44, %v2686, 0
  %2696 = vmatprep.subr.mxu0 0.0
  %2697 = vmatpush1.msra.mxu0 0.0
  %2698 = vmatprep.subr.mxu0 0.0
  %2699 = vmatpush1.msra.mxu0 0.0
  %2700 = vmatprep.subr.mxu0 0.0
  %2701 = vmatpush1.msra.mxu0 0.0
  %2702 = vmatprep.subr.mxu0 0.0
  %2703 = vmatpush1.msra.mxu0 0.0
  %2704 = vmatprep.subr.mxu0 0.0
  %2705 = vmatpush1.msra.mxu0 0.0
  %2706 = vmatprep.subr.mxu0 0.0
  %2707 = vmatpush1.msra.mxu0 0.0
  %2708 = vmatprep.subr.mxu0 0.0
  %2709 = vmatpush1.msra.mxu0 0.0
  %2710 = vmatprep.subr.mxu0 0.0
  %2711 = vmatpush1.msra.mxu0 0.0
  %2712 = vmatprep.subr.mxu0 0.0
  %2713 = vmatpush1.msra.mxu0 0.0
  %2714 = vmatprep.subr.mxu0 0.0
  %2715 = vmatpush1.msra.mxu0 0.0
  %2716 = vmatprep.subr.mxu0 0.0
  %2717 = vmatpush1.msra.mxu0 0.0
  %2718 = vmatprep.subr.mxu0 0.0
  %2719 = vmatpush1.msra.mxu0 0.0
  %2720 = vmatprep.subr.mxu0 0.0
  %2721 = vmatpush1.msra.mxu0 0.0
  %2722 = vmatprep.subr.mxu0 0.0
  %2723 = vmatpush1.msra.mxu0 0.0
  %2724 = vmatprep.subr.mxu0 0.0
  %2725 = vmatpush1.msra.mxu0 0.0
  %2726 = vmatprep.subr.mxu0 %v2692
  %2727 = vmatpush1.msra.mxu0 %v2690
  %2728 = vmatprep.subr.mxu0 0.0
  %2729 = vmatpush2.msra.mxu0 0.0
  %2730 = vmatprep.subr.mxu0 0.0
  %2731 = vmatpush2.msra.mxu0 0.0
  %2732 = vmatprep.subr.mxu0 0.0
  %2733 = vmatpush2.msra.mxu0 0.0
  %2734 = vmatprep.subr.mxu0 0.0
  %2735 = vmatpush2.msra.mxu0 0.0
  %2736 = vmatprep.subr.mxu0 0.0
  %2737 = vmatpush2.msra.mxu0 0.0
  %2738 = vmatprep.subr.mxu0 0.0
  %2739 = vmatpush2.msra.mxu0 0.0
  %2740 = vmatprep.subr.mxu0 0.0
  %2741 = vmatpush2.msra.mxu0 0.0
  %2742 = vmatprep.subr.mxu0 0.0
  %2743 = vmatpush2.msra.mxu0 0.0
  %2744 = vmatprep.subr.mxu0 0.0
  %2745 = vmatpush2.msra.mxu0 0.0
  %2746 = vmatprep.subr.mxu0 0.0
  %2747 = vmatpush2.msra.mxu0 0.0
  %2748 = vmatprep.subr.mxu0 0.0
  %2749 = vmatpush2.msra.mxu0 0.0
  %2750 = vmatprep.subr.mxu0 0.0
  %2751 = vmatpush2.msra.mxu0 0.0
  %2752 = vmatprep.subr.mxu0 0.0
  %2753 = vmatpush2.msra.mxu0 0.0
  %2754 = vmatprep.subr.mxu0 0.0
  %2755 = vmatpush2.msra.mxu0 0.0
  %2756 = vmatprep.subr.mxu0 0.0
  %2757 = vmatpush2.msra.mxu0 0.0
  %2758 = vmatprep.subr.mxu0 0.0
  %2759 = vmatpush2.msra.mxu0 0.0
  %2760 = vmatprep.mubr.f32.mxu0 0.0
  %2761 = vmatmul.mubr.f32.gmra.mxu0 %v2688
  %v2762 = vpop.f32.mrf.mxu0
  %v2763 = vadd.f32 0.0, %v2762
  %v2764 = vpop.f32.mrf.mxu0
  %v2765 = vadd.f32 0.0, %v2764
  %2766 = vdwg.mxu0
  %2767 = vmatprep.subr.mxu0 0.0
  %2768 = vmatpush1.msra.mxu0 0.0
  %2769 = vmatprep.subr.mxu0 0.0
  %2770 = vmatpush1.msra.mxu0 0.0
  %2771 = vmatprep.subr.mxu0 0.0
  %2772 = vmatpush1.msra.mxu0 0.0
  %2773 = vmatprep.subr.mxu0 0.0
  %2774 = vmatpush1.msra.mxu0 0.0
  %2775 = vmatprep.subr.mxu0 0.0
  %2776 = vmatpush1.msra.mxu0 0.0
  %2777 = vmatprep.subr.mxu0 0.0
  %2778 = vmatpush1.msra.mxu0 0.0
  %2779 = vmatprep.subr.mxu0 0.0
  %2780 = vmatpush1.msra.mxu0 0.0
  %2781 = vmatprep.subr.mxu0 0.0
  %2782 = vmatpush1.msra.mxu0 0.0
  %2783 = vmatprep.subr.mxu0 0.0
  %2784 = vmatpush1.msra.mxu0 0.0
  %2785 = vmatprep.subr.mxu0 0.0
  %2786 = vmatpush1.msra.mxu0 0.0
  %2787 = vmatprep.subr.mxu0 0.0
  %2788 = vmatpush1.msra.mxu0 0.0
  %2789 = vmatprep.subr.mxu0 0.0
  %2790 = vmatpush1.msra.mxu0 0.0
  %2791 = vmatprep.subr.mxu0 0.0
  %2792 = vmatpush1.msra.mxu0 0.0
  %2793 = vmatprep.subr.mxu0 0.0
  %2794 = vmatpush1.msra.mxu0 0.0
  %2795 = vmatprep.subr.mxu0 0.0
  %2796 = vmatpush1.msra.mxu0 0.0
  %2797 = vmatprep.subr.mxu0 0.0
  %2798 = vmatpush1.msra.mxu0 %v2694
  %2799 = vmatprep.subr.mxu0 0.0
  %2800 = vmatpush2.msra.mxu0 0.0
  %2801 = vmatprep.subr.mxu0 0.0
  %2802 = vmatpush2.msra.mxu0 0.0
  %2803 = vmatprep.subr.mxu0 0.0
  %2804 = vmatpush2.msra.mxu0 0.0
  %2805 = vmatprep.subr.mxu0 0.0
  %2806 = vmatpush2.msra.mxu0 0.0
  %2807 = vmatprep.subr.mxu0 0.0
  %2808 = vmatpush2.msra.mxu0 0.0
  %2809 = vmatprep.subr.mxu0 0.0
  %2810 = vmatpush2.msra.mxu0 0.0
  %2811 = vmatprep.subr.mxu0 0.0
  %2812 = vmatpush2.msra.mxu0 0.0
  %2813 = vmatprep.subr.mxu0 0.0
  %2814 = vmatpush2.msra.mxu0 0.0
  %2815 = vmatprep.subr.mxu0 0.0
  %2816 = vmatpush2.msra.mxu0 0.0
  %2817 = vmatprep.subr.mxu0 0.0
  %2818 = vmatpush2.msra.mxu0 0.0
  %2819 = vmatprep.subr.mxu0 0.0
  %2820 = vmatpush2.msra.mxu0 0.0
  %2821 = vmatprep.subr.mxu0 0.0
  %2822 = vmatpush2.msra.mxu0 0.0
  %2823 = vmatprep.subr.mxu0 0.0
  %2824 = vmatpush2.msra.mxu0 0.0
  %2825 = vmatprep.subr.mxu0 0.0
  %2826 = vmatpush2.msra.mxu0 0.0
  %2827 = vmatprep.subr.mxu0 0.0
  %2828 = vmatpush2.msra.mxu0 0.0
  %2829 = vmatprep.subr.mxu0 0.0
  %2830 = vmatpush2.msra.mxu0 0.0
  %2831 = vmatprep.mubr.f32.mxu0 0.0
  %2832 = vmatmul.mubr.f32.gmra.mxu0 %v2688
  %v2833 = vpop.f32.mrf.mxu0
  %v2834 = vadd.f32 0.0, %v2833
  %v2835 = vpop.f32.mrf.mxu0
  %2836 = vdwg.mxu0
  %v2837 = vadd.f32 %v2672, %v2763
  %v2838 = vadd.f32 %v2673, %v2765
  %v2839 = vadd.f32 %v2674, %v2834
  %v2840 = vld [vmem:[%s1344] sm:$0xff]
  %2841 = vrot.lane.b32.xlu0 %v1531, 90
  %v2842 = vpop.permute.xlu0 %2841
  %2843 = vrot.lane.b32.xlu0 %v1537, 90
  %v2844 = vpop.permute.xlu0 %2843
  %2845 = vrot.lane.b32.xlu0 %v1532, 90
  %v2846 = vpop.permute.xlu0 %2845
  %2847 = vrot.lane.b32.xlu0 %v1538, 90
  %v2848 = vpop.permute.xlu0 %2847
  %v2849 = vsel %vm1354, %v2842, %v2844
  %v2850 = vsel %vm1354, %v2844, %v2846
  %v2851 = vsel %vm1354, %v2846, %v2848
  %v2853 = vsel %vm40, %v2840, 0
  %v2855 = vsel %vm44, %v2849, 0
  %v2857 = vsel %vm44, %v2850, 0
  %v2859 = vsel %vm44, %v2851, 0
  %2861 = vmatprep.subr.mxu0 0.0
  %2862 = vmatpush1.msra.mxu0 0.0
  %2863 = vmatprep.subr.mxu0 0.0
  %2864 = vmatpush1.msra.mxu0 0.0
  %2865 = vmatprep.subr.mxu0 0.0
  %2866 = vmatpush1.msra.mxu0 0.0
  %2867 = vmatprep.subr.mxu0 0.0
  %2868 = vmatpush1.msra.mxu0 0.0
  %2869 = vmatprep.subr.mxu0 0.0
  %2870 = vmatpush1.msra.mxu0 0.0
  %2871 = vmatprep.subr.mxu0 0.0
  %2872 = vmatpush1.msra.mxu0 0.0
  %2873 = vmatprep.subr.mxu0 0.0
  %2874 = vmatpush1.msra.mxu0 0.0
  %2875 = vmatprep.subr.mxu0 0.0
  %2876 = vmatpush1.msra.mxu0 0.0
  %2877 = vmatprep.subr.mxu0 0.0
  %2878 = vmatpush1.msra.mxu0 0.0
  %2879 = vmatprep.subr.mxu0 0.0
  %2880 = vmatpush1.msra.mxu0 0.0
  %2881 = vmatprep.subr.mxu0 0.0
  %2882 = vmatpush1.msra.mxu0 0.0
  %2883 = vmatprep.subr.mxu0 0.0
  %2884 = vmatpush1.msra.mxu0 0.0
  %2885 = vmatprep.subr.mxu0 0.0
  %2886 = vmatpush1.msra.mxu0 0.0
  %2887 = vmatprep.subr.mxu0 0.0
  %2888 = vmatpush1.msra.mxu0 0.0
  %2889 = vmatprep.subr.mxu0 0.0
  %2890 = vmatpush1.msra.mxu0 0.0
  %2891 = vmatprep.subr.mxu0 %v2857
  %2892 = vmatpush1.msra.mxu0 %v2855
  %2893 = vmatprep.subr.mxu0 0.0
  %2894 = vmatpush2.msra.mxu0 0.0
  %2895 = vmatprep.subr.mxu0 0.0
  %2896 = vmatpush2.msra.mxu0 0.0
  %2897 = vmatprep.subr.mxu0 0.0
  %2898 = vmatpush2.msra.mxu0 0.0
  %2899 = vmatprep.subr.mxu0 0.0
  %2900 = vmatpush2.msra.mxu0 0.0
  %2901 = vmatprep.subr.mxu0 0.0
  %2902 = vmatpush2.msra.mxu0 0.0
  %2903 = vmatprep.subr.mxu0 0.0
  %2904 = vmatpush2.msra.mxu0 0.0
  %2905 = vmatprep.subr.mxu0 0.0
  %2906 = vmatpush2.msra.mxu0 0.0
  %2907 = vmatprep.subr.mxu0 0.0
  %2908 = vmatpush2.msra.mxu0 0.0
  %2909 = vmatprep.subr.mxu0 0.0
  %2910 = vmatpush2.msra.mxu0 0.0
  %2911 = vmatprep.subr.mxu0 0.0
  %2912 = vmatpush2.msra.mxu0 0.0
  %2913 = vmatprep.subr.mxu0 0.0
  %2914 = vmatpush2.msra.mxu0 0.0
  %2915 = vmatprep.subr.mxu0 0.0
  %2916 = vmatpush2.msra.mxu0 0.0
  %2917 = vmatprep.subr.mxu0 0.0
  %2918 = vmatpush2.msra.mxu0 0.0
  %2919 = vmatprep.subr.mxu0 0.0
  %2920 = vmatpush2.msra.mxu0 0.0
  %2921 = vmatprep.subr.mxu0 0.0
  %2922 = vmatpush2.msra.mxu0 0.0
  %2923 = vmatprep.subr.mxu0 0.0
  %2924 = vmatpush2.msra.mxu0 0.0
  %2925 = vmatprep.mubr.f32.mxu0 0.0
  %2926 = vmatmul.mubr.f32.gmra.mxu0 %v2853
  %v2927 = vpop.f32.mrf.mxu0
  %v2928 = vadd.f32 0.0, %v2927
  %v2929 = vpop.f32.mrf.mxu0
  %v2930 = vadd.f32 0.0, %v2929
  %2931 = vdwg.mxu0
  %2932 = vmatprep.subr.mxu0 0.0
  %2933 = vmatpush1.msra.mxu0 0.0
  %2934 = vmatprep.subr.mxu0 0.0
  %2935 = vmatpush1.msra.mxu0 0.0
  %2936 = vmatprep.subr.mxu0 0.0
  %2937 = vmatpush1.msra.mxu0 0.0
  %2938 = vmatprep.subr.mxu0 0.0
  %2939 = vmatpush1.msra.mxu0 0.0
  %2940 = vmatprep.subr.mxu0 0.0
  %2941 = vmatpush1.msra.mxu0 0.0
  %2942 = vmatprep.subr.mxu0 0.0
  %2943 = vmatpush1.msra.mxu0 0.0
  %2944 = vmatprep.subr.mxu0 0.0
  %2945 = vmatpush1.msra.mxu0 0.0
  %2946 = vmatprep.subr.mxu0 0.0
  %2947 = vmatpush1.msra.mxu0 0.0
  %2948 = vmatprep.subr.mxu0 0.0
  %2949 = vmatpush1.msra.mxu0 0.0
  %2950 = vmatprep.subr.mxu0 0.0
  %2951 = vmatpush1.msra.mxu0 0.0
  %2952 = vmatprep.subr.mxu0 0.0
  %2953 = vmatpush1.msra.mxu0 0.0
  %2954 = vmatprep.subr.mxu0 0.0
  %2955 = vmatpush1.msra.mxu0 0.0
  %2956 = vmatprep.subr.mxu0 0.0
  %2957 = vmatpush1.msra.mxu0 0.0
  %2958 = vmatprep.subr.mxu0 0.0
  %2959 = vmatpush1.msra.mxu0 0.0
  %2960 = vmatprep.subr.mxu0 0.0
  %2961 = vmatpush1.msra.mxu0 0.0
  %2962 = vmatprep.subr.mxu0 0.0
  %2963 = vmatpush1.msra.mxu0 %v2859
  %2964 = vmatprep.subr.mxu0 0.0
  %2965 = vmatpush2.msra.mxu0 0.0
  %2966 = vmatprep.subr.mxu0 0.0
  %2967 = vmatpush2.msra.mxu0 0.0
  %2968 = vmatprep.subr.mxu0 0.0
  %2969 = vmatpush2.msra.mxu0 0.0
  %2970 = vmatprep.subr.mxu0 0.0
  %2971 = vmatpush2.msra.mxu0 0.0
  %2972 = vmatprep.subr.mxu0 0.0
  %2973 = vmatpush2.msra.mxu0 0.0
  %2974 = vmatprep.subr.mxu0 0.0
  %2975 = vmatpush2.msra.mxu0 0.0
  %2976 = vmatprep.subr.mxu0 0.0
  %2977 = vmatpush2.msra.mxu0 0.0
  %2978 = vmatprep.subr.mxu0 0.0
  %2979 = vmatpush2.msra.mxu0 0.0
  %2980 = vmatprep.subr.mxu0 0.0
  %2981 = vmatpush2.msra.mxu0 0.0
  %2982 = vmatprep.subr.mxu0 0.0
  %2983 = vmatpush2.msra.mxu0 0.0
  %2984 = vmatprep.subr.mxu0 0.0
  %2985 = vmatpush2.msra.mxu0 0.0
  %2986 = vmatprep.subr.mxu0 0.0
  %2987 = vmatpush2.msra.mxu0 0.0
  %2988 = vmatprep.subr.mxu0 0.0
  %2989 = vmatpush2.msra.mxu0 0.0
  %2990 = vmatprep.subr.mxu0 0.0
  %2991 = vmatpush2.msra.mxu0 0.0
  %2992 = vmatprep.subr.mxu0 0.0
  %2993 = vmatpush2.msra.mxu0 0.0
  %2994 = vmatprep.subr.mxu0 0.0
  %2995 = vmatpush2.msra.mxu0 0.0
  %2996 = vmatprep.mubr.f32.mxu0 0.0
  %2997 = vmatmul.mubr.f32.gmra.mxu0 %v2853
  %v2998 = vpop.f32.mrf.mxu0
  %v2999 = vadd.f32 0.0, %v2998
  %v3000 = vpop.f32.mrf.mxu0
  %3001 = vdwg.mxu0
  %v3002 = vadd.f32 %v2837, %v2928
  %v3003 = vadd.f32 %v2838, %v2930
  %v3004 = vadd.f32 %v2839, %v2999
  %v3005 = vmul.f32 %v3002, %v1514
  %v3006 = vmul.f32 %v3003, %v1514
  %v3007 = vmul.f32 %v3004, %v1514
  %v3008 = vadd.f32 %v3005, %v1522
  %v3009 = vadd.f32 %v3006, %v1522
  %v3010 = vadd.f32 %v3007, %v1522
  %s3011 = scalar_lea.vmem %s4, 24
  %3012 = vst [vmem:[%s3011] sm:$0xff] %v3008
  %3013 = vst [vmem:[%s3011 + $0x8] sm:$0xff] %v3009
  %3014 = vst [vmem:[%s3011 + $0x10] sm:$0xff] %v3010
  // Predicated region
  $region18: #{conv_bn_forward.1} parent=0 // pred_check
    _
  $region19: #{conv_bn_forward.1} parent=0 // pred_check_branch
    %3016 = sbr.rel (0) target = $region21
  $region20: #{conv_bn_forward.1} parent=0 // pred_region
    _
  $region21: #{conv_bn_forward.1} parent=0 // pred_fallthru
    _
  // Predicated region
  $region22: #{conv_bn_forward.1} parent=0 // pred_check
    _
  $region23: #{conv_bn_forward.1} parent=0 // pred_check_branch
    %3018 = sbr.rel (0) target = $region25
  $region24: #{conv_bn_forward.1} parent=0 // pred_region
    _
  $region25: #{conv_bn_forward.1} parent=0 // pred_fallthru
    _

</llo_original>
